<compile_context>
chip_gen: v6e
topology: v6e:2x2x1
jax: 0.10.0
libtpu: 0.0.40
codegen_flags: <defaults>
</compile_context>

<pallas_src>
import jax
import jax.numpy as jnp
from jax.experimental import pallas as pl
from jax.experimental.pallas import tpu as pltpu

IN_FEATS = 16
HIDDEN = 64
NUM_LAYERS = 4
CONTRASTIVE_DIM = 8
OUT_PAD = 128          # lane-dense padded output width (sliced back to 8 in the wrapper)
BN_EPS = 1e-5
EDGE_TILE = 512        # requested edges per grid step (clamped per-generation / per-graph)


def _dot_f32(a, b):
    return jnp.dot(a, b, preferred_element_type=jnp.float32)


def _dot_bf16(a, b):
    return jnp.dot(a.astype(jnp.bfloat16), b.astype(jnp.bfloat16),
                   preferred_element_type=jnp.float32)


def _round_up(v, m):
    return -(-v // m) * m


def net_kernel(x_ref, ST_ref, STt_ref, invc_ref,
               w1_ref, b1_ref, w2_ref, b2_ref,
               wA_ref, wB_ref, bc_ref, bns_ref, bnb_ref,
               wo1_ref, bo1_ref, wo2_ref, bo2_ref, wo3_ref, bo3_ref,
               out_ref,
               h_sc, hAB_sc, agg_sc):
    l = pl.program_id(0)            # layer index      (sequential)
    t = pl.program_id(1)            # edge-tile index  (reduction axis, innermost)
    n_layers = pl.num_programs(0)
    n_tiles = pl.num_programs(1)
    n_pad = h_sc.shape[0]

    # ---- lc_encode: runs once at the very first grid step ----
    @pl.when(jnp.logical_and(l == 0, t == 0))
    def _():
        h = jnp.maximum(_dot_f32(x_ref[...], w1_ref[...]) + b1_ref[...], 0.0)
        h = jnp.maximum(_dot_f32(h, w2_ref[...]) + b2_ref[...], 0.0)
        h_sc[...] = h

    # ---- per-layer node-level matmuls + accumulator init (start of each layer) ----
    # Reassociated edge linear: [xc, xn - xc] @ Wc == xc @ (Wa - Wb) + xn @ Wb.
    # hAB is the stacked [h@(Wa-Wb); h@Wb] operand for the fused gather matmul.
    @pl.when(t == 0)
    def _():
        h = h_sc[...]
        hAB_sc[pl.ds(0, n_pad), :] = _dot_f32(h, wA_ref[l]).astype(jnp.bfloat16)
        hAB_sc[pl.ds(n_pad, n_pad), :] = _dot_f32(h, wB_ref[l]).astype(jnp.bfloat16)
        agg_sc[...] = jnp.zeros_like(agg_sc)

    # ---- edge tile: fused one-hot gather (bf16 MXU), ReLU + folded BN, scatter-add ----
    e = _dot_bf16(ST_ref[...], hAB_sc[...]) + bc_ref[l]        # (TE, H) f32
    e = jnp.maximum(e, 0.0)                                    # ReLU
    e = e * bns_ref[l] + bnb_ref[l]                            # eval BN affine; Dropout = id
    # scatter-add (segment-sum over rows) with pre-transposed operand: agg += S^T @ e
    agg_sc[...] += _dot_bf16(STt_ref[...], e)

    # ---- finalize layer: scatter-mean + residual (after the last edge tile) ----
    @pl.when(t == n_tiles - 1)
    def _():
        h_sc[...] = agg_sc[...] * invc_ref[...] + h_sc[...]

    # ---- output MLP: runs once at the very last grid step (lane-dense 128-wide store) ----
    @pl.when(jnp.logical_and(l == n_layers - 1, t == n_tiles - 1))
    def _():
        o = jnp.maximum(_dot_f32(h_sc[...], wo1_ref[...]) + bo1_ref[...], 0.0)
        o = jnp.maximum(_dot_f32(o, wo2_ref[...]) + bo2_ref[...], 0.0)
        out_ref[...] = _dot_f32(o, wo3_ref[...]) + bo3_ref[...]


def net_forward(x, edge_index, batch, params, *, edge_tile=EDGE_TILE):
    N = x.shape[0]
    H = HIDDEN
    L = NUM_LAYERS
    row, col = edge_index[0], edge_index[1]
    E = row.shape[0]

    # ---- pad node count to a multiple of 128 (lane/MXU-aligned operands) ----
    N_pad = _round_up(N, 128)
    x_p = x if N_pad == N else jnp.zeros((N_pad, x.shape[1]), x.dtype).at[:N].set(x)

    # ---- generation-aware VMEM budget (64 MiB v7x, 128 MiB v5e/v6e) ----
    try:
        info = pltpu.get_tpu_info()
        phys_vmem = int(getattr(info, "vmem_capacity_bytes", 128 << 20))
    except Exception:
        phys_vmem = 128 << 20
    vmem_budget = int(phys_vmem * 0.80)          # headroom for Mosaic internal scratch

    # ---- choose edge tile: requested, clamped by VMEM budget and by the graph size ----
    scratch_bytes = N_pad * H * (4 + 4) + 2 * N_pad * H * 2          # h + agg + hAB
    per_edge_stream = 2 * (2 * N_pad + N_pad) * 2                    # ST row + STt col, x2 buffers
    stream_budget = max(vmem_budget - scratch_bytes - (8 << 20), 1 << 20)
    max_tile = max(128, (stream_budget // per_edge_stream) // 128 * 128)
    edge_tile = int(min(edge_tile, max_tile, _round_up(E, 128)))
    edge_tile = max(128, (edge_tile // 128) * 128)

    n_tiles = -(-E // edge_tile)
    E_pad = n_tiles * edge_tile
    pad = E_pad - E
    if pad:
        row_p = jnp.concatenate([row, jnp.full((pad,), -1, row.dtype)])
        col_p = jnp.concatenate([col, jnp.full((pad,), -1, col.dtype)])
    else:
        row_p, col_p = row, col

    # One-hot gather/scatter operands (exact in bf16). Pad (-1) edges -> all-zero rows,
    # so they contribute nothing to the scatter and are excluded from counts.
    S = jax.nn.one_hot(row_p, N_pad, dtype=jnp.bfloat16)             # (E_pad, N_pad)
    T = jax.nn.one_hot(col_p, N_pad, dtype=jnp.bfloat16)             # (E_pad, N_pad)
    ST = jnp.concatenate([S, T], axis=1)                             # (E_pad, 2*N_pad) fused gather
    STt = S.T                                                        # (N_pad, E_pad) pre-transposed scatter
    counts = jnp.zeros((N_pad,), jnp.float32).at[row].add(1.0)       # bincount(row)
    invc = (1.0 / jnp.maximum(counts, 1.0))[:, None]                 # (N_pad, 1) f32

    # Reassociate the edge linear: [xc, xn-xc] @ wc == xc @ (Wa - Wb) + xn @ Wb
    wc = params["wc"]                                                # (L, 2H, H)
    wA = wc[:, :H, :] - wc[:, H:, :]                                 # (L, H, H)
    wB = wc[:, H:, :]                                                # (L, H, H)
    bc = params["bc"].reshape(L, 1, H)
    bns = params["bns"].reshape(L, 1, H)
    bnb = params["bnb"].reshape(L, 1, H)

    # Lane-dense padded output head (extra 120 columns are exactly zero).
    wo3 = jnp.zeros((32, OUT_PAD), jnp.float32).at[:, :CONTRASTIVE_DIM].set(params["wo3"])
    bo3 = jnp.zeros((1, OUT_PAD), jnp.float32).at[:, :CONTRASTIVE_DIM].set(params["bo3"])

    inputs = (x_p, ST, STt, invc,
              params["w1"], params["b1"], params["w2"], params["b2"],
              wA, wB, bc, bns, bnb,
              params["wo1"], params["bo1"], params["wo2"], params["bo2"],
              wo3, bo3)

    def full(a):                      # whole-array block, DMA'd once (constant index map)
        return pl.BlockSpec(a.shape, lambda l, t, _nd=a.ndim: (0,) * _nd)

    in_specs = [
        full(x_p),
        pl.BlockSpec((edge_tile, 2 * N_pad), lambda l, t: (t, 0)),   # ST tile
        pl.BlockSpec((N_pad, edge_tile), lambda l, t: (0, t)),       # STt tile
        full(invc),
        full(params["w1"]), full(params["b1"]),
        full(params["w2"]), full(params["b2"]),
        full(wA), full(wB), full(bc), full(bns), full(bnb),          # fully resident per-layer params
        full(params["wo1"]), full(params["bo1"]),
        full(params["wo2"]), full(params["bo2"]),
        full(wo3), full(bo3),
    ]
    out_spec = pl.BlockSpec((N_pad, OUT_PAD), lambda l, t: (0, 0))

    scratch = [
        pltpu.VMEM((N_pad, H), jnp.float32),        # h   (residual stream, persists across grid)
        pltpu.VMEM((2 * N_pad, H), jnp.bfloat16),   # hAB = [h @ (Wa - Wb); h @ Wb]
        pltpu.VMEM((N_pad, H), jnp.float32),        # scatter accumulator
    ]

    # ---- cost estimate & VMEM limit hints ----
    flops = 2 * (N_pad * IN_FEATS * H + N_pad * H * H
                 + L * (2 * N_pad * H * H + E_pad * 2 * N_pad * H + E_pad * N_pad * H)
                 + N_pad * H * 64 + N_pad * 64 * 32 + N_pad * 32 * OUT_PAD)
    input_bytes = sum(int(a.size) * a.dtype.itemsize for a in inputs)
    refetch = (L - 1) * (int(ST.size) + int(STt.size)) * 2 if n_tiles > 1 else 0
    bytes_accessed = int(input_bytes + refetch + N_pad * OUT_PAD * 4)

    stream_bytes = 2 * (edge_tile * 2 * N_pad * 2 + N_pad * edge_tile * 2)   # double-buffered tiles
    resident_bytes = (input_bytes - (int(ST.size) + int(STt.size)) * 2
                      + N_pad * OUT_PAD * 4)
    vmem_need = int(stream_bytes + 2 * resident_bytes + scratch_bytes + (2 << 20))
    vmem_limit = int(max(4 << 20, min(vmem_need, vmem_budget)))

    out = pl.pallas_call(
        net_kernel,
        out_shape=jax.ShapeDtypeStruct((N_pad, OUT_PAD), jnp.float32),
        grid_spec=pltpu.PrefetchScalarGridSpec(
            num_scalar_prefetch=0,
            grid=(L, n_tiles),
            in_specs=in_specs,
            out_specs=out_spec,
            scratch_shapes=scratch),
        compiler_params=pltpu.CompilerParams(
            dimension_semantics=("arbitrary", "arbitrary"),
            vmem_limit_bytes=vmem_limit),
        cost_estimate=pl.CostEstimate(flops=int(flops), transcendentals=0,
                                      bytes_accessed=bytes_accessed),
    )(*inputs)
    return out[:N, :CONTRASTIVE_DIM], batch


def init_params(key):
    """Deterministic PyTorch-default-style init (uniform(-1/sqrt(fan_in), ...))."""
    def linear(k, fan_in, fan_out):
        k1, k2 = jax.random.split(k)
        bound = 1.0 / (fan_in ** 0.5)
        w = jax.random.uniform(k1, (fan_in, fan_out), jnp.float32, -bound, bound)
        b = jax.random.uniform(k2, (1, fan_out), jnp.float32, -bound, bound)
        return w, b

    keys = jax.random.split(key, 5 + NUM_LAYERS)
    p = {}
    p["w1"], p["b1"] = linear(keys[0], IN_FEATS, HIDDEN)
    p["w2"], p["b2"] = linear(keys[1], HIDDEN, HIDDEN)

    wc, bc = [], []
    for l in range(NUM_LAYERS):
        w, b = linear(keys[2 + l], 2 * HIDDEN, HIDDEN)
        wc.append(w)
        bc.append(b[0])
    p["wc"] = jnp.stack(wc)                                # (L, 2H, H)
    p["bc"] = jnp.stack(bc)                                # (L, H)

    # BatchNorm1d (eval): gamma=1, beta=0, running_mean=0, running_var=1
    gamma = jnp.ones((NUM_LAYERS, HIDDEN), jnp.float32)
    beta = jnp.zeros((NUM_LAYERS, HIDDEN), jnp.float32)
    rmean = jnp.zeros((NUM_LAYERS, HIDDEN), jnp.float32)
    rvar = jnp.ones((NUM_LAYERS, HIDDEN), jnp.float32)
    p["bns"] = gamma / jnp.sqrt(rvar + BN_EPS)             # (L, H)
    p["bnb"] = beta - rmean * p["bns"]                     # (L, H)

    p["wo1"], p["bo1"] = linear(keys[2 + NUM_LAYERS], HIDDEN, 64)
    p["wo2"], p["bo2"] = linear(keys[3 + NUM_LAYERS], 64, 32)
    p["wo3"], p["bo3"] = linear(keys[4 + NUM_LAYERS], 32, CONTRASTIVE_DIM)
    return p


def reference_forward(x, edge_index, batch, params):
    """Pure-JAX f32 reference with explicit gather / index_add semantics."""
    relu = jax.nn.relu
    h = relu(x @ params["w1"] + params["b1"])
    h = relu(h @ params["w2"] + params["b2"])
    row, col = edge_index[0], edge_index[1]
    N = x.shape[0]
    for l in range(NUM_LAYERS):
        xc = h[row]
        xn = h[col]
        ef = jnp.concatenate([xc, xn - xc], axis=-1)
        e = relu(ef @ params["wc"][l] + params["bc"][l])
        e = e * params["bns"][l] + params["bnb"][l]
        agg = jax.ops.segment_sum(e, row, num_segments=N)
        counts = jnp.maximum(
            jax.ops.segment_sum(jnp.ones_like(row, jnp.float32), row, num_segments=N), 1.0)
        h = agg / counts[:, None] + h
    o = relu(h @ params["wo1"] + params["bo1"])
    o = relu(o @ params["wo2"] + params["bo2"])
    return o @ params["wo3"] + params["bo3"], batch


if __name__ == "__main__":
    key = jax.random.PRNGKey(0)
    kx, ke, kp = jax.random.split(key, 3)

    N, E = 64, 256
    x = jax.random.normal(kx, (N, IN_FEATS), jnp.float32)
    edge_index = jax.random.randint(ke, (2, E), 0, N, dtype=jnp.int32)
    batch = jnp.zeros((N,), jnp.int32)

    params = init_params(kp)

    out, batch_out = net_forward(x, edge_index, batch, params)
    out = jax.block_until_ready(out)

    ref, _ = reference_forward(x, edge_index, batch, params)
    assert out.shape == (N, CONTRASTIVE_DIM)
    assert batch_out.shape == batch.shape
    # bf16 gather/scatter path vs f32 reference: allow ~2% deviation.
    assert jnp.allclose(out, ref, atol=2e-2, rtol=2e-2), \
        f"max abs err {jnp.max(jnp.abs(out - ref))}"

    print("KERNEL_OK")
</pallas_src>

<mosaic_0001>
module attributes {stable_mosaic.version = 11 : i64} {
  func.func @net_kernel(%arg0: i32, %arg1: i32, %arg2: memref<128x16xf32, #tpu.memory_space<vmem>>, %arg3: memref<256x256xbf16, #tpu.memory_space<vmem>>, %arg4: memref<128x256xbf16, #tpu.memory_space<vmem>>, %arg5: memref<128x1xf32, #tpu.memory_space<vmem>>, %arg6: memref<16x64xf32, #tpu.memory_space<vmem>>, %arg7: memref<1x64xf32, #tpu.memory_space<vmem>>, %arg8: memref<64x64xf32, #tpu.memory_space<vmem>>, %arg9: memref<1x64xf32, #tpu.memory_space<vmem>>, %arg10: memref<4x64x64xf32, #tpu.memory_space<vmem>>, %arg11: memref<4x64x64xf32, #tpu.memory_space<vmem>>, %arg12: memref<4x1x64xf32, #tpu.memory_space<vmem>>, %arg13: memref<4x1x64xf32, #tpu.memory_space<vmem>>, %arg14: memref<4x1x64xf32, #tpu.memory_space<vmem>>, %arg15: memref<64x64xf32, #tpu.memory_space<vmem>>, %arg16: memref<1x64xf32, #tpu.memory_space<vmem>>, %arg17: memref<64x32xf32, #tpu.memory_space<vmem>>, %arg18: memref<1x32xf32, #tpu.memory_space<vmem>>, %arg19: memref<32x128xf32, #tpu.memory_space<vmem>>, %arg20: memref<1x128xf32, #tpu.memory_space<vmem>>, %arg21: memref<128x128xf32, #tpu.memory_space<vmem>>, %arg22: memref<128x64xf32, #tpu.memory_space<vmem>>, %arg23: memref<256x64xbf16, #tpu.memory_space<vmem>>, %arg24: memref<128x64xf32, #tpu.memory_space<vmem>>) attributes {dimension_semantics = [#tpu.dimension_semantics<arbitrary>, #tpu.dimension_semantics<arbitrary>], iteration_bounds = array<i64: 4, 1>, scalar_prefetch = 0 : i64, scratch_operands = 3 : i64, tpu.core_type = #tpu.core_type<tc>, window_params = [{pipeline_mode = #tpu.pipeline_mode<synchronous>, transform_indices = @transform_0, window_bounds = array<i64: 128, 16>}, {transform_indices = @transform_1, window_bounds = array<i64: 256, 256>}, {transform_indices = @transform_2, window_bounds = array<i64: 128, 256>}, {pipeline_mode = #tpu.pipeline_mode<synchronous>, transform_indices = @transform_3, window_bounds = array<i64: 128, 1>}, {pipeline_mode = #tpu.pipeline_mode<synchronous>, transform_indices = @transform_4, window_bounds = array<i64: 16, 64>}, {pipeline_mode = #tpu.pipeline_mode<synchronous>, transform_indices = @transform_5, window_bounds = array<i64: 1, 64>}, {pipeline_mode = #tpu.pipeline_mode<synchronous>, transform_indices = @transform_6, window_bounds = array<i64: 64, 64>}, {pipeline_mode = #tpu.pipeline_mode<synchronous>, transform_indices = @transform_7, window_bounds = array<i64: 1, 64>}, {pipeline_mode = #tpu.pipeline_mode<synchronous>, transform_indices = @transform_8, window_bounds = array<i64: 4, 64, 64>}, {pipeline_mode = #tpu.pipeline_mode<synchronous>, transform_indices = @transform_9, window_bounds = array<i64: 4, 64, 64>}, {pipeline_mode = #tpu.pipeline_mode<synchronous>, transform_indices = @transform_10, window_bounds = array<i64: 4, 1, 64>}, {pipeline_mode = #tpu.pipeline_mode<synchronous>, transform_indices = @transform_11, window_bounds = array<i64: 4, 1, 64>}, {pipeline_mode = #tpu.pipeline_mode<synchronous>, transform_indices = @transform_12, window_bounds = array<i64: 4, 1, 64>}, {pipeline_mode = #tpu.pipeline_mode<synchronous>, transform_indices = @transform_13, window_bounds = array<i64: 64, 64>}, {pipeline_mode = #tpu.pipeline_mode<synchronous>, transform_indices = @transform_14, window_bounds = array<i64: 1, 64>}, {pipeline_mode = #tpu.pipeline_mode<synchronous>, transform_indices = @transform_15, window_bounds = array<i64: 64, 32>}, {pipeline_mode = #tpu.pipeline_mode<synchronous>, transform_indices = @transform_16, window_bounds = array<i64: 1, 32>}, {pipeline_mode = #tpu.pipeline_mode<synchronous>, transform_indices = @transform_17, window_bounds = array<i64: 32, 128>}, {pipeline_mode = #tpu.pipeline_mode<synchronous>, transform_indices = @transform_18, window_bounds = array<i64: 1, 128>}, {pipeline_mode = #tpu.pipeline_mode<synchronous>, transform_indices = @transform_19, window_bounds = array<i64: 128, 128>}]} {
    %c0_i32 = arith.constant 0 : i32
    %0 = arith.cmpi eq, %arg0, %c0_i32 : i32
    %c0_i32_0 = arith.constant 0 : i32
    %1 = arith.cmpi eq, %arg1, %c0_i32_0 : i32
    %2 = arith.andi %0, %1 : i1
    %3 = arith.extui %2 : i1 to i32
    %c0_i32_1 = arith.constant 0 : i32
    %4 = arith.cmpi ne, %3, %c0_i32_1 : i32
    scf.if %4 {
      %c0_25 = arith.constant 0 : index
      %c0_26 = arith.constant 0 : index
      %42 = vector.load %arg2[%c0_25, %c0_26] : memref<128x16xf32, #tpu.memory_space<vmem>>, vector<128x16xf32>
      %c0_27 = arith.constant 0 : index
      %c0_28 = arith.constant 0 : index
      %43 = vector.load %arg6[%c0_27, %c0_28] : memref<16x64xf32, #tpu.memory_space<vmem>>, vector<16x64xf32>
      %cst_29 = arith.constant dense<0.000000e+00> : vector<128x64xf32>
      %44 = tpu.matmul %42, %43, %cst_29 {dimension_numbers = #tpu.dot_dimension_numbers<[1], [0], [0], [1], [0, 0, 1, 1], [], []>} : vector<128x16xf32>, vector<16x64xf32>, vector<128x64xf32> -> vector<128x64xf32>
      %c0_30 = arith.constant 0 : index
      %c0_31 = arith.constant 0 : index
      %45 = vector.load %arg7[%c0_30, %c0_31] : memref<1x64xf32, #tpu.memory_space<vmem>>, vector<1x64xf32>
      %46 = vector.broadcast %45 : vector<1x64xf32> to vector<128x64xf32>
      %47 = arith.addf %44, %46 : vector<128x64xf32>
      %cst_32 = arith.constant 0.000000e+00 : f32
      %48 = vector.broadcast %cst_32 : f32 to vector<128x64xf32>
      %49 = arith.maximumf %47, %48 : vector<128x64xf32>
      %c0_33 = arith.constant 0 : index
      %c0_34 = arith.constant 0 : index
      %50 = vector.load %arg8[%c0_33, %c0_34] : memref<64x64xf32, #tpu.memory_space<vmem>>, vector<64x64xf32>
      %cst_35 = arith.constant dense<0.000000e+00> : vector<128x64xf32>
      %51 = tpu.matmul %49, %50, %cst_35 {dimension_numbers = #tpu.dot_dimension_numbers<[1], [0], [0], [1], [0, 0, 1, 1], [], []>} : vector<128x64xf32>, vector<64x64xf32>, vector<128x64xf32> -> vector<128x64xf32>
      %c0_36 = arith.constant 0 : index
      %c0_37 = arith.constant 0 : index
      %52 = vector.load %arg9[%c0_36, %c0_37] : memref<1x64xf32, #tpu.memory_space<vmem>>, vector<1x64xf32>
      %53 = vector.broadcast %52 : vector<1x64xf32> to vector<128x64xf32>
      %54 = arith.addf %51, %53 : vector<128x64xf32>
      %cst_38 = arith.constant 0.000000e+00 : f32
      %55 = vector.broadcast %cst_38 : f32 to vector<128x64xf32>
      %56 = arith.maximumf %54, %55 : vector<128x64xf32>
      %c0_39 = arith.constant 0 : index
      %c0_40 = arith.constant 0 : index
      %57 = vector.load %arg22[%c0_39, %c0_40] : memref<128x64xf32, #tpu.memory_space<vmem>>, vector<128x64xf32>
      tpu.vector_store %arg22[%c0_39, %c0_40], %56 {strides = array<i32>} : memref<128x64xf32, #tpu.memory_space<vmem>>, vector<128x64xf32>,
    } else {
    }
    %c0_i32_2 = arith.constant 0 : i32
    %5 = arith.cmpi eq, %arg1, %c0_i32_2 : i32
    %6 = arith.extui %5 : i1 to i32
    %c0_i32_3 = arith.constant 0 : i32
    %7 = arith.cmpi ne, %6, %c0_i32_3 : i32
    scf.if %7 {
      %c0_25 = arith.constant 0 : index
      %c0_26 = arith.constant 0 : index
      %42 = vector.load %arg22[%c0_25, %c0_26] : memref<128x64xf32, #tpu.memory_space<vmem>>, vector<128x64xf32>
      %43 = arith.index_cast %arg0 : i32 to index
      %c0_27 = arith.constant 0 : index
      %c0_28 = arith.constant 0 : index
      %44 = vector.load %arg10[%43, %c0_27, %c0_28] : memref<4x64x64xf32, #tpu.memory_space<vmem>>, vector<1x64x64xf32>
      %45 = vector.shape_cast %44 : vector<1x64x64xf32> to vector<64x64xf32>
      %cst_29 = arith.constant dense<0.000000e+00> : vector<128x64xf32>
      %46 = tpu.matmul %42, %45, %cst_29 {dimension_numbers = #tpu.dot_dimension_numbers<[1], [0], [0], [1], [0, 0, 1, 1], [], []>} : vector<128x64xf32>, vector<64x64xf32>, vector<128x64xf32> -> vector<128x64xf32>
      %47 = arith.truncf %46 : vector<128x64xf32> to vector<128x64xbf16>
      %c0_30 = arith.constant 0 : index
      %c0_31 = arith.constant 0 : index
      %48 = vector.load %arg23[%c0_30, %c0_31] : memref<256x64xbf16, #tpu.memory_space<vmem>>, vector<128x64xbf16>
      tpu.vector_store %arg23[%c0_30, %c0_31], %47 {strides = array<i32>} : memref<256x64xbf16, #tpu.memory_space<vmem>>, vector<128x64xbf16>,
      %49 = arith.index_cast %arg0 : i32 to index
      %c0_32 = arith.constant 0 : index
      %c0_33 = arith.constant 0 : index
      %50 = vector.load %arg11[%49, %c0_32, %c0_33] : memref<4x64x64xf32, #tpu.memory_space<vmem>>, vector<1x64x64xf32>
      %51 = vector.shape_cast %50 : vector<1x64x64xf32> to vector<64x64xf32>
      %cst_34 = arith.constant dense<0.000000e+00> : vector<128x64xf32>
      %52 = tpu.matmul %42, %51, %cst_34 {dimension_numbers = #tpu.dot_dimension_numbers<[1], [0], [0], [1], [0, 0, 1, 1], [], []>} : vector<128x64xf32>, vector<64x64xf32>, vector<128x64xf32> -> vector<128x64xf32>
      %53 = arith.truncf %52 : vector<128x64xf32> to vector<128x64xbf16>
      %c128 = arith.constant 128 : index
      %c0_35 = arith.constant 0 : index
      %54 = vector.load %arg23[%c128, %c0_35] : memref<256x64xbf16, #tpu.memory_space<vmem>>, vector<128x64xbf16>
      tpu.vector_store %arg23[%c128, %c0_35], %53 {strides = array<i32>} : memref<256x64xbf16, #tpu.memory_space<vmem>>, vector<128x64xbf16>,
      %cst_36 = arith.constant 0.000000e+00 : f32
      %55 = vector.broadcast %cst_36 : f32 to vector<128x64xf32>
      %c0_37 = arith.constant 0 : index
      %c0_38 = arith.constant 0 : index
      %56 = vector.load %arg24[%c0_37, %c0_38] : memref<128x64xf32, #tpu.memory_space<vmem>>, vector<128x64xf32>
      tpu.vector_store %arg24[%c0_37, %c0_38], %55 {strides = array<i32>} : memref<128x64xf32, #tpu.memory_space<vmem>>, vector<128x64xf32>,
    } else {
    }
    %c0 = arith.constant 0 : index
    %c0_4 = arith.constant 0 : index
    %8 = vector.load %arg3[%c0, %c0_4] : memref<256x256xbf16, #tpu.memory_space<vmem>>, vector<256x256xbf16>
    %c0_5 = arith.constant 0 : index
    %c0_6 = arith.constant 0 : index
    %9 = vector.load %arg23[%c0_5, %c0_6] : memref<256x64xbf16, #tpu.memory_space<vmem>>, vector<256x64xbf16>
    %cst = arith.constant dense<0.000000e+00> : vector<256x64xf32>
    %10 = tpu.matmul %8, %9, %cst {dimension_numbers = #tpu.dot_dimension_numbers<[1], [0], [0], [1], [0, 0, 1, 1], [], []>} : vector<256x256xbf16>, vector<256x64xbf16>, vector<256x64xf32> -> vector<256x64xf32>
    %11 = arith.index_cast %arg0 : i32 to index
    %c0_7 = arith.constant 0 : index
    %c0_8 = arith.constant 0 : index
    %12 = vector.load %arg12[%11, %c0_7, %c0_8] : memref<4x1x64xf32, #tpu.memory_space<vmem>>, vector<1x1x64xf32>
    %13 = vector.shape_cast %12 : vector<1x1x64xf32> to vector<1x64xf32>
    %14 = vector.broadcast %13 : vector<1x64xf32> to vector<256x64xf32>
    %15 = arith.addf %10, %14 : vector<256x64xf32>
    %cst_9 = arith.constant 0.000000e+00 : f32
    %16 = vector.broadcast %cst_9 : f32 to vector<256x64xf32>
    %17 = arith.maximumf %15, %16 : vector<256x64xf32>
    %18 = arith.index_cast %arg0 : i32 to index
    %c0_10 = arith.constant 0 : index
    %c0_11 = arith.constant 0 : index
    %19 = vector.load %arg13[%18, %c0_10, %c0_11] : memref<4x1x64xf32, #tpu.memory_space<vmem>>, vector<1x1x64xf32>
    %20 = vector.shape_cast %19 : vector<1x1x64xf32> to vector<1x64xf32>
    %21 = vector.broadcast %20 : vector<1x64xf32> to vector<256x64xf32>
    %22 = arith.mulf %17, %21 : vector<256x64xf32>
    %23 = arith.index_cast %arg0 : i32 to index
    %c0_12 = arith.constant 0 : index
    %c0_13 = arith.constant 0 : index
    %24 = vector.load %arg14[%23, %c0_12, %c0_13] : memref<4x1x64xf32, #tpu.memory_space<vmem>>, vector<1x1x64xf32>
    %25 = vector.shape_cast %24 : vector<1x1x64xf32> to vector<1x64xf32>
    %26 = vector.broadcast %25 : vector<1x64xf32> to vector<256x64xf32>
    %27 = arith.addf %22, %26 : vector<256x64xf32>
    %c0_14 = arith.constant 0 : index
    %c0_15 = arith.constant 0 : index
    %28 = vector.load %arg24[%c0_14, %c0_15] : memref<128x64xf32, #tpu.memory_space<vmem>>, vector<128x64xf32>
    %c0_16 = arith.constant 0 : index
    %c0_17 = arith.constant 0 : index
    %29 = vector.load %arg4[%c0_16, %c0_17] : memref<128x256xbf16, #tpu.memory_space<vmem>>, vector<128x256xbf16>
    %30 = arith.truncf %27 : vector<256x64xf32> to vector<256x64xbf16>
    %cst_18 = arith.constant dense<0.000000e+00> : vector<128x64xf32>
    %31 = tpu.matmul %29, %30, %cst_18 {dimension_numbers = #tpu.dot_dimension_numbers<[1], [0], [0], [1], [0, 0, 1, 1], [], []>} : vector<128x256xbf16>, vector<256x64xbf16>, vector<128x64xf32> -> vector<128x64xf32>
    %32 = arith.addf %28, %31 : vector<128x64xf32>
    %c0_19 = arith.constant 0 : index
    %c0_20 = arith.constant 0 : index
    %33 = vector.load %arg24[%c0_19, %c0_20] : memref<128x64xf32, #tpu.memory_space<vmem>>, vector<128x64xf32>
    tpu.vector_store %arg24[%c0_19, %c0_20], %32 {strides = array<i32>} : memref<128x64xf32, #tpu.memory_space<vmem>>, vector<128x64xf32>,
    %c0_i32_21 = arith.constant 0 : i32
    %34 = arith.cmpi eq, %arg1, %c0_i32_21 : i32
    %35 = arith.extui %34 : i1 to i32
    %c0_i32_22 = arith.constant 0 : i32
    %36 = arith.cmpi ne, %35, %c0_i32_22 : i32
    scf.if %36 {
      %c0_25 = arith.constant 0 : index
      %c0_26 = arith.constant 0 : index
      %42 = vector.load %arg24[%c0_25, %c0_26] : memref<128x64xf32, #tpu.memory_space<vmem>>, vector<128x64xf32>
      %c0_27 = arith.constant 0 : index
      %c0_28 = arith.constant 0 : index
      %43 = vector.load %arg5[%c0_27, %c0_28] : memref<128x1xf32, #tpu.memory_space<vmem>>, vector<128x1xf32>
      %44 = vector.broadcast %43 : vector<128x1xf32> to vector<128x64xf32>
      %45 = arith.mulf %42, %44 : vector<128x64xf32>
      %c0_29 = arith.constant 0 : index
      %c0_30 = arith.constant 0 : index
      %46 = vector.load %arg22[%c0_29, %c0_30] : memref<128x64xf32, #tpu.memory_space<vmem>>, vector<128x64xf32>
      %47 = arith.addf %45, %46 : vector<128x64xf32>
      %c0_31 = arith.constant 0 : index
      %c0_32 = arith.constant 0 : index
      %48 = vector.load %arg22[%c0_31, %c0_32] : memref<128x64xf32, #tpu.memory_space<vmem>>, vector<128x64xf32>
      tpu.vector_store %arg22[%c0_31, %c0_32], %47 {strides = array<i32>} : memref<128x64xf32, #tpu.memory_space<vmem>>, vector<128x64xf32>,
    } else {
    }
    %c3_i32 = arith.constant 3 : i32
    %37 = arith.cmpi eq, %arg0, %c3_i32 : i32
    %c0_i32_23 = arith.constant 0 : i32
    %38 = arith.cmpi eq, %arg1, %c0_i32_23 : i32
    %39 = arith.andi %37, %38 : i1
    %40 = arith.extui %39 : i1 to i32
    %c0_i32_24 = arith.constant 0 : i32
    %41 = arith.cmpi ne, %40, %c0_i32_24 : i32
    scf.if %41 {
      %c0_25 = arith.constant 0 : index
      %c0_26 = arith.constant 0 : index
      %42 = vector.load %arg22[%c0_25, %c0_26] : memref<128x64xf32, #tpu.memory_space<vmem>>, vector<128x64xf32>
      %c0_27 = arith.constant 0 : index
      %c0_28 = arith.constant 0 : index
      %43 = vector.load %arg15[%c0_27, %c0_28] : memref<64x64xf32, #tpu.memory_space<vmem>>, vector<64x64xf32>
      %cst_29 = arith.constant dense<0.000000e+00> : vector<128x64xf32>
      %44 = tpu.matmul %42, %43, %cst_29 {dimension_numbers = #tpu.dot_dimension_numbers<[1], [0], [0], [1], [0, 0, 1, 1], [], []>} : vector<128x64xf32>, vector<64x64xf32>, vector<128x64xf32> -> vector<128x64xf32>
      %c0_30 = arith.constant 0 : index
      %c0_31 = arith.constant 0 : index
      %45 = vector.load %arg16[%c0_30, %c0_31] : memref<1x64xf32, #tpu.memory_space<vmem>>, vector<1x64xf32>
      %46 = vector.broadcast %45 : vector<1x64xf32> to vector<128x64xf32>
      %47 = arith.addf %44, %46 : vector<128x64xf32>
      %cst_32 = arith.constant 0.000000e+00 : f32
      %48 = vector.broadcast %cst_32 : f32 to vector<128x64xf32>
      %49 = arith.maximumf %47, %48 : vector<128x64xf32>
      %c0_33 = arith.constant 0 : index
      %c0_34 = arith.constant 0 : index
      %50 = vector.load %arg17[%c0_33, %c0_34] : memref<64x32xf32, #tpu.memory_space<vmem>>, vector<64x32xf32>
      %cst_35 = arith.constant dense<0.000000e+00> : vector<128x32xf32>
      %51 = tpu.matmul %49, %50, %cst_35 {dimension_numbers = #tpu.dot_dimension_numbers<[1], [0], [0], [1], [0, 0, 1, 1], [], []>} : vector<128x64xf32>, vector<64x32xf32>, vector<128x32xf32> -> vector<128x32xf32>
      %c0_36 = arith.constant 0 : index
      %c0_37 = arith.constant 0 : index
      %52 = vector.load %arg18[%c0_36, %c0_37] : memref<1x32xf32, #tpu.memory_space<vmem>>, vector<1x32xf32>
      %53 = vector.broadcast %52 : vector<1x32xf32> to vector<128x32xf32>
      %54 = arith.addf %51, %53 : vector<128x32xf32>
      %cst_38 = arith.constant 0.000000e+00 : f32
      %55 = vector.broadcast %cst_38 : f32 to vector<128x32xf32>
      %56 = arith.maximumf %54, %55 : vector<128x32xf32>
      %c0_39 = arith.constant 0 : index
      %c0_40 = arith.constant 0 : index
      %57 = vector.load %arg19[%c0_39, %c0_40] : memref<32x128xf32, #tpu.memory_space<vmem>>, vector<32x128xf32>
      %cst_41 = arith.constant dense<0.000000e+00> : vector<128x128xf32>
      %58 = tpu.matmul %56, %57, %cst_41 {dimension_numbers = #tpu.dot_dimension_numbers<[1], [0], [0], [1], [0, 0, 1, 1], [], []>} : vector<128x32xf32>, vector<32x128xf32>, vector<128x128xf32> -> vector<128x128xf32>
      %c0_42 = arith.constant 0 : index
      %c0_43 = arith.constant 0 : index
      %59 = vector.load %arg20[%c0_42, %c0_43] : memref<1x128xf32, #tpu.memory_space<vmem>>, vector<1x128xf32>
      %60 = vector.broadcast %59 : vector<1x128xf32> to vector<128x128xf32>
      %61 = arith.addf %58, %60 : vector<128x128xf32>
      %c0_44 = arith.constant 0 : index
      %c0_45 = arith.constant 0 : index
      %62 = vector.load %arg21[%c0_44, %c0_45] : memref<128x128xf32, #tpu.memory_space<vmem>>, vector<128x128xf32>
      tpu.vector_store %arg21[%c0_44, %c0_45], %61 {strides = array<i32>} : memref<128x128xf32, #tpu.memory_space<vmem>>, vector<128x128xf32>,
    } else {
    }
    return
  }
  func.func @transform_0(%arg0: i32, %arg1: i32) -> (i32, i32) {
    %c0_i32 = arith.constant 0 : i32
    %c0_i32_0 = arith.constant 0 : i32
    %c0_i32_1 = arith.constant 0 : i32
    return %c0_i32, %c0_i32_0 : i32, i32
  }
  func.func @transform_1(%arg0: i32, %arg1: i32) -> (i32, i32) {
    %c0_i32 = arith.constant 0 : i32
    %c0_i32_0 = arith.constant 0 : i32
    return %arg1, %c0_i32 : i32, i32
  }
  func.func @transform_2(%arg0: i32, %arg1: i32) -> (i32, i32) {
    %c0_i32 = arith.constant 0 : i32
    %c0_i32_0 = arith.constant 0 : i32
    return %c0_i32, %arg1 : i32, i32
  }
  func.func @transform_3(%arg0: i32, %arg1: i32) -> (i32, i32) {
    %c0_i32 = arith.constant 0 : i32
    %c0_i32_0 = arith.constant 0 : i32
    %c0_i32_1 = arith.constant 0 : i32
    return %c0_i32, %c0_i32_0 : i32, i32
  }
  func.func @transform_4(%arg0: i32, %arg1: i32) -> (i32, i32) {
    %c0_i32 = arith.constant 0 : i32
    %c0_i32_0 = arith.constant 0 : i32
    %c0_i32_1 = arith.constant 0 : i32
    return %c0_i32, %c0_i32_0 : i32, i32
  }
  func.func @transform_5(%arg0: i32, %arg1: i32) -> (i32, i32) {
    %c0_i32 = arith.constant 0 : i32
    %c0_i32_0 = arith.constant 0 : i32
    %c0_i32_1 = arith.constant 0 : i32
    return %c0_i32, %c0_i32_0 : i32, i32
  }
  func.func @transform_6(%arg0: i32, %arg1: i32) -> (i32, i32) {
    %c0_i32 = arith.constant 0 : i32
    %c0_i32_0 = arith.constant 0 : i32
    %c0_i32_1 = arith.constant 0 : i32
    return %c0_i32, %c0_i32_0 : i32, i32
  }
  func.func @transform_7(%arg0: i32, %arg1: i32) -> (i32, i32) {
    %c0_i32 = arith.constant 0 : i32
    %c0_i32_0 = arith.constant 0 : i32
    %c0_i32_1 = arith.constant 0 : i32
    return %c0_i32, %c0_i32_0 : i32, i32
  }
  func.func @transform_8(%arg0: i32, %arg1: i32) -> (i32, i32, i32) {
    %c0_i32 = arith.constant 0 : i32
    %c0_i32_0 = arith.constant 0 : i32
    %c0_i32_1 = arith.constant 0 : i32
    %c0_i32_2 = arith.constant 0 : i32
    return %c0_i32, %c0_i32_0, %c0_i32_1 : i32, i32, i32
  }
  func.func @transform_9(%arg0: i32, %arg1: i32) -> (i32, i32, i32) {
    %c0_i32 = arith.constant 0 : i32
    %c0_i32_0 = arith.constant 0 : i32
    %c0_i32_1 = arith.constant 0 : i32
    %c0_i32_2 = arith.constant 0 : i32
    return %c0_i32, %c0_i32_0, %c0_i32_1 : i32, i32, i32
  }
  func.func @transform_10(%arg0: i32, %arg1: i32) -> (i32, i32, i32) {
    %c0_i32 = arith.constant 0 : i32
    %c0_i32_0 = arith.constant 0 : i32
    %c0_i32_1 = arith.constant 0 : i32
    %c0_i32_2 = arith.constant 0 : i32
    return %c0_i32, %c0_i32_0, %c0_i32_1 : i32, i32, i32
  }
  func.func @transform_11(%arg0: i32, %arg1: i32) -> (i32, i32, i32) {
    %c0_i32 = arith.constant 0 : i32
    %c0_i32_0 = arith.constant 0 : i32
    %c0_i32_1 = arith.constant 0 : i32
    %c0_i32_2 = arith.constant 0 : i32
    return %c0_i32, %c0_i32_0, %c0_i32_1 : i32, i32, i32
  }
  func.func @transform_12(%arg0: i32, %arg1: i32) -> (i32, i32, i32) {
    %c0_i32 = arith.constant 0 : i32
    %c0_i32_0 = arith.constant 0 : i32
    %c0_i32_1 = arith.constant 0 : i32
    %c0_i32_2 = arith.constant 0 : i32
    return %c0_i32, %c0_i32_0, %c0_i32_1 : i32, i32, i32
  }
  func.func @transform_13(%arg0: i32, %arg1: i32) -> (i32, i32) {
    %c0_i32 = arith.constant 0 : i32
    %c0_i32_0 = arith.constant 0 : i32
    %c0_i32_1 = arith.constant 0 : i32
    return %c0_i32, %c0_i32_0 : i32, i32
  }
  func.func @transform_14(%arg0: i32, %arg1: i32) -> (i32, i32) {
    %c0_i32 = arith.constant 0 : i32
    %c0_i32_0 = arith.constant 0 : i32
    %c0_i32_1 = arith.constant 0 : i32
    return %c0_i32, %c0_i32_0 : i32, i32
  }
  func.func @transform_15(%arg0: i32, %arg1: i32) -> (i32, i32) {
    %c0_i32 = arith.constant 0 : i32
    %c0_i32_0 = arith.constant 0 : i32
    %c0_i32_1 = arith.constant 0 : i32
    return %c0_i32, %c0_i32_0 : i32, i32
  }
  func.func @transform_16(%arg0: i32, %arg1: i32) -> (i32, i32) {
    %c0_i32 = arith.constant 0 : i32
    %c0_i32_0 = arith.constant 0 : i32
    %c0_i32_1 = arith.constant 0 : i32
    return %c0_i32, %c0_i32_0 : i32, i32
  }
  func.func @transform_17(%arg0: i32, %arg1: i32) -> (i32, i32) {
    %c0_i32 = arith.constant 0 : i32
    %c0_i32_0 = arith.constant 0 : i32
    %c0_i32_1 = arith.constant 0 : i32
    return %c0_i32, %c0_i32_0 : i32, i32
  }
  func.func @transform_18(%arg0: i32, %arg1: i32) -> (i32, i32) {
    %c0_i32 = arith.constant 0 : i32
    %c0_i32_0 = arith.constant 0 : i32
    %c0_i32_1 = arith.constant 0 : i32
    return %c0_i32, %c0_i32_0 : i32, i32
  }
  func.func @transform_19(%arg0: i32, %arg1: i32) -> (i32, i32) {
    %c0_i32 = arith.constant 0 : i32
    %c0_i32_0 = arith.constant 0 : i32
    %c0_i32_1 = arith.constant 0 : i32
    return %c0_i32, %c0_i32_0 : i32, i32
  }
}

</mosaic_0001>

<llo_original>
// kernel: tpu_custom_call.1
$region0: #{tpu_custom_call.1}
  #allocation0 [shape = 'u32[]', space=smem, size = 0x4, offset = 0x4, fixed_abs, tag = 'smem constant byte address 0x4 - core index']
  #allocation1 [shape = 'u32[144,128]{1,0:T(1,128)}', space=vmem, size = 0x12000, scoped, tag = 'internal scratch']
  #allocation2 [shape = 'f32[128,64]{1,0:T(8,128)}', space=vmem, size = 0x10000, scoped, tag = 'scratch operand']
  #allocation3 [shape = 'bf16[256,64]{1,0:T(8,128)(2,1)}', space=vmem, size = 0x10000, scoped, tag = 'scratch operand']
  #allocation4 [shape = 'f32[128,64]{1,0:T(8,128)}', space=vmem, size = 0x10000, scoped, tag = 'scratch operand']
  %s0 = inlined_call_operand.vmem [shape: f32[128,16], index: 0, kind: input, shape index: {}]
  %s1 = inlined_call_operand.vmem [shape: bf16[256,256], index: 1, kind: input, shape index: {}]
  %s2 = inlined_call_operand.hbm [shape: bf16[128,256], index: 2, kind: input, shape index: {}]
  %s3 = inlined_call_operand.vmem [shape: f32[128,1], index: 3, kind: input, shape index: {}]
  %s4 = inlined_call_operand.hbm [shape: f32[16,64], index: 4, kind: input, shape index: {}]
  %s5 = inlined_call_operand.vmem [shape: f32[1,64], index: 5, kind: input, shape index: {}]
  %s6 = inlined_call_operand.vmem [shape: f32[64,64], index: 6, kind: input, shape index: {}]
  %s7 = inlined_call_operand.hbm [shape: f32[1,64], index: 7, kind: input, shape index: {}]
  %s8 = inlined_call_operand.hbm [shape: f32[4,64,64], index: 8, kind: input, shape index: {}]
  %s9 = inlined_call_operand.hbm [shape: f32[4,64,64], index: 9, kind: input, shape index: {}]
  %s10 = inlined_call_operand.hbm [shape: f32[4,1,64], index: 10, kind: input, shape index: {}]
  %s11 = inlined_call_operand.hbm [shape: f32[4,1,64], index: 11, kind: input, shape index: {}]
  %s12 = inlined_call_operand.vmem [shape: f32[4,1,64], index: 12, kind: input, shape index: {}]
  %s13 = inlined_call_operand.vmem [shape: f32[64,64], index: 13, kind: input, shape index: {}]
  %s14 = inlined_call_operand.vmem [shape: f32[1,64], index: 14, kind: input, shape index: {}]
  %s15 = inlined_call_operand.vmem [shape: f32[64,32], index: 15, kind: input, shape index: {}]
  %s16 = inlined_call_operand.vmem [shape: f32[1,32], index: 16, kind: input, shape index: {}]
  %s17 = inlined_call_operand.hbm [shape: f32[32,128], index: 17, kind: input, shape index: {}]
  %s18 = inlined_call_operand.vmem [shape: f32[1,128], index: 18, kind: input, shape index: {}]
  %s19 = inlined_call_operand.hbm [shape: f32[128,128], index: 19, kind: output, shape index: {}]
  %s20 = sld [smem:[#allocation0]]
  $region157: #{tpu_custom_call.1} parent=0
    _
  %s22 = ssub.s32 1, %s20
  %s23 = scalar_select 0, %s22, %s20
  $region1: #{tpu_custom_call.1} parent=0
    #allocation5 [shape = 'u8[65536]{0}', space=vmem, size = 0x10000, scoped, tag = 'input window, operand 2, single buffered']
    #allocation6 [shape = 's32[2]{0}', space=sflag, size = 0x8, scoped, tag = 'scoped memory for tpu_custom_call.1']
    #allocation7 [shape = 's32[2]{0}', space=sflag, size = 0x8, scoped, tag = 'scoped memory for tpu_custom_call.1']
    #allocation8 [shape = 'u8[8192]{0}', space=vmem, size = 0x2000, scoped, tag = 'input window, operand 4, single buffered']
    #allocation9 [shape = 's32[1]{0}', space=sflag, size = 0x4, scoped, tag = 'scoped memory for tpu_custom_call.1']
    #allocation10 [shape = 'u8[512]{0}', space=vmem, size = 0x400, scoped, tag = 'input window, operand 7, single buffered']
    #allocation11 [shape = 'u8[131072]{0}', space=vmem, size = 0x20000, scoped, tag = 'input window, operand 8, single buffered']
    #allocation12 [shape = 's32[1]{0}', space=sflag, size = 0x4, scoped, tag = 'scoped memory for tpu_custom_call.1']
    #allocation13 [shape = 'u8[131072]{0}', space=vmem, size = 0x20000, scoped, tag = 'input window, operand 9, single buffered']
    #allocation14 [shape = 'u8[2048]{0}', space=vmem, size = 0x800, scoped, tag = 'input window, operand 10, single buffered']
    #allocation15 [shape = 's32[1]{0}', space=sflag, size = 0x4, scoped, tag = 'scoped memory for tpu_custom_call.1']
    #allocation16 [shape = 'u8[2048]{0}', space=vmem, size = 0x800, scoped, tag = 'input window, operand 11, single buffered']
    #allocation17 [shape = 'u8[16384]{0}', space=vmem, size = 0x4000, scoped, tag = 'input window, operand 17, single buffered']
    #allocation18 [shape = 's32[1]{0}', space=sflag, size = 0x4, scoped, tag = 'scoped memory for tpu_custom_call.1']
    #allocation19 [shape = 'u8[65536]{0}', space=vmem, size = 0x10000, scoped, tag = 'output window, operand 0, single buffered']
    %24 = vsyncpa [#allocation6], 0
    %25 = vsyncpa [#allocation9], 0
    %26 = vsyncpa [#allocation12], 0
    %27 = vsyncpa [#allocation15], 0
    %28 = vsyncpa [#allocation18], 0
    %29 = vsyncpa [#allocation7], 0
    loop: start=0, step=1, limit=6
    $region2: #{tpu_custom_call.1} parent=1 // loop_pre_header
      _
    $region3: #{tpu_custom_call.1} parent=1 // loop_header
      %s31 = sphi 0, %s35
      %p32 = scmp.ge.s32.totalorder %s31, 6
      %s38 = sphi 0, %s50
      %s39 = sphi 0, %s46
      %s40 = sphi 0, %s38
      %s41 = sphi 0, %s39
      %s42 = sphi 0, %s40
      %s43 = sphi 0, %s41
      %s51 = sphi 0, %s51
      %s53 = sphi 0, %s51
      %s54 = sphi 0, %s53
      %s68 = sphi 0, %s54
      %s74 = sphi 0, %s76
      %s77 = sphi 0, %s74
      %s78 = sphi 0, %s77
      %s94 = sphi 0, %s78
      %s100 = sphi 0, %s102
      %s103 = sphi 0, %s100
      %s104 = sphi 0, %s103
      %s120 = sphi 0, %s104
      %s124 = sphi 0, %s124
      %s126 = sphi 0, %s124
      %s127 = sphi 0, %s126
      %s141 = sphi 0, %s127
      %s145 = sphi 0, %s145
      %s147 = sphi 0, %s145
      %s148 = sphi 0, %s147
      %s162 = sphi 0, %s148
      %s166 = sphi 0, %s166
      %s168 = sphi 0, %s166
      %s169 = sphi 0, %s168
      %s183 = sphi 0, %s169
      %s187 = sphi 0, %s187
      %s189 = sphi 0, %s187
      %s190 = sphi 0, %s189
      %s204 = sphi 0, %s190
      %s208 = sphi 0, %s208
      %s210 = sphi 0, %s208
      %s211 = sphi 0, %s210
      %s225 = sphi 0, %s211
      %s229 = sphi 0, %s229
      %s231 = sphi 0, %s229
      %s232 = sphi 0, %s231
      %s246 = sphi 0, %s232
      %s250 = sphi 0, %s250
      %s252 = sphi 0, %s250
      %s253 = sphi 0, %s252
      %s267 = sphi 0, %s253
      %s271 = sphi 0, %s271
      %s273 = sphi 0, %s271
      %s274 = sphi 0, %s273
      %s288 = sphi 0, %s274
      %s292 = sphi 0, %s292
      %s294 = sphi 0, %s292
      %s295 = sphi 0, %s294
      %s309 = sphi 0, %s295
      %s313 = sphi 0, %s313
      %s315 = sphi 0, %s313
      %s316 = sphi 0, %s315
      %s330 = sphi 0, %s316
      %s334 = sphi 0, %s334
      %s336 = sphi 0, %s334
      %s337 = sphi 0, %s336
      %s351 = sphi 0, %s337
      %s355 = sphi 0, %s355
      %s357 = sphi 0, %s355
      %s358 = sphi 0, %s357
      %s372 = sphi 0, %s358
      %s376 = sphi 0, %s376
      %s378 = sphi 0, %s376
      %s379 = sphi 0, %s378
      %s393 = sphi 0, %s379
      %s397 = sphi 0, %s397
      %s399 = sphi 0, %s397
      %s400 = sphi 0, %s399
      %s414 = sphi 0, %s400
      %s418 = sphi 0, %s418
      %s420 = sphi 0, %s418
      %s421 = sphi 0, %s420
      %s435 = sphi 0, %s421
      %s439 = sphi 0, %s439
      %s441 = sphi 0, %s439
      %s442 = sphi 0, %s441
      %s456 = sphi 0, %s442
      %s460 = sphi 0, %s460
      %s462 = sphi 0, %s460
      %s463 = sphi 0, %s462
      %s477 = sphi 0, %s463
    $region4: #{tpu_custom_call.1} parent=1 // loop_header_branch
      %34 = sbr.rel (%p32) target = $region8
    $region5: #{tpu_custom_call.1} parent=1 // loop_body
      %s36 = ssub.s32 %s31, 1
      %s37 = ssub.s32 %s31, 2
      %s44 = sadd.s32 1, %s39
      %p45 = scmp.ge.s32.totalorder %s44, 1
      %s46 = scalar_select %p45, 0, %s44
      %s47 = sadd.s32 1, %s38
      %s48 = scalar_select %p45, %s47, %s38
      %p49 = scmp.ge.s32.totalorder %s48, 4
      %s50 = scalar_select %p49, 0, %s48
      %s52 = sadd.s32 %s51, 1
      %p55 = scmp.eq.s32.totalorder %s31, 3
      %p56 = scmp.ne.s32.totalorder %s51, %s53
      %p57 = scmp.eq.s32.totalorder %s31, 0
      %p58 = por %p56, %p57
      %p59 = scmp.ne.s32.totalorder %s51, %s53
      %p60 = scmp.eq.s32.totalorder %s36, 3
      %p61 = por %p59, %p60
      %p62 = scmp.ne.s32.totalorder %s53, %s54
      %p63 = scmp.eq.s32.totalorder %s36, 0
      %p64 = por %p62, %p63
      %p65 = scmp.ne.s32.totalorder %s53, %s54
      %p66 = scmp.eq.s32.totalorder %s37, 3
      %p67 = por %p65, %p66
      %p69 = scmp.ne.s32.totalorder %s54, %s68
      %p70 = scmp.eq.s32.totalorder %s37, 0
      %p71 = por %p69, %p70
      %s72 = ssub.s32 %s39, %s46
      %p73 = scmp.eq.s32.totalorder %s72, 0
      %s75 = sadd.s32 %s74, 1
      %s76 = scalar_select %p73, %s74, %s75
      %p79 = pneg %p73
      %p80 = scmp.eq.s32.totalorder %s31, 3
      %p81 = por %p79, %p80
      %p82 = scmp.ne.s32.totalorder %s74, %s77
      %p83 = scmp.eq.s32.totalorder %s31, 0
      %p84 = por %p82, %p83
      %p85 = scmp.ne.s32.totalorder %s74, %s77
      %p86 = scmp.eq.s32.totalorder %s36, 3
      %p87 = por %p85, %p86
      %p88 = scmp.ne.s32.totalorder %s77, %s78
      %p89 = scmp.eq.s32.totalorder %s36, 0
      %p90 = por %p88, %p89
      %p91 = scmp.ne.s32.totalorder %s77, %s78
      %p92 = scmp.eq.s32.totalorder %s37, 3
      %p93 = por %p91, %p92
      %p95 = scmp.ne.s32.totalorder %s78, %s94
      %p96 = scmp.eq.s32.totalorder %s37, 0
      %p97 = por %p95, %p96
      %s98 = ssub.s32 %s39, %s46
      %p99 = scmp.eq.s32.totalorder %s98, 0
      %s101 = sadd.s32 %s100, 1
      %s102 = scalar_select %p99, %s100, %s101
      %p105 = pneg %p99
      %p106 = scmp.eq.s32.totalorder %s31, 3
      %p107 = por %p105, %p106
      %p108 = scmp.ne.s32.totalorder %s100, %s103
      %p109 = scmp.eq.s32.totalorder %s31, 0
      %p110 = por %p108, %p109
      %p111 = scmp.ne.s32.totalorder %s100, %s103
      %p112 = scmp.eq.s32.totalorder %s36, 3
      %p113 = por %p111, %p112
      %p114 = scmp.ne.s32.totalorder %s103, %s104
      %p115 = scmp.eq.s32.totalorder %s36, 0
      %p116 = por %p114, %p115
      %p117 = scmp.ne.s32.totalorder %s103, %s104
      %p118 = scmp.eq.s32.totalorder %s37, 3
      %p119 = por %p117, %p118
      %p121 = scmp.ne.s32.totalorder %s104, %s120
      %p122 = scmp.eq.s32.totalorder %s37, 0
      %p123 = por %p121, %p122
      %s125 = sadd.s32 %s124, 1
      %p128 = scmp.eq.s32.totalorder %s31, 3
      %p129 = scmp.ne.s32.totalorder %s124, %s126
      %p130 = scmp.eq.s32.totalorder %s31, 0
      %p131 = por %p129, %p130
      %p132 = scmp.ne.s32.totalorder %s124, %s126
      %p133 = scmp.eq.s32.totalorder %s36, 3
      %p134 = por %p132, %p133
      %p135 = scmp.ne.s32.totalorder %s126, %s127
      %p136 = scmp.eq.s32.totalorder %s36, 0
      %p137 = por %p135, %p136
      %p138 = scmp.ne.s32.totalorder %s126, %s127
      %p139 = scmp.eq.s32.totalorder %s37, 3
      %p140 = por %p138, %p139
      %p142 = scmp.ne.s32.totalorder %s127, %s141
      %p143 = scmp.eq.s32.totalorder %s37, 0
      %p144 = por %p142, %p143
      %s146 = sadd.s32 %s145, 1
      %p149 = scmp.eq.s32.totalorder %s31, 3
      %p150 = scmp.ne.s32.totalorder %s145, %s147
      %p151 = scmp.eq.s32.totalorder %s31, 0
      %p152 = por %p150, %p151
      %p153 = scmp.ne.s32.totalorder %s145, %s147
      %p154 = scmp.eq.s32.totalorder %s36, 3
      %p155 = por %p153, %p154
      %p156 = scmp.ne.s32.totalorder %s147, %s148
      %p157 = scmp.eq.s32.totalorder %s36, 0
      %p158 = por %p156, %p157
      %p159 = scmp.ne.s32.totalorder %s147, %s148
      %p160 = scmp.eq.s32.totalorder %s37, 3
      %p161 = por %p159, %p160
      %p163 = scmp.ne.s32.totalorder %s148, %s162
      %p164 = scmp.eq.s32.totalorder %s37, 0
      %p165 = por %p163, %p164
      %s167 = sadd.s32 %s166, 1
      %p170 = scmp.eq.s32.totalorder %s31, 3
      %p171 = scmp.ne.s32.totalorder %s166, %s168
      %p172 = scmp.eq.s32.totalorder %s31, 0
      %p173 = por %p171, %p172
      %p174 = scmp.ne.s32.totalorder %s166, %s168
      %p175 = scmp.eq.s32.totalorder %s36, 3
      %p176 = por %p174, %p175
      %p177 = scmp.ne.s32.totalorder %s168, %s169
      %p178 = scmp.eq.s32.totalorder %s36, 0
      %p179 = por %p177, %p178
      %p180 = scmp.ne.s32.totalorder %s168, %s169
      %p181 = scmp.eq.s32.totalorder %s37, 3
      %p182 = por %p180, %p181
      %p184 = scmp.ne.s32.totalorder %s169, %s183
      %p185 = scmp.eq.s32.totalorder %s37, 0
      %p186 = por %p184, %p185
      %s188 = sadd.s32 %s187, 1
      %p191 = scmp.eq.s32.totalorder %s31, 3
      %p192 = scmp.ne.s32.totalorder %s187, %s189
      %p193 = scmp.eq.s32.totalorder %s31, 0
      %p194 = por %p192, %p193
      %p195 = scmp.ne.s32.totalorder %s187, %s189
      %p196 = scmp.eq.s32.totalorder %s36, 3
      %p197 = por %p195, %p196
      %p198 = scmp.ne.s32.totalorder %s189, %s190
      %p199 = scmp.eq.s32.totalorder %s36, 0
      %p200 = por %p198, %p199
      %p201 = scmp.ne.s32.totalorder %s189, %s190
      %p202 = scmp.eq.s32.totalorder %s37, 3
      %p203 = por %p201, %p202
      %p205 = scmp.ne.s32.totalorder %s190, %s204
      %p206 = scmp.eq.s32.totalorder %s37, 0
      %p207 = por %p205, %p206
      %s209 = sadd.s32 %s208, 1
      %p212 = scmp.eq.s32.totalorder %s31, 3
      %p213 = scmp.ne.s32.totalorder %s208, %s210
      %p214 = scmp.eq.s32.totalorder %s31, 0
      %p215 = por %p213, %p214
      %p216 = scmp.ne.s32.totalorder %s208, %s210
      %p217 = scmp.eq.s32.totalorder %s36, 3
      %p218 = por %p216, %p217
      %p219 = scmp.ne.s32.totalorder %s210, %s211
      %p220 = scmp.eq.s32.totalorder %s36, 0
      %p221 = por %p219, %p220
      %p222 = scmp.ne.s32.totalorder %s210, %s211
      %p223 = scmp.eq.s32.totalorder %s37, 3
      %p224 = por %p222, %p223
      %p226 = scmp.ne.s32.totalorder %s211, %s225
      %p227 = scmp.eq.s32.totalorder %s37, 0
      %p228 = por %p226, %p227
      %s230 = sadd.s32 %s229, 1
      %p233 = scmp.eq.s32.totalorder %s31, 3
      %p234 = scmp.ne.s32.totalorder %s229, %s231
      %p235 = scmp.eq.s32.totalorder %s31, 0
      %p236 = por %p234, %p235
      %p237 = scmp.ne.s32.totalorder %s229, %s231
      %p238 = scmp.eq.s32.totalorder %s36, 3
      %p239 = por %p237, %p238
      %p240 = scmp.ne.s32.totalorder %s231, %s232
      %p241 = scmp.eq.s32.totalorder %s36, 0
      %p242 = por %p240, %p241
      %p243 = scmp.ne.s32.totalorder %s231, %s232
      %p244 = scmp.eq.s32.totalorder %s37, 3
      %p245 = por %p243, %p244
      %p247 = scmp.ne.s32.totalorder %s232, %s246
      %p248 = scmp.eq.s32.totalorder %s37, 0
      %p249 = por %p247, %p248
      %s251 = sadd.s32 %s250, 1
      %p254 = scmp.eq.s32.totalorder %s31, 3
      %p255 = scmp.ne.s32.totalorder %s250, %s252
      %p256 = scmp.eq.s32.totalorder %s31, 0
      %p257 = por %p255, %p256
      %p258 = scmp.ne.s32.totalorder %s250, %s252
      %p259 = scmp.eq.s32.totalorder %s36, 3
      %p260 = por %p258, %p259
      %p261 = scmp.ne.s32.totalorder %s252, %s253
      %p262 = scmp.eq.s32.totalorder %s36, 0
      %p263 = por %p261, %p262
      %p264 = scmp.ne.s32.totalorder %s252, %s253
      %p265 = scmp.eq.s32.totalorder %s37, 3
      %p266 = por %p264, %p265
      %p268 = scmp.ne.s32.totalorder %s253, %s267
      %p269 = scmp.eq.s32.totalorder %s37, 0
      %p270 = por %p268, %p269
      %s272 = sadd.s32 %s271, 1
      %p275 = scmp.eq.s32.totalorder %s31, 3
      %p276 = scmp.ne.s32.totalorder %s271, %s273
      %p277 = scmp.eq.s32.totalorder %s31, 0
      %p278 = por %p276, %p277
      %p279 = scmp.ne.s32.totalorder %s271, %s273
      %p280 = scmp.eq.s32.totalorder %s36, 3
      %p281 = por %p279, %p280
      %p282 = scmp.ne.s32.totalorder %s273, %s274
      %p283 = scmp.eq.s32.totalorder %s36, 0
      %p284 = por %p282, %p283
      %p285 = scmp.ne.s32.totalorder %s273, %s274
      %p286 = scmp.eq.s32.totalorder %s37, 3
      %p287 = por %p285, %p286
      %p289 = scmp.ne.s32.totalorder %s274, %s288
      %p290 = scmp.eq.s32.totalorder %s37, 0
      %p291 = por %p289, %p290
      %s293 = sadd.s32 %s292, 1
      %p296 = scmp.eq.s32.totalorder %s31, 3
      %p297 = scmp.ne.s32.totalorder %s292, %s294
      %p298 = scmp.eq.s32.totalorder %s31, 0
      %p299 = por %p297, %p298
      %p300 = scmp.ne.s32.totalorder %s292, %s294
      %p301 = scmp.eq.s32.totalorder %s36, 3
      %p302 = por %p300, %p301
      %p303 = scmp.ne.s32.totalorder %s294, %s295
      %p304 = scmp.eq.s32.totalorder %s36, 0
      %p305 = por %p303, %p304
      %p306 = scmp.ne.s32.totalorder %s294, %s295
      %p307 = scmp.eq.s32.totalorder %s37, 3
      %p308 = por %p306, %p307
      %p310 = scmp.ne.s32.totalorder %s295, %s309
      %p311 = scmp.eq.s32.totalorder %s37, 0
      %p312 = por %p310, %p311
      %s314 = sadd.s32 %s313, 1
      %p317 = scmp.eq.s32.totalorder %s31, 3
      %p318 = scmp.ne.s32.totalorder %s313, %s315
      %p319 = scmp.eq.s32.totalorder %s31, 0
      %p320 = por %p318, %p319
      %p321 = scmp.ne.s32.totalorder %s313, %s315
      %p322 = scmp.eq.s32.totalorder %s36, 3
      %p323 = por %p321, %p322
      %p324 = scmp.ne.s32.totalorder %s315, %s316
      %p325 = scmp.eq.s32.totalorder %s36, 0
      %p326 = por %p324, %p325
      %p327 = scmp.ne.s32.totalorder %s315, %s316
      %p328 = scmp.eq.s32.totalorder %s37, 3
      %p329 = por %p327, %p328
      %p331 = scmp.ne.s32.totalorder %s316, %s330
      %p332 = scmp.eq.s32.totalorder %s37, 0
      %p333 = por %p331, %p332
      %s335 = sadd.s32 %s334, 1
      %p338 = scmp.eq.s32.totalorder %s31, 3
      %p339 = scmp.ne.s32.totalorder %s334, %s336
      %p340 = scmp.eq.s32.totalorder %s31, 0
      %p341 = por %p339, %p340
      %p342 = scmp.ne.s32.totalorder %s334, %s336
      %p343 = scmp.eq.s32.totalorder %s36, 3
      %p344 = por %p342, %p343
      %p345 = scmp.ne.s32.totalorder %s336, %s337
      %p346 = scmp.eq.s32.totalorder %s36, 0
      %p347 = por %p345, %p346
      %p348 = scmp.ne.s32.totalorder %s336, %s337
      %p349 = scmp.eq.s32.totalorder %s37, 3
      %p350 = por %p348, %p349
      %p352 = scmp.ne.s32.totalorder %s337, %s351
      %p353 = scmp.eq.s32.totalorder %s37, 0
      %p354 = por %p352, %p353
      %s356 = sadd.s32 %s355, 1
      %p359 = scmp.eq.s32.totalorder %s31, 3
      %p360 = scmp.ne.s32.totalorder %s355, %s357
      %p361 = scmp.eq.s32.totalorder %s31, 0
      %p362 = por %p360, %p361
      %p363 = scmp.ne.s32.totalorder %s355, %s357
      %p364 = scmp.eq.s32.totalorder %s36, 3
      %p365 = por %p363, %p364
      %p366 = scmp.ne.s32.totalorder %s357, %s358
      %p367 = scmp.eq.s32.totalorder %s36, 0
      %p368 = por %p366, %p367
      %p369 = scmp.ne.s32.totalorder %s357, %s358
      %p370 = scmp.eq.s32.totalorder %s37, 3
      %p371 = por %p369, %p370
      %p373 = scmp.ne.s32.totalorder %s358, %s372
      %p374 = scmp.eq.s32.totalorder %s37, 0
      %p375 = por %p373, %p374
      %s377 = sadd.s32 %s376, 1
      %p380 = scmp.eq.s32.totalorder %s31, 3
      %p381 = scmp.ne.s32.totalorder %s376, %s378
      %p382 = scmp.eq.s32.totalorder %s31, 0
      %p383 = por %p381, %p382
      %p384 = scmp.ne.s32.totalorder %s376, %s378
      %p385 = scmp.eq.s32.totalorder %s36, 3
      %p386 = por %p384, %p385
      %p387 = scmp.ne.s32.totalorder %s378, %s379
      %p388 = scmp.eq.s32.totalorder %s36, 0
      %p389 = por %p387, %p388
      %p390 = scmp.ne.s32.totalorder %s378, %s379
      %p391 = scmp.eq.s32.totalorder %s37, 3
      %p392 = por %p390, %p391
      %p394 = scmp.ne.s32.totalorder %s379, %s393
      %p395 = scmp.eq.s32.totalorder %s37, 0
      %p396 = por %p394, %p395
      %s398 = sadd.s32 %s397, 1
      %p401 = scmp.eq.s32.totalorder %s31, 3
      %p402 = scmp.ne.s32.totalorder %s397, %s399
      %p403 = scmp.eq.s32.totalorder %s31, 0
      %p404 = por %p402, %p403
      %p405 = scmp.ne.s32.totalorder %s397, %s399
      %p406 = scmp.eq.s32.totalorder %s36, 3
      %p407 = por %p405, %p406
      %p408 = scmp.ne.s32.totalorder %s399, %s400
      %p409 = scmp.eq.s32.totalorder %s36, 0
      %p410 = por %p408, %p409
      %p411 = scmp.ne.s32.totalorder %s399, %s400
      %p412 = scmp.eq.s32.totalorder %s37, 3
      %p413 = por %p411, %p412
      %p415 = scmp.ne.s32.totalorder %s400, %s414
      %p416 = scmp.eq.s32.totalorder %s37, 0
      %p417 = por %p415, %p416
      %s419 = sadd.s32 %s418, 1
      %p422 = scmp.eq.s32.totalorder %s31, 3
      %p423 = scmp.ne.s32.totalorder %s418, %s420
      %p424 = scmp.eq.s32.totalorder %s31, 0
      %p425 = por %p423, %p424
      %p426 = scmp.ne.s32.totalorder %s418, %s420
      %p427 = scmp.eq.s32.totalorder %s36, 3
      %p428 = por %p426, %p427
      %p429 = scmp.ne.s32.totalorder %s420, %s421
      %p430 = scmp.eq.s32.totalorder %s36, 0
      %p431 = por %p429, %p430
      %p432 = scmp.ne.s32.totalorder %s420, %s421
      %p433 = scmp.eq.s32.totalorder %s37, 3
      %p434 = por %p432, %p433
      %p436 = scmp.ne.s32.totalorder %s421, %s435
      %p437 = scmp.eq.s32.totalorder %s37, 0
      %p438 = por %p436, %p437
      %s440 = sadd.s32 %s439, 1
      %p443 = scmp.eq.s32.totalorder %s31, 3
      %p444 = scmp.ne.s32.totalorder %s439, %s441
      %p445 = scmp.eq.s32.totalorder %s31, 0
      %p446 = por %p444, %p445
      %p447 = scmp.ne.s32.totalorder %s439, %s441
      %p448 = scmp.eq.s32.totalorder %s36, 3
      %p449 = por %p447, %p448
      %p450 = scmp.ne.s32.totalorder %s441, %s442
      %p451 = scmp.eq.s32.totalorder %s36, 0
      %p452 = por %p450, %p451
      %p453 = scmp.ne.s32.totalorder %s441, %s442
      %p454 = scmp.eq.s32.totalorder %s37, 3
      %p455 = por %p453, %p454
      %p457 = scmp.ne.s32.totalorder %s442, %s456
      %p458 = scmp.eq.s32.totalorder %s37, 0
      %p459 = por %p457, %p458
      %s461 = sadd.s32 %s460, 1
      %p464 = scmp.eq.s32.totalorder %s31, 3
      %p465 = scmp.ne.s32.totalorder %s460, %s462
      %p466 = scmp.eq.s32.totalorder %s31, 0
      %p467 = por %p465, %p466
      %p468 = scmp.ne.s32.totalorder %s460, %s462
      %p469 = scmp.eq.s32.totalorder %s36, 3
      %p470 = por %p468, %p469
      %p471 = scmp.ne.s32.totalorder %s462, %s463
      %p472 = scmp.eq.s32.totalorder %s36, 0
      %p473 = por %p471, %p472
      %p474 = scmp.ne.s32.totalorder %s462, %s463
      %p475 = scmp.eq.s32.totalorder %s37, 3
      %p476 = por %p474, %p475
      %p478 = scmp.ne.s32.totalorder %s463, %s477
      %p479 = scmp.eq.s32.totalorder %s37, 0
      %p480 = por %p478, %p479
      %p481 = scmp.le.s32.totalorder 1, %s31
      %p482 = scmp.lt.s32.totalorder %s31, 5
      %p483 = pnand %p481, %p482
      %p484 = pneg %p483
      // Predicated region
      $region9: #{tpu_custom_call.1} parent=5 // pred_check
        _
      $region10: #{tpu_custom_call.1} parent=5 // pred_check_branch
        %486 = sbr.rel (%p483) target = $region12
      $region11: #{tpu_custom_call.1} parent=5 // pred_region
        %s487 = ssub.s32 %s31, 1
        // Predicated region
        $region13: #{tpu_custom_call.1} parent=11 // pred_check
          %p488 = pneg %p64
        $region14: #{tpu_custom_call.1} parent=11 // pred_check_branch
          %490 = sbr.rel (%p488) target = $region16
        $region15: #{tpu_custom_call.1} parent=11 // pred_region
          _
        $region16: #{tpu_custom_call.1} parent=11 // pred_fallthru
          _
        // Predicated region
        $region17: #{tpu_custom_call.1} parent=11 // pred_check
          %p491 = pneg %p90
        $region18: #{tpu_custom_call.1} parent=11 // pred_check_branch
          %493 = sbr.rel (%p491) target = $region20
        $region19: #{tpu_custom_call.1} parent=11 // pred_region
          %s494 = smul.u32 32, %s41
          %p495 = scmp.lt.s32.totalorder %s494, 31
          %s496 = scalar_select %p495, %s494, 31
          %s497 = smul.addr %s496, 2
          %s498 = smul.addr %s497, 4
          %s499 = scalar_lea.vmem %s1, %s498
          %s500 = smul.u32 32, %s41
        $region20: #{tpu_custom_call.1} parent=11 // pred_fallthru
          _
        // Predicated region
        $region21: #{tpu_custom_call.1} parent=11 // pred_check
          %p501 = pneg %p116
        $region22: #{tpu_custom_call.1} parent=11 // pred_check_branch
          %503 = sbr.rel (%p501) target = $region24
        $region23: #{tpu_custom_call.1} parent=11 // pred_region
          %s504 = smul.u32 2, %s41
          %s506 = ssub.s32 2048, 2048
          %507 = vsyncadd [#allocation6], %s506
          %s508 = smul.addr %s504, 64
          %s509 = scalar_lea.hbm %s2, %s508
          %s510 = sshll.u32 [#allocation5], 4
          %s511 = int_to_ptr.vmem [resolvable:$true] %s510
          %516 = dma.hbm_to_vmem [thread:$0]  %s509, 2048, %s511, [#allocation6], 128, 128, 8
        $region24: #{tpu_custom_call.1} parent=11 // pred_fallthru
          _
        // Predicated region
        $region25: #{tpu_custom_call.1} parent=11 // pred_check
          %p517 = pneg %p137
        $region26: #{tpu_custom_call.1} parent=11 // pred_check_branch
          %519 = sbr.rel (%p517) target = $region28
        $region27: #{tpu_custom_call.1} parent=11 // pred_region
          _
        $region28: #{tpu_custom_call.1} parent=11 // pred_fallthru
          _
        // Predicated region
        $region29: #{tpu_custom_call.1} parent=11 // pred_check
          %p520 = pneg %p158
        $region30: #{tpu_custom_call.1} parent=11 // pred_check_branch
          %522 = sbr.rel (%p520) target = $region32
        $region31: #{tpu_custom_call.1} parent=11 // pred_region
          %s524 = ssub.s32 256, 256
          %525 = vsyncadd [#allocation9], %s524
          %s526 = sshll.u32 [#allocation8], 4
          %s527 = int_to_ptr.vmem [resolvable:$true] %s526
          %532 = dma.hbm_to_vmem [thread:$0]  %s4, 256, %s527, [#allocation9], 128, 128, 8
        $region32: #{tpu_custom_call.1} parent=11 // pred_fallthru
          _
        // Predicated region
        $region33: #{tpu_custom_call.1} parent=11 // pred_check
          %p533 = pneg %p179
        $region34: #{tpu_custom_call.1} parent=11 // pred_check_branch
          %535 = sbr.rel (%p533) target = $region36
        $region35: #{tpu_custom_call.1} parent=11 // pred_region
          _
        $region36: #{tpu_custom_call.1} parent=11 // pred_fallthru
          _
        // Predicated region
        $region37: #{tpu_custom_call.1} parent=11 // pred_check
          %p536 = pneg %p200
        $region38: #{tpu_custom_call.1} parent=11 // pred_check_branch
          %538 = sbr.rel (%p536) target = $region40
        $region39: #{tpu_custom_call.1} parent=11 // pred_region
          _
        $region40: #{tpu_custom_call.1} parent=11 // pred_fallthru
          _
        // Predicated region
        $region41: #{tpu_custom_call.1} parent=11 // pred_check
          %p539 = pneg %p221
        $region42: #{tpu_custom_call.1} parent=11 // pred_check_branch
          %541 = sbr.rel (%p539) target = $region44
        $region43: #{tpu_custom_call.1} parent=11 // pred_region
          %s543 = ssub.s32 16, 16
          %544 = vsyncadd [#allocation9], %s543
          %s546 = sshll.u32 [#allocation10], 4
          %s547 = int_to_ptr.vmem [resolvable:$true] %s546
          %549 = dma.hbm_to_vmem [thread:$0]  %s7, 16, %s547, [#allocation9]
        $region44: #{tpu_custom_call.1} parent=11 // pred_fallthru
          _
        // Predicated region
        $region45: #{tpu_custom_call.1} parent=11 // pred_check
          %p550 = pneg %p242
        $region46: #{tpu_custom_call.1} parent=11 // pred_check_branch
          %552 = sbr.rel (%p550) target = $region48
        $region47: #{tpu_custom_call.1} parent=11 // pred_region
          %s554 = ssub.s32 4096, 4096
          %555 = vsyncadd [#allocation12], %s554
          %s556 = sshll.u32 [#allocation11], 4
          %s557 = int_to_ptr.vmem [resolvable:$true] %s556
          %562 = dma.hbm_to_vmem [thread:$0]  %s8, 4096, %s557, [#allocation12], 128, 128, 8
        $region48: #{tpu_custom_call.1} parent=11 // pred_fallthru
          _
        // Predicated region
        $region49: #{tpu_custom_call.1} parent=11 // pred_check
          %p563 = pneg %p263
        $region50: #{tpu_custom_call.1} parent=11 // pred_check_branch
          %565 = sbr.rel (%p563) target = $region52
        $region51: #{tpu_custom_call.1} parent=11 // pred_region
          %s567 = ssub.s32 4096, 4096
          %568 = vsyncadd [#allocation12], %s567
          %s569 = sshll.u32 [#allocation13], 4
          %s570 = int_to_ptr.vmem [resolvable:$true] %s569
          %575 = dma.hbm_to_vmem [thread:$0]  %s9, 4096, %s570, [#allocation12], 128, 128, 8
        $region52: #{tpu_custom_call.1} parent=11 // pred_fallthru
          _
        // Predicated region
        $region53: #{tpu_custom_call.1} parent=11 // pred_check
          %p576 = pneg %p284
        $region54: #{tpu_custom_call.1} parent=11 // pred_check_branch
          %578 = sbr.rel (%p576) target = $region56
        $region55: #{tpu_custom_call.1} parent=11 // pred_region
          %s580 = ssub.s32 64, 64
          %581 = vsyncadd [#allocation15], %s580
          %s582 = sshll.u32 [#allocation14], 4
          %s583 = int_to_ptr.vmem [resolvable:$true] %s582
          %588 = dma.hbm_to_vmem [thread:$0]  %s10, 64, %s583, [#allocation15], 16, 16, 1
        $region56: #{tpu_custom_call.1} parent=11 // pred_fallthru
          _
        // Predicated region
        $region57: #{tpu_custom_call.1} parent=11 // pred_check
          %p589 = pneg %p305
        $region58: #{tpu_custom_call.1} parent=11 // pred_check_branch
          %591 = sbr.rel (%p589) target = $region60
        $region59: #{tpu_custom_call.1} parent=11 // pred_region
          %s593 = ssub.s32 64, 64
          %594 = vsyncadd [#allocation15], %s593
          %s595 = sshll.u32 [#allocation16], 4
          %s596 = int_to_ptr.vmem [resolvable:$true] %s595
          %601 = dma.hbm_to_vmem [thread:$0]  %s11, 64, %s596, [#allocation15], 16, 16, 1
        $region60: #{tpu_custom_call.1} parent=11 // pred_fallthru
          _
        // Predicated region
        $region61: #{tpu_custom_call.1} parent=11 // pred_check
          %p602 = pneg %p326
        $region62: #{tpu_custom_call.1} parent=11 // pred_check_branch
          %604 = sbr.rel (%p602) target = $region64
        $region63: #{tpu_custom_call.1} parent=11 // pred_region
          _
        $region64: #{tpu_custom_call.1} parent=11 // pred_fallthru
          _
        // Predicated region
        $region65: #{tpu_custom_call.1} parent=11 // pred_check
          %p605 = pneg %p347
        $region66: #{tpu_custom_call.1} parent=11 // pred_check_branch
          %607 = sbr.rel (%p605) target = $region68
        $region67: #{tpu_custom_call.1} parent=11 // pred_region
          _
        $region68: #{tpu_custom_call.1} parent=11 // pred_fallthru
          _
        // Predicated region
        $region69: #{tpu_custom_call.1} parent=11 // pred_check
          %p608 = pneg %p368
        $region70: #{tpu_custom_call.1} parent=11 // pred_check_branch
          %610 = sbr.rel (%p608) target = $region72
        $region71: #{tpu_custom_call.1} parent=11 // pred_region
          _
        $region72: #{tpu_custom_call.1} parent=11 // pred_fallthru
          _
        // Predicated region
        $region73: #{tpu_custom_call.1} parent=11 // pred_check
          %p611 = pneg %p389
        $region74: #{tpu_custom_call.1} parent=11 // pred_check_branch
          %613 = sbr.rel (%p611) target = $region76
        $region75: #{tpu_custom_call.1} parent=11 // pred_region
          _
        $region76: #{tpu_custom_call.1} parent=11 // pred_fallthru
          _
        // Predicated region
        $region77: #{tpu_custom_call.1} parent=11 // pred_check
          %p614 = pneg %p410
        $region78: #{tpu_custom_call.1} parent=11 // pred_check_branch
          %616 = sbr.rel (%p614) target = $region80
        $region79: #{tpu_custom_call.1} parent=11 // pred_region
          _
        $region80: #{tpu_custom_call.1} parent=11 // pred_fallthru
          _
        // Predicated region
        $region81: #{tpu_custom_call.1} parent=11 // pred_check
          %p617 = pneg %p431
        $region82: #{tpu_custom_call.1} parent=11 // pred_check_branch
          %619 = sbr.rel (%p617) target = $region84
        $region83: #{tpu_custom_call.1} parent=11 // pred_region
          %s621 = ssub.s32 512, 512
          %622 = vsyncadd [#allocation18], %s621
          %s623 = sshll.u32 [#allocation17], 4
          %s624 = int_to_ptr.vmem [resolvable:$true] %s623
          %629 = dma.hbm_to_vmem [thread:$0]  %s17, 512, %s624, [#allocation18], 128, 128, 8
        $region84: #{tpu_custom_call.1} parent=11 // pred_fallthru
          _
        // Predicated region
        $region85: #{tpu_custom_call.1} parent=11 // pred_check
          %p630 = pneg %p452
        $region86: #{tpu_custom_call.1} parent=11 // pred_check_branch
          %632 = sbr.rel (%p630) target = $region88
        $region87: #{tpu_custom_call.1} parent=11 // pred_region
          _
        $region88: #{tpu_custom_call.1} parent=11 // pred_fallthru
          _
      $region12: #{tpu_custom_call.1} parent=5 // pred_fallthru
        _
      %p633 = scmp.lt.s32.totalorder %s31, 4
      // Predicated region
      $region89: #{tpu_custom_call.1} parent=5 // pred_check
        %p634 = pneg %p633
      $region90: #{tpu_custom_call.1} parent=5 // pred_check_branch
        %636 = sbr.rel (%p634) target = $region92
      $region91: #{tpu_custom_call.1} parent=5 // pred_region
        _
      $region92: #{tpu_custom_call.1} parent=5 // pred_fallthru
        _
      %p637 = scmp.le.s32.totalorder 1, %s31
      %p638 = scmp.lt.s32.totalorder %s31, 5
      %p639 = pnand %p637, %p638
      %p640 = pneg %p639
      // Predicated region
      $region93: #{tpu_custom_call.1} parent=5 // pred_check
        _
      $region94: #{tpu_custom_call.1} parent=5 // pred_check_branch
        %642 = sbr.rel (%p639) target = $region96
      $region95: #{tpu_custom_call.1} parent=5 // pred_region
        %s643 = ssub.s32 %s31, 1
        // Predicated region
        $region97: #{tpu_custom_call.1} parent=95 // pred_check
          %p644 = pneg %p116
        $region98: #{tpu_custom_call.1} parent=95 // pred_check_branch
          %646 = sbr.rel (%p644) target = $region100
        $region99: #{tpu_custom_call.1} parent=95 // pred_region
          %647 = dma.done [#allocation6], 2048
        $region100: #{tpu_custom_call.1} parent=95 // pred_fallthru
          _
        // Predicated region
        $region101: #{tpu_custom_call.1} parent=95 // pred_check
          %p648 = pneg %p158
        $region102: #{tpu_custom_call.1} parent=95 // pred_check_branch
          %650 = sbr.rel (%p648) target = $region104
        $region103: #{tpu_custom_call.1} parent=95 // pred_region
          %651 = dma.done [#allocation9], 256
        $region104: #{tpu_custom_call.1} parent=95 // pred_fallthru
          _
        // Predicated region
        $region105: #{tpu_custom_call.1} parent=95 // pred_check
          %p652 = pneg %p221
        $region106: #{tpu_custom_call.1} parent=95 // pred_check_branch
          %654 = sbr.rel (%p652) target = $region108
        $region107: #{tpu_custom_call.1} parent=95 // pred_region
          %655 = dma.done [#allocation9], 16
        $region108: #{tpu_custom_call.1} parent=95 // pred_fallthru
          _
        // Predicated region
        $region109: #{tpu_custom_call.1} parent=95 // pred_check
          %p656 = pneg %p242
        $region110: #{tpu_custom_call.1} parent=95 // pred_check_branch
          %658 = sbr.rel (%p656) target = $region112
        $region111: #{tpu_custom_call.1} parent=95 // pred_region
          %659 = dma.done [#allocation12], 4096
        $region112: #{tpu_custom_call.1} parent=95 // pred_fallthru
          _
        // Predicated region
        $region113: #{tpu_custom_call.1} parent=95 // pred_check
          %p660 = pneg %p263
        $region114: #{tpu_custom_call.1} parent=95 // pred_check_branch
          %662 = sbr.rel (%p660) target = $region116
        $region115: #{tpu_custom_call.1} parent=95 // pred_region
          %663 = dma.done [#allocation12], 4096
        $region116: #{tpu_custom_call.1} parent=95 // pred_fallthru
          _
        // Predicated region
        $region117: #{tpu_custom_call.1} parent=95 // pred_check
          %p664 = pneg %p284
        $region118: #{tpu_custom_call.1} parent=95 // pred_check_branch
          %666 = sbr.rel (%p664) target = $region120
        $region119: #{tpu_custom_call.1} parent=95 // pred_region
          %667 = dma.done [#allocation15], 64
        $region120: #{tpu_custom_call.1} parent=95 // pred_fallthru
          _
        // Predicated region
        $region121: #{tpu_custom_call.1} parent=95 // pred_check
          %p668 = pneg %p305
        $region122: #{tpu_custom_call.1} parent=95 // pred_check_branch
          %670 = sbr.rel (%p668) target = $region124
        $region123: #{tpu_custom_call.1} parent=95 // pred_region
          %671 = dma.done [#allocation15], 64
        $region124: #{tpu_custom_call.1} parent=95 // pred_fallthru
          _
        // Predicated region
        $region125: #{tpu_custom_call.1} parent=95 // pred_check
          %p672 = pneg %p431
        $region126: #{tpu_custom_call.1} parent=95 // pred_check_branch
          %674 = sbr.rel (%p672) target = $region128
        $region127: #{tpu_custom_call.1} parent=95 // pred_region
          %675 = dma.done [#allocation18], 512
        $region128: #{tpu_custom_call.1} parent=95 // pred_fallthru
          _
        %p676 = pneg %p64
        %p677 = pneg %p61
        %s678 = smul.u32 32, %s41
        %p679 = scmp.lt.s32.totalorder %s678, 31
        %s680 = scalar_select %p679, %s678, 31
        %s681 = smul.addr %s680, 2
        %s682 = smul.addr %s681, 4
        %s683 = scalar_lea.vmem %s1, %s682
        %p684 = pneg %p90
        %p685 = pneg %p87
        %p686 = pneg %p116
        %p687 = pneg %p113
        %p688 = pneg %p137
        %p689 = pneg %p134
        %p690 = pneg %p158
        %p691 = pneg %p155
        %p692 = pneg %p179
        %p693 = pneg %p176
        %p694 = pneg %p200
        %p695 = pneg %p197
        %p696 = pneg %p221
        %p697 = pneg %p218
        %p698 = pneg %p242
        %p699 = pneg %p239
        %p700 = pneg %p263
        %p701 = pneg %p260
        %p702 = pneg %p284
        %p703 = pneg %p281
        %p704 = pneg %p305
        %p705 = pneg %p302
        %p706 = pneg %p326
        %p707 = pneg %p323
        %p708 = pneg %p347
        %p709 = pneg %p344
        %p710 = pneg %p368
        %p711 = pneg %p365
        %p712 = pneg %p389
        %p713 = pneg %p386
        %p714 = pneg %p410
        %p715 = pneg %p407
        %p716 = pneg %p431
        %p717 = pneg %p428
        %p718 = pneg %p452
        %p719 = pneg %p449
        %p720 = pneg %p473
        %p721 = pneg %p470
        %s722 = smul.u32 32, %s41
        %p723 = scmp.lt.s32.totalorder %s722, 31
        %s724 = scalar_select %p723, %s722, 31
        %s725 = smul.addr %s724, 2
        %s726 = smul.addr %s725, 4
        %s727 = scalar_lea.vmem %s1, %s726
        %s728 = smul.u32 32, %s41
        %s729 = smul.u32 2, %s41
        %p731 = scmp.eq.s32.totalorder %s40, 0
        %p732 = scmp.eq.s32.totalorder %s41, 0
        %p733 = pnand %p731, %p732
        %p734 = pneg %p733
        // Predicated region
        $region129: #{tpu_custom_call.1} parent=95 // pred_check
          _
        $region130: #{tpu_custom_call.1} parent=95 // pred_check_branch
          %736 = sbr.rel (%p733) target = $region132
        $region131: #{tpu_custom_call.1} parent=95 // pred_region
          %v737 = vld [vmem:[%s0] sm:$0xff]
          %v738 = vld [vmem:[%s0 + $0x8] sm:$0xff]
          %v739 = vld [vmem:[%s0 + $0x10] sm:$0xff]
          %v740 = vld [vmem:[%s0 + $0x18] sm:$0xff]
          %v741 = vld [vmem:[%s0 + $0x20] sm:$0xff]
          %v742 = vld [vmem:[%s0 + $0x28] sm:$0xff]
          %v743 = vld [vmem:[%s0 + $0x30] sm:$0xff]
          %v744 = vld [vmem:[%s0 + $0x38] sm:$0xff]
          %v745 = vld [vmem:[%s0 + $0x40] sm:$0xff]
          %v746 = vld [vmem:[%s0 + $0x48] sm:$0xff]
          %v747 = vld [vmem:[%s0 + $0x50] sm:$0xff]
          %v748 = vld [vmem:[%s0 + $0x58] sm:$0xff]
          %v749 = vld [vmem:[%s0 + $0x60] sm:$0xff]
          %v750 = vld [vmem:[%s0 + $0x68] sm:$0xff]
          %v751 = vld [vmem:[%s0 + $0x70] sm:$0xff]
          %v752 = vld [vmem:[%s0 + $0x78] sm:$0xff]
          %v753 = vld [vmem:[#allocation8] sm:$0xff]
          %v754 = vld [vmem:[#allocation8 + $0x8] sm:$0xff]
          %v755 = vld [vmem:[%s5] sm:$0x1]
          %v757 = vlaneseq
          %v758 = vshrl.u32 %v757, 7
          %v759 = vsub.s32 0, %v758
          %v760 = vrot.slane %v755, %v759
          %vm762 = vcmask 130048
          %v764 = vsel %vm762, %v737, 0
          %v767 = vsel %vm762, %v738, 0
          %v770 = vsel %vm762, %v739, 0
          %v773 = vsel %vm762, %v740, 0
          %v776 = vsel %vm762, %v741, 0
          %v779 = vsel %vm762, %v742, 0
          %v782 = vsel %vm762, %v743, 0
          %v785 = vsel %vm762, %v744, 0
          %v788 = vsel %vm762, %v745, 0
          %v791 = vsel %vm762, %v746, 0
          %v794 = vsel %vm762, %v747, 0
          %v797 = vsel %vm762, %v748, 0
          %v800 = vsel %vm762, %v749, 0
          %v803 = vsel %vm762, %v750, 0
          %v806 = vsel %vm762, %v751, 0
          %v809 = vsel %vm762, %v752, 0
          %811 = vmatprep.subr.mxu0 0.0
          %812 = vmatpush1.msra.mxu0 0.0
          %813 = vmatprep.subr.mxu0 0.0
          %814 = vmatpush1.msra.mxu0 0.0
          %815 = vmatprep.subr.mxu0 0.0
          %816 = vmatpush1.msra.mxu0 0.0
          %817 = vmatprep.subr.mxu0 0.0
          %818 = vmatpush1.msra.mxu0 0.0
          %819 = vmatprep.subr.mxu0 0.0
          %820 = vmatpush1.msra.mxu0 0.0
          %821 = vmatprep.subr.mxu0 0.0
          %822 = vmatpush1.msra.mxu0 0.0
          %823 = vmatprep.subr.mxu0 0.0
          %824 = vmatpush1.msra.mxu0 0.0
          %825 = vmatprep.subr.mxu0 0.0
          %826 = vmatpush1.msra.mxu0 0.0
          %827 = vmatprep.subr.mxu0 0.0
          %828 = vmatpush1.msra.mxu0 0.0
          %829 = vmatprep.subr.mxu0 0.0
          %830 = vmatpush1.msra.mxu0 0.0
          %831 = vmatprep.subr.mxu0 0.0
          %832 = vmatpush1.msra.mxu0 0.0
          %833 = vmatprep.subr.mxu0 0.0
          %834 = vmatpush1.msra.mxu0 0.0
          %835 = vmatprep.subr.mxu0 0.0
          %836 = vmatpush1.msra.mxu0 0.0
          %837 = vmatprep.subr.mxu0 0.0
          %838 = vmatpush1.msra.mxu0 0.0
          %839 = vmatprep.subr.mxu0 0.0
          %840 = vmatpush1.msra.mxu0 %v754
          %841 = vmatprep.subr.mxu0 0.0
          %842 = vmatpush1.msra.mxu0 %v753
          %843 = vmatprep.subr.mxu0 0.0
          %844 = vmatpush2.msra.mxu0 0.0
          %845 = vmatprep.subr.mxu0 0.0
          %846 = vmatpush2.msra.mxu0 0.0
          %847 = vmatprep.subr.mxu0 0.0
          %848 = vmatpush2.msra.mxu0 0.0
          %849 = vmatprep.subr.mxu0 0.0
          %850 = vmatpush2.msra.mxu0 0.0
          %851 = vmatprep.subr.mxu0 0.0
          %852 = vmatpush2.msra.mxu0 0.0
          %853 = vmatprep.subr.mxu0 0.0
          %854 = vmatpush2.msra.mxu0 0.0
          %855 = vmatprep.subr.mxu0 0.0
          %856 = vmatpush2.msra.mxu0 0.0
          %857 = vmatprep.subr.mxu0 0.0
          %858 = vmatpush2.msra.mxu0 0.0
          %859 = vmatprep.subr.mxu0 0.0
          %860 = vmatpush2.msra.mxu0 0.0
          %861 = vmatprep.subr.mxu0 0.0
          %862 = vmatpush2.msra.mxu0 0.0
          %863 = vmatprep.subr.mxu0 0.0
          %864 = vmatpush2.msra.mxu0 0.0
          %865 = vmatprep.subr.mxu0 0.0
          %866 = vmatpush2.msra.mxu0 0.0
          %867 = vmatprep.subr.mxu0 0.0
          %868 = vmatpush2.msra.mxu0 0.0
          %869 = vmatprep.subr.mxu0 0.0
          %870 = vmatpush2.msra.mxu0 0.0
          %871 = vmatprep.subr.mxu0 0.0
          %872 = vmatpush2.msra.mxu0 0.0
          %873 = vmatprep.subr.mxu0 0.0
          %874 = vmatpush2.msra.mxu0 0.0
          %875 = vmatprep.mubr.f32.mxu0 0.0
          %876 = vmatmul.mubr.f32.gmra.mxu0 %v764
          %v877 = vpop.f32.mrf.mxu0
          %v878 = vadd.f32 %v760, %v877
          %v879 = vpop.f32.mrf.mxu0
          %880 = vmatprep.mubr.f32.mxu0 0.0
          %881 = vmatmul.mubr.f32.gmra.mxu0 %v767
          %v882 = vpop.f32.mrf.mxu0
          %v883 = vadd.f32 %v760, %v882
          %v884 = vpop.f32.mrf.mxu0
          %885 = vmatprep.mubr.f32.mxu0 0.0
          %886 = vmatmul.mubr.f32.gmra.mxu0 %v770
          %v887 = vpop.f32.mrf.mxu0
          %v888 = vadd.f32 %v760, %v887
          %v889 = vpop.f32.mrf.mxu0
          %890 = vmatprep.mubr.f32.mxu0 0.0
          %891 = vmatmul.mubr.f32.gmra.mxu0 %v773
          %v892 = vpop.f32.mrf.mxu0
          %v893 = vadd.f32 %v760, %v892
          %v894 = vpop.f32.mrf.mxu0
          %895 = vmatprep.mubr.f32.mxu0 0.0
          %896 = vmatmul.mubr.f32.gmra.mxu0 %v776
          %v897 = vpop.f32.mrf.mxu0
          %v898 = vadd.f32 %v760, %v897
          %v899 = vpop.f32.mrf.mxu0
          %900 = vmatprep.mubr.f32.mxu0 0.0
          %901 = vmatmul.mubr.f32.gmra.mxu0 %v779
          %v902 = vpop.f32.mrf.mxu0
          %v903 = vadd.f32 %v760, %v902
          %v904 = vpop.f32.mrf.mxu0
          %905 = vmatprep.mubr.f32.mxu0 0.0
          %906 = vmatmul.mubr.f32.gmra.mxu0 %v782
          %v907 = vpop.f32.mrf.mxu0
          %v908 = vadd.f32 %v760, %v907
          %v909 = vpop.f32.mrf.mxu0
          %910 = vmatprep.mubr.f32.mxu0 0.0
          %911 = vmatmul.mubr.f32.gmra.mxu0 %v785
          %v912 = vpop.f32.mrf.mxu0
          %v913 = vadd.f32 %v760, %v912
          %v914 = vpop.f32.mrf.mxu0
          %915 = vmatprep.mubr.f32.mxu0 0.0
          %916 = vmatmul.mubr.f32.gmra.mxu0 %v788
          %v917 = vpop.f32.mrf.mxu0
          %v918 = vadd.f32 %v760, %v917
          %v919 = vpop.f32.mrf.mxu0
          %920 = vmatprep.mubr.f32.mxu0 0.0
          %921 = vmatmul.mubr.f32.gmra.mxu0 %v791
          %v922 = vpop.f32.mrf.mxu0
          %v923 = vadd.f32 %v760, %v922
          %v924 = vpop.f32.mrf.mxu0
          %925 = vmatprep.mubr.f32.mxu0 0.0
          %926 = vmatmul.mubr.f32.gmra.mxu0 %v794
          %v927 = vpop.f32.mrf.mxu0
          %v928 = vadd.f32 %v760, %v927
          %v929 = vpop.f32.mrf.mxu0
          %930 = vmatprep.mubr.f32.mxu0 0.0
          %931 = vmatmul.mubr.f32.gmra.mxu0 %v797
          %v932 = vpop.f32.mrf.mxu0
          %v933 = vadd.f32 %v760, %v932
          %v934 = vpop.f32.mrf.mxu0
          %935 = vmatprep.mubr.f32.mxu0 0.0
          %936 = vmatmul.mubr.f32.gmra.mxu0 %v800
          %v937 = vpop.f32.mrf.mxu0
          %v938 = vadd.f32 %v760, %v937
          %v939 = vpop.f32.mrf.mxu0
          %940 = vmatprep.mubr.f32.mxu0 0.0
          %941 = vmatmul.mubr.f32.gmra.mxu0 %v803
          %v942 = vpop.f32.mrf.mxu0
          %v943 = vadd.f32 %v760, %v942
          %v944 = vpop.f32.mrf.mxu0
          %945 = vmatprep.mubr.f32.mxu0 0.0
          %946 = vmatmul.mubr.f32.gmra.mxu0 %v806
          %v947 = vpop.f32.mrf.mxu0
          %v948 = vadd.f32 %v760, %v947
          %v949 = vpop.f32.mrf.mxu0
          %950 = vmatprep.mubr.f32.mxu0 0.0
          %951 = vmatmul.mubr.f32.gmra.mxu0 %v809
          %v952 = vpop.f32.mrf.mxu0
          %v953 = vadd.f32 %v760, %v952
          %v954 = vpop.f32.mrf.mxu0
          %955 = vdwg.mxu0
          %v956 = vmax.f32 %v878, 0.0
          %v957 = vmax.f32 %v883, 0.0
          %v958 = vmax.f32 %v888, 0.0
          %v959 = vmax.f32 %v893, 0.0
          %v960 = vmax.f32 %v898, 0.0
          %v961 = vmax.f32 %v903, 0.0
          %v962 = vmax.f32 %v908, 0.0
          %v963 = vmax.f32 %v913, 0.0
          %v964 = vmax.f32 %v918, 0.0
          %v965 = vmax.f32 %v923, 0.0
          %v966 = vmax.f32 %v928, 0.0
          %v967 = vmax.f32 %v933, 0.0
          %v968 = vmax.f32 %v938, 0.0
          %v969 = vmax.f32 %v943, 0.0
          %v970 = vmax.f32 %v948, 0.0
          %v971 = vmax.f32 %v953, 0.0
          %v972 = vld [vmem:[%s6] sm:$0xff]
          %v973 = vld [vmem:[%s6 + $0x8] sm:$0xff]
          %v974 = vld [vmem:[%s6 + $0x10] sm:$0xff]
          %v975 = vld [vmem:[%s6 + $0x18] sm:$0xff]
          %v976 = vld [vmem:[%s6 + $0x20] sm:$0xff]
          %v977 = vld [vmem:[%s6 + $0x28] sm:$0xff]
          %v978 = vld [vmem:[%s6 + $0x30] sm:$0xff]
          %v979 = vld [vmem:[%s6 + $0x38] sm:$0xff]
          %v980 = vld [vmem:[#allocation10] sm:$0x1]
          %v982 = vlaneseq
          %v983 = vshrl.u32 %v982, 7
          %v984 = vsub.s32 0, %v983
          %v985 = vrot.slane %v980, %v984
          %vm987 = vcmask 523264
          %v989 = vsel %vm987, %v956, 0
          %v992 = vsel %vm987, %v957, 0
          %v995 = vsel %vm987, %v958, 0
          %v998 = vsel %vm987, %v959, 0
          %v1001 = vsel %vm987, %v960, 0
          %v1004 = vsel %vm987, %v961, 0
          %v1007 = vsel %vm987, %v962, 0
          %v1010 = vsel %vm987, %v963, 0
          %v1013 = vsel %vm987, %v964, 0
          %v1016 = vsel %vm987, %v965, 0
          %v1019 = vsel %vm987, %v966, 0
          %v1022 = vsel %vm987, %v967, 0
          %v1025 = vsel %vm987, %v968, 0
          %v1028 = vsel %vm987, %v969, 0
          %v1031 = vsel %vm987, %v970, 0
          %v1034 = vsel %vm987, %v971, 0
          %1036 = vmatprep.subr.mxu0 0.0
          %1037 = vmatpush1.msra.mxu0 0.0
          %1038 = vmatprep.subr.mxu0 0.0
          %1039 = vmatpush1.msra.mxu0 0.0
          %1040 = vmatprep.subr.mxu0 0.0
          %1041 = vmatpush1.msra.mxu0 0.0
          %1042 = vmatprep.subr.mxu0 0.0
          %1043 = vmatpush1.msra.mxu0 0.0
          %1044 = vmatprep.subr.mxu0 0.0
          %1045 = vmatpush1.msra.mxu0 0.0
          %1046 = vmatprep.subr.mxu0 0.0
          %1047 = vmatpush1.msra.mxu0 0.0
          %1048 = vmatprep.subr.mxu0 0.0
          %1049 = vmatpush1.msra.mxu0 0.0
          %1050 = vmatprep.subr.mxu0 0.0
          %1051 = vmatpush1.msra.mxu0 0.0
          %1052 = vmatprep.subr.mxu0 0.0
          %1053 = vmatpush1.msra.mxu0 %v979
          %1054 = vmatprep.subr.mxu0 0.0
          %1055 = vmatpush1.msra.mxu0 %v978
          %1056 = vmatprep.subr.mxu0 0.0
          %1057 = vmatpush1.msra.mxu0 %v977
          %1058 = vmatprep.subr.mxu0 0.0
          %1059 = vmatpush1.msra.mxu0 %v976
          %1060 = vmatprep.subr.mxu0 0.0
          %1061 = vmatpush1.msra.mxu0 %v975
          %1062 = vmatprep.subr.mxu0 0.0
          %1063 = vmatpush1.msra.mxu0 %v974
          %1064 = vmatprep.subr.mxu0 0.0
          %1065 = vmatpush1.msra.mxu0 %v973
          %1066 = vmatprep.subr.mxu0 0.0
          %1067 = vmatpush1.msra.mxu0 %v972
          %1068 = vmatprep.subr.mxu0 0.0
          %1069 = vmatpush2.msra.mxu0 0.0
          %1070 = vmatprep.subr.mxu0 0.0
          %1071 = vmatpush2.msra.mxu0 0.0
          %1072 = vmatprep.subr.mxu0 0.0
          %1073 = vmatpush2.msra.mxu0 0.0
          %1074 = vmatprep.subr.mxu0 0.0
          %1075 = vmatpush2.msra.mxu0 0.0
          %1076 = vmatprep.subr.mxu0 0.0
          %1077 = vmatpush2.msra.mxu0 0.0
          %1078 = vmatprep.subr.mxu0 0.0
          %1079 = vmatpush2.msra.mxu0 0.0
          %1080 = vmatprep.subr.mxu0 0.0
          %1081 = vmatpush2.msra.mxu0 0.0
          %1082 = vmatprep.subr.mxu0 0.0
          %1083 = vmatpush2.msra.mxu0 0.0
          %1084 = vmatprep.subr.mxu0 0.0
          %1085 = vmatpush2.msra.mxu0 0.0
          %1086 = vmatprep.subr.mxu0 0.0
          %1087 = vmatpush2.msra.mxu0 0.0
          %1088 = vmatprep.subr.mxu0 0.0
          %1089 = vmatpush2.msra.mxu0 0.0
          %1090 = vmatprep.subr.mxu0 0.0
          %1091 = vmatpush2.msra.mxu0 0.0
          %1092 = vmatprep.subr.mxu0 0.0
          %1093 = vmatpush2.msra.mxu0 0.0
          %1094 = vmatprep.subr.mxu0 0.0
          %1095 = vmatpush2.msra.mxu0 0.0
          %1096 = vmatprep.subr.mxu0 0.0
          %1097 = vmatpush2.msra.mxu0 0.0
          %1098 = vmatprep.subr.mxu0 0.0
          %1099 = vmatpush2.msra.mxu0 0.0
          %1100 = vmatprep.mubr.f32.mxu0 0.0
          %1101 = vmatmul.mubr.f32.gmra.mxu0 %v989
          %v1102 = vpop.f32.mrf.mxu0
          %v1103 = vadd.f32 %v985, %v1102
          %v1104 = vpop.f32.mrf.mxu0
          %1105 = vmatprep.mubr.f32.mxu0 0.0
          %1106 = vmatmul.mubr.f32.gmra.mxu0 %v992
          %v1107 = vpop.f32.mrf.mxu0
          %v1108 = vadd.f32 %v985, %v1107
          %v1109 = vpop.f32.mrf.mxu0
          %1110 = vmatprep.mubr.f32.mxu0 0.0
          %1111 = vmatmul.mubr.f32.gmra.mxu0 %v995
          %v1112 = vpop.f32.mrf.mxu0
          %v1113 = vadd.f32 %v985, %v1112
          %v1114 = vpop.f32.mrf.mxu0
          %1115 = vmatprep.mubr.f32.mxu0 0.0
          %1116 = vmatmul.mubr.f32.gmra.mxu0 %v998
          %v1117 = vpop.f32.mrf.mxu0
          %v1118 = vadd.f32 %v985, %v1117
          %v1119 = vpop.f32.mrf.mxu0
          %1120 = vmatprep.mubr.f32.mxu0 0.0
          %1121 = vmatmul.mubr.f32.gmra.mxu0 %v1001
          %v1122 = vpop.f32.mrf.mxu0
          %v1123 = vadd.f32 %v985, %v1122
          %v1124 = vpop.f32.mrf.mxu0
          %1125 = vmatprep.mubr.f32.mxu0 0.0
          %1126 = vmatmul.mubr.f32.gmra.mxu0 %v1004
          %v1127 = vpop.f32.mrf.mxu0
          %v1128 = vadd.f32 %v985, %v1127
          %v1129 = vpop.f32.mrf.mxu0
          %1130 = vmatprep.mubr.f32.mxu0 0.0
          %1131 = vmatmul.mubr.f32.gmra.mxu0 %v1007
          %v1132 = vpop.f32.mrf.mxu0
          %v1133 = vadd.f32 %v985, %v1132
          %v1134 = vpop.f32.mrf.mxu0
          %1135 = vmatprep.mubr.f32.mxu0 0.0
          %1136 = vmatmul.mubr.f32.gmra.mxu0 %v1010
          %v1137 = vpop.f32.mrf.mxu0
          %v1138 = vadd.f32 %v985, %v1137
          %v1139 = vpop.f32.mrf.mxu0
          %1140 = vmatprep.mubr.f32.mxu0 0.0
          %1141 = vmatmul.mubr.f32.gmra.mxu0 %v1013
          %v1142 = vpop.f32.mrf.mxu0
          %v1143 = vadd.f32 %v985, %v1142
          %v1144 = vpop.f32.mrf.mxu0
          %1145 = vmatprep.mubr.f32.mxu0 0.0
          %1146 = vmatmul.mubr.f32.gmra.mxu0 %v1016
          %v1147 = vpop.f32.mrf.mxu0
          %v1148 = vadd.f32 %v985, %v1147
          %v1149 = vpop.f32.mrf.mxu0
          %1150 = vmatprep.mubr.f32.mxu0 0.0
          %1151 = vmatmul.mubr.f32.gmra.mxu0 %v1019
          %v1152 = vpop.f32.mrf.mxu0
          %v1153 = vadd.f32 %v985, %v1152
          %v1154 = vpop.f32.mrf.mxu0
          %1155 = vmatprep.mubr.f32.mxu0 0.0
          %1156 = vmatmul.mubr.f32.gmra.mxu0 %v1022
          %v1157 = vpop.f32.mrf.mxu0
          %v1158 = vadd.f32 %v985, %v1157
          %v1159 = vpop.f32.mrf.mxu0
          %1160 = vmatprep.mubr.f32.mxu0 0.0
          %1161 = vmatmul.mubr.f32.gmra.mxu0 %v1025
          %v1162 = vpop.f32.mrf.mxu0
          %v1163 = vadd.f32 %v985, %v1162
          %v1164 = vpop.f32.mrf.mxu0
          %1165 = vmatprep.mubr.f32.mxu0 0.0
          %1166 = vmatmul.mubr.f32.gmra.mxu0 %v1028
          %v1167 = vpop.f32.mrf.mxu0
          %v1168 = vadd.f32 %v985, %v1167
          %v1169 = vpop.f32.mrf.mxu0
          %1170 = vmatprep.mubr.f32.mxu0 0.0
          %1171 = vmatmul.mubr.f32.gmra.mxu0 %v1031
          %v1172 = vpop.f32.mrf.mxu0
          %v1173 = vadd.f32 %v985, %v1172
          %v1174 = vpop.f32.mrf.mxu0
          %1175 = vmatprep.mubr.f32.mxu0 0.0
          %1176 = vmatmul.mubr.f32.gmra.mxu0 %v1034
          %v1177 = vpop.f32.mrf.mxu0
          %v1178 = vadd.f32 %v985, %v1177
          %v1179 = vpop.f32.mrf.mxu0
          %1180 = vdwg.mxu0
          %v1181 = vmax.f32 %v1103, 0.0
          %v1182 = vmax.f32 %v1108, 0.0
          %v1183 = vmax.f32 %v1113, 0.0
          %v1184 = vmax.f32 %v1118, 0.0
          %v1185 = vmax.f32 %v1123, 0.0
          %v1186 = vmax.f32 %v1128, 0.0
          %v1187 = vmax.f32 %v1133, 0.0
          %v1188 = vmax.f32 %v1138, 0.0
          %v1189 = vmax.f32 %v1143, 0.0
          %v1190 = vmax.f32 %v1148, 0.0
          %v1191 = vmax.f32 %v1153, 0.0
          %v1192 = vmax.f32 %v1158, 0.0
          %v1193 = vmax.f32 %v1163, 0.0
          %v1194 = vmax.f32 %v1168, 0.0
          %v1195 = vmax.f32 %v1173, 0.0
          %v1196 = vmax.f32 %v1178, 0.0
          %1197 = vst.msk [vmem:[#allocation2] sm:$0xff] %vm987, %v1181
          %1198 = vst.msk [vmem:[#allocation2 + $0x8] sm:$0xff] %vm987, %v1182
          %1199 = vst.msk [vmem:[#allocation2 + $0x10] sm:$0xff] %vm987, %v1183
          %1200 = vst.msk [vmem:[#allocation2 + $0x18] sm:$0xff] %vm987, %v1184
          %1201 = vst.msk [vmem:[#allocation2 + $0x20] sm:$0xff] %vm987, %v1185
          %1202 = vst.msk [vmem:[#allocation2 + $0x28] sm:$0xff] %vm987, %v1186
          %1203 = vst.msk [vmem:[#allocation2 + $0x30] sm:$0xff] %vm987, %v1187
          %1204 = vst.msk [vmem:[#allocation2 + $0x38] sm:$0xff] %vm987, %v1188
          %1205 = vst.msk [vmem:[#allocation2 + $0x40] sm:$0xff] %vm987, %v1189
          %1206 = vst.msk [vmem:[#allocation2 + $0x48] sm:$0xff] %vm987, %v1190
          %1207 = vst.msk [vmem:[#allocation2 + $0x50] sm:$0xff] %vm987, %v1191
          %1208 = vst.msk [vmem:[#allocation2 + $0x58] sm:$0xff] %vm987, %v1192
          %1209 = vst.msk [vmem:[#allocation2 + $0x60] sm:$0xff] %vm987, %v1193
          %1210 = vst.msk [vmem:[#allocation2 + $0x68] sm:$0xff] %vm987, %v1194
          %1211 = vst.msk [vmem:[#allocation2 + $0x70] sm:$0xff] %vm987, %v1195
          %1212 = vst.msk [vmem:[#allocation2 + $0x78] sm:$0xff] %vm987, %v1196
        $region132: #{tpu_custom_call.1} parent=95 // pred_fallthru
          _
        // Predicated region
        $region133: #{tpu_custom_call.1} parent=95 // pred_check
          %p1213 = pneg %p732
        $region134: #{tpu_custom_call.1} parent=95 // pred_check_branch
          %1215 = sbr.rel (%p1213) target = $region136
        $region135: #{tpu_custom_call.1} parent=95 // pred_region
          %v1216 = vld [vmem:[#allocation2] sm:$0xff]
          %v1217 = vld [vmem:[#allocation2 + $0x8] sm:$0xff]
          %v1218 = vld [vmem:[#allocation2 + $0x10] sm:$0xff]
          %v1219 = vld [vmem:[#allocation2 + $0x18] sm:$0xff]
          %v1220 = vld [vmem:[#allocation2 + $0x20] sm:$0xff]
          %v1221 = vld [vmem:[#allocation2 + $0x28] sm:$0xff]
          %v1222 = vld [vmem:[#allocation2 + $0x30] sm:$0xff]
          %v1223 = vld [vmem:[#allocation2 + $0x38] sm:$0xff]
          %v1224 = vld [vmem:[#allocation2 + $0x40] sm:$0xff]
          %v1225 = vld [vmem:[#allocation2 + $0x48] sm:$0xff]
          %v1226 = vld [vmem:[#allocation2 + $0x50] sm:$0xff]
          %v1227 = vld [vmem:[#allocation2 + $0x58] sm:$0xff]
          %v1228 = vld [vmem:[#allocation2 + $0x60] sm:$0xff]
          %v1229 = vld [vmem:[#allocation2 + $0x68] sm:$0xff]
          %v1230 = vld [vmem:[#allocation2 + $0x70] sm:$0xff]
          %v1231 = vld [vmem:[#allocation2 + $0x78] sm:$0xff]
          %s1232 = smul.u32 %s40, 64
          %s1233 = scalar_lea.vmem [#allocation11], %s1232
          %v1234 = vld [vmem:[%s1233] sm:$0xff]
          %v1235 = vld [vmem:[%s1233 + $0x8] sm:$0xff]
          %v1236 = vld [vmem:[%s1233 + $0x10] sm:$0xff]
          %v1237 = vld [vmem:[%s1233 + $0x18] sm:$0xff]
          %v1238 = vld [vmem:[%s1233 + $0x20] sm:$0xff]
          %v1239 = vld [vmem:[%s1233 + $0x28] sm:$0xff]
          %v1240 = vld [vmem:[%s1233 + $0x30] sm:$0xff]
          %v1241 = vld [vmem:[%s1233 + $0x38] sm:$0xff]
          %vm1242 = vcmask 523264
          %v1244 = vsel %vm1242, %v1216, 0
          %v1247 = vsel %vm1242, %v1217, 0
          %v1250 = vsel %vm1242, %v1218, 0
          %v1253 = vsel %vm1242, %v1219, 0
          %v1256 = vsel %vm1242, %v1220, 0
          %v1259 = vsel %vm1242, %v1221, 0
          %v1262 = vsel %vm1242, %v1222, 0
          %v1265 = vsel %vm1242, %v1223, 0
          %v1268 = vsel %vm1242, %v1224, 0
          %v1271 = vsel %vm1242, %v1225, 0
          %v1274 = vsel %vm1242, %v1226, 0
          %v1277 = vsel %vm1242, %v1227, 0
          %v1280 = vsel %vm1242, %v1228, 0
          %v1283 = vsel %vm1242, %v1229, 0
          %v1286 = vsel %vm1242, %v1230, 0
          %v1289 = vsel %vm1242, %v1231, 0
          %1291 = vmatprep.subr.mxu0 0.0
          %1292 = vmatpush1.msra.mxu0 0.0
          %1293 = vmatprep.subr.mxu0 0.0
          %1294 = vmatpush1.msra.mxu0 0.0
          %1295 = vmatprep.subr.mxu0 0.0
          %1296 = vmatpush1.msra.mxu0 0.0
          %1297 = vmatprep.subr.mxu0 0.0
          %1298 = vmatpush1.msra.mxu0 0.0
          %1299 = vmatprep.subr.mxu0 0.0
          %1300 = vmatpush1.msra.mxu0 0.0
          %1301 = vmatprep.subr.mxu0 0.0
          %1302 = vmatpush1.msra.mxu0 0.0
          %1303 = vmatprep.subr.mxu0 0.0
          %1304 = vmatpush1.msra.mxu0 0.0
          %1305 = vmatprep.subr.mxu0 0.0
          %1306 = vmatpush1.msra.mxu0 0.0
          %1307 = vmatprep.subr.mxu0 0.0
          %1308 = vmatpush1.msra.mxu0 %v1241
          %1309 = vmatprep.subr.mxu0 0.0
          %1310 = vmatpush1.msra.mxu0 %v1240
          %1311 = vmatprep.subr.mxu0 0.0
          %1312 = vmatpush1.msra.mxu0 %v1239
          %1313 = vmatprep.subr.mxu0 0.0
          %1314 = vmatpush1.msra.mxu0 %v1238
          %1315 = vmatprep.subr.mxu0 0.0
          %1316 = vmatpush1.msra.mxu0 %v1237
          %1317 = vmatprep.subr.mxu0 0.0
          %1318 = vmatpush1.msra.mxu0 %v1236
          %1319 = vmatprep.subr.mxu0 0.0
          %1320 = vmatpush1.msra.mxu0 %v1235
          %1321 = vmatprep.subr.mxu0 0.0
          %1322 = vmatpush1.msra.mxu0 %v1234
          %1323 = vmatprep.subr.mxu0 0.0
          %1324 = vmatpush2.msra.mxu0 0.0
          %1325 = vmatprep.subr.mxu0 0.0
          %1326 = vmatpush2.msra.mxu0 0.0
          %1327 = vmatprep.subr.mxu0 0.0
          %1328 = vmatpush2.msra.mxu0 0.0
          %1329 = vmatprep.subr.mxu0 0.0
          %1330 = vmatpush2.msra.mxu0 0.0
          %1331 = vmatprep.subr.mxu0 0.0
          %1332 = vmatpush2.msra.mxu0 0.0
          %1333 = vmatprep.subr.mxu0 0.0
          %1334 = vmatpush2.msra.mxu0 0.0
          %1335 = vmatprep.subr.mxu0 0.0
          %1336 = vmatpush2.msra.mxu0 0.0
          %1337 = vmatprep.subr.mxu0 0.0
          %1338 = vmatpush2.msra.mxu0 0.0
          %1339 = vmatprep.subr.mxu0 0.0
          %1340 = vmatpush2.msra.mxu0 0.0
          %1341 = vmatprep.subr.mxu0 0.0
          %1342 = vmatpush2.msra.mxu0 0.0
          %1343 = vmatprep.subr.mxu0 0.0
          %1344 = vmatpush2.msra.mxu0 0.0
          %1345 = vmatprep.subr.mxu0 0.0
          %1346 = vmatpush2.msra.mxu0 0.0
          %1347 = vmatprep.subr.mxu0 0.0
          %1348 = vmatpush2.msra.mxu0 0.0
          %1349 = vmatprep.subr.mxu0 0.0
          %1350 = vmatpush2.msra.mxu0 0.0
          %1351 = vmatprep.subr.mxu0 0.0
          %1352 = vmatpush2.msra.mxu0 0.0
          %1353 = vmatprep.subr.mxu0 0.0
          %1354 = vmatpush2.msra.mxu0 0.0
          %1355 = vmatprep.mubr.f32.mxu0 0.0
          %1356 = vmatmul.mubr.f32.gmra.mxu0 %v1244
          %v1357 = vpop.f32.mrf.mxu0
          %v1358 = vadd.f32 0.0, %v1357
          %v1359 = vpop.f32.mrf.mxu0
          %1360 = vmatprep.mubr.f32.mxu0 0.0
          %1361 = vmatmul.mubr.f32.gmra.mxu0 %v1247
          %v1362 = vpop.f32.mrf.mxu0
          %v1363 = vadd.f32 0.0, %v1362
          %v1364 = vpop.f32.mrf.mxu0
          %1365 = vmatprep.mubr.f32.mxu0 0.0
          %1366 = vmatmul.mubr.f32.gmra.mxu0 %v1250
          %v1367 = vpop.f32.mrf.mxu0
          %v1368 = vadd.f32 0.0, %v1367
          %v1369 = vpop.f32.mrf.mxu0
          %1370 = vmatprep.mubr.f32.mxu0 0.0
          %1371 = vmatmul.mubr.f32.gmra.mxu0 %v1253
          %v1372 = vpop.f32.mrf.mxu0
          %v1373 = vadd.f32 0.0, %v1372
          %v1374 = vpop.f32.mrf.mxu0
          %1375 = vmatprep.mubr.f32.mxu0 0.0
          %1376 = vmatmul.mubr.f32.gmra.mxu0 %v1256
          %v1377 = vpop.f32.mrf.mxu0
          %v1378 = vadd.f32 0.0, %v1377
          %v1379 = vpop.f32.mrf.mxu0
          %1380 = vmatprep.mubr.f32.mxu0 0.0
          %1381 = vmatmul.mubr.f32.gmra.mxu0 %v1259
          %v1382 = vpop.f32.mrf.mxu0
          %v1383 = vadd.f32 0.0, %v1382
          %v1384 = vpop.f32.mrf.mxu0
          %1385 = vmatprep.mubr.f32.mxu0 0.0
          %1386 = vmatmul.mubr.f32.gmra.mxu0 %v1262
          %v1387 = vpop.f32.mrf.mxu0
          %v1388 = vadd.f32 0.0, %v1387
          %v1389 = vpop.f32.mrf.mxu0
          %1390 = vmatprep.mubr.f32.mxu0 0.0
          %1391 = vmatmul.mubr.f32.gmra.mxu0 %v1265
          %v1392 = vpop.f32.mrf.mxu0
          %v1393 = vadd.f32 0.0, %v1392
          %v1394 = vpop.f32.mrf.mxu0
          %1395 = vmatprep.mubr.f32.mxu0 0.0
          %1396 = vmatmul.mubr.f32.gmra.mxu0 %v1268
          %v1397 = vpop.f32.mrf.mxu0
          %v1398 = vadd.f32 0.0, %v1397
          %v1399 = vpop.f32.mrf.mxu0
          %1400 = vmatprep.mubr.f32.mxu0 0.0
          %1401 = vmatmul.mubr.f32.gmra.mxu0 %v1271
          %v1402 = vpop.f32.mrf.mxu0
          %v1403 = vadd.f32 0.0, %v1402
          %v1404 = vpop.f32.mrf.mxu0
          %1405 = vmatprep.mubr.f32.mxu0 0.0
          %1406 = vmatmul.mubr.f32.gmra.mxu0 %v1274
          %v1407 = vpop.f32.mrf.mxu0
          %v1408 = vadd.f32 0.0, %v1407
          %v1409 = vpop.f32.mrf.mxu0
          %1410 = vmatprep.mubr.f32.mxu0 0.0
          %1411 = vmatmul.mubr.f32.gmra.mxu0 %v1277
          %v1412 = vpop.f32.mrf.mxu0
          %v1413 = vadd.f32 0.0, %v1412
          %v1414 = vpop.f32.mrf.mxu0
          %1415 = vmatprep.mubr.f32.mxu0 0.0
          %1416 = vmatmul.mubr.f32.gmra.mxu0 %v1280
          %v1417 = vpop.f32.mrf.mxu0
          %v1418 = vadd.f32 0.0, %v1417
          %v1419 = vpop.f32.mrf.mxu0
          %1420 = vmatprep.mubr.f32.mxu0 0.0
          %1421 = vmatmul.mubr.f32.gmra.mxu0 %v1283
          %v1422 = vpop.f32.mrf.mxu0
          %v1423 = vadd.f32 0.0, %v1422
          %v1424 = vpop.f32.mrf.mxu0
          %1425 = vmatprep.mubr.f32.mxu0 0.0
          %1426 = vmatmul.mubr.f32.gmra.mxu0 %v1286
          %v1427 = vpop.f32.mrf.mxu0
          %v1428 = vadd.f32 0.0, %v1427
          %v1429 = vpop.f32.mrf.mxu0
          %1430 = vmatprep.mubr.f32.mxu0 0.0
          %1431 = vmatmul.mubr.f32.gmra.mxu0 %v1289
          %v1432 = vpop.f32.mrf.mxu0
          %v1433 = vadd.f32 0.0, %v1432
          %v1434 = vpop.f32.mrf.mxu0
          %1435 = vdwg.mxu0
          %v1436 = vpack.c.bf16 %v1363, %v1358
          %v1437 = vpack.c.bf16 %v1373, %v1368
          %v1438 = vpack.c.bf16 %v1383, %v1378
          %v1439 = vpack.c.bf16 %v1393, %v1388
          %v1440 = vpack.c.bf16 %v1403, %v1398
          %v1441 = vpack.c.bf16 %v1413, %v1408
          %v1442 = vpack.c.bf16 %v1423, %v1418
          %v1443 = vpack.c.bf16 %v1433, %v1428
          %v1452 = vunpack.c.l.b16 %v1436
          %v1453 = vunpack.c.h.b16 %v1436
          %v1454 = vunpack.c.l.b16 %v1437
          %v1455 = vunpack.c.h.b16 %v1437
          %v1456 = vunpack.c.l.b16 %v1438
          %v1457 = vunpack.c.h.b16 %v1438
          %v1458 = vunpack.c.l.b16 %v1439
          %v1459 = vunpack.c.h.b16 %v1439
          %v1460 = vunpack.c.l.b16 %v1440
          %v1461 = vunpack.c.h.b16 %v1440
          %v1462 = vunpack.c.l.b16 %v1441
          %v1463 = vunpack.c.h.b16 %v1441
          %v1464 = vunpack.c.l.b16 %v1442
          %v1465 = vunpack.c.h.b16 %v1442
          %v1466 = vunpack.c.l.b16 %v1443
          %v1467 = vunpack.c.h.b16 %v1443
          %v1468 = vpack.c.b16 %v1452, %v1452
          %v1469 = vpack.c.b16 %v1453, %v1453
          %v1470 = vpack.c.b16 %v1454, %v1454
          %v1471 = vpack.c.b16 %v1455, %v1455
          %v1472 = vpack.c.b16 %v1456, %v1456
          %v1473 = vpack.c.b16 %v1457, %v1457
          %v1474 = vpack.c.b16 %v1458, %v1458
          %v1475 = vpack.c.b16 %v1459, %v1459
          %v1476 = vpack.c.b16 %v1460, %v1460
          %v1477 = vpack.c.b16 %v1461, %v1461
          %v1478 = vpack.c.b16 %v1462, %v1462
          %v1479 = vpack.c.b16 %v1463, %v1463
          %v1480 = vpack.c.b16 %v1464, %v1464
          %v1481 = vpack.c.b16 %v1465, %v1465
          %v1482 = vpack.c.b16 %v1466, %v1466
          %v1483 = vpack.c.b16 %v1467, %v1467
          %vm1500 = vcmask 519168
          %1501 = vst.msk [vmem:[#allocation3] sm:$0xf] %vm1500, %v1468
          %1502 = vst.msk [vmem:[#allocation3 + $0x4] sm:$0xf] %vm1500, %v1469
          %1503 = vst.msk [vmem:[#allocation3 + $0x8] sm:$0xf] %vm1500, %v1470
          %1504 = vst.msk [vmem:[#allocation3 + $0xc] sm:$0xf] %vm1500, %v1471
          %1505 = vst.msk [vmem:[#allocation3 + $0x10] sm:$0xf] %vm1500, %v1472
          %1506 = vst.msk [vmem:[#allocation3 + $0x14] sm:$0xf] %vm1500, %v1473
          %1507 = vst.msk [vmem:[#allocation3 + $0x18] sm:$0xf] %vm1500, %v1474
          %1508 = vst.msk [vmem:[#allocation3 + $0x1c] sm:$0xf] %vm1500, %v1475
          %1509 = vst.msk [vmem:[#allocation3 + $0x20] sm:$0xf] %vm1500, %v1476
          %1510 = vst.msk [vmem:[#allocation3 + $0x24] sm:$0xf] %vm1500, %v1477
          %1511 = vst.msk [vmem:[#allocation3 + $0x28] sm:$0xf] %vm1500, %v1478
          %1512 = vst.msk [vmem:[#allocation3 + $0x2c] sm:$0xf] %vm1500, %v1479
          %1513 = vst.msk [vmem:[#allocation3 + $0x30] sm:$0xf] %vm1500, %v1480
          %1514 = vst.msk [vmem:[#allocation3 + $0x34] sm:$0xf] %vm1500, %v1481
          %1515 = vst.msk [vmem:[#allocation3 + $0x38] sm:$0xf] %vm1500, %v1482
          %1516 = vst.msk [vmem:[#allocation3 + $0x3c] sm:$0xf] %vm1500, %v1483
          %s1517 = scalar_lea.vmem [#allocation13], %s1232
          %v1518 = vld [vmem:[%s1517] sm:$0xff]
          %v1519 = vld [vmem:[%s1517 + $0x8] sm:$0xff]
          %v1520 = vld [vmem:[%s1517 + $0x10] sm:$0xff]
          %v1521 = vld [vmem:[%s1517 + $0x18] sm:$0xff]
          %v1522 = vld [vmem:[%s1517 + $0x20] sm:$0xff]
          %v1523 = vld [vmem:[%s1517 + $0x28] sm:$0xff]
          %v1524 = vld [vmem:[%s1517 + $0x30] sm:$0xff]
          %v1525 = vld [vmem:[%s1517 + $0x38] sm:$0xff]
          %1526 = vmatprep.subr.mxu0 0.0
          %1527 = vmatpush1.msra.mxu0 0.0
          %1528 = vmatprep.subr.mxu0 0.0
          %1529 = vmatpush1.msra.mxu0 0.0
          %1530 = vmatprep.subr.mxu0 0.0
          %1531 = vmatpush1.msra.mxu0 0.0
          %1532 = vmatprep.subr.mxu0 0.0
          %1533 = vmatpush1.msra.mxu0 0.0
          %1534 = vmatprep.subr.mxu0 0.0
          %1535 = vmatpush1.msra.mxu0 0.0
          %1536 = vmatprep.subr.mxu0 0.0
          %1537 = vmatpush1.msra.mxu0 0.0
          %1538 = vmatprep.subr.mxu0 0.0
          %1539 = vmatpush1.msra.mxu0 0.0
          %1540 = vmatprep.subr.mxu0 0.0
          %1541 = vmatpush1.msra.mxu0 0.0
          %1542 = vmatprep.subr.mxu0 0.0
          %1543 = vmatpush1.msra.mxu0 %v1525
          %1544 = vmatprep.subr.mxu0 0.0
          %1545 = vmatpush1.msra.mxu0 %v1524
          %1546 = vmatprep.subr.mxu0 0.0
          %1547 = vmatpush1.msra.mxu0 %v1523
          %1548 = vmatprep.subr.mxu0 0.0
          %1549 = vmatpush1.msra.mxu0 %v1522
          %1550 = vmatprep.subr.mxu0 0.0
          %1551 = vmatpush1.msra.mxu0 %v1521
          %1552 = vmatprep.subr.mxu0 0.0
          %1553 = vmatpush1.msra.mxu0 %v1520
          %1554 = vmatprep.subr.mxu0 0.0
          %1555 = vmatpush1.msra.mxu0 %v1519
          %1556 = vmatprep.subr.mxu0 0.0
          %1557 = vmatpush1.msra.mxu0 %v1518
          %1558 = vmatprep.subr.mxu0 0.0
          %1559 = vmatpush2.msra.mxu0 0.0
          %1560 = vmatprep.subr.mxu0 0.0
          %1561 = vmatpush2.msra.mxu0 0.0
          %1562 = vmatprep.subr.mxu0 0.0
          %1563 = vmatpush2.msra.mxu0 0.0
          %1564 = vmatprep.subr.mxu0 0.0
          %1565 = vmatpush2.msra.mxu0 0.0
          %1566 = vmatprep.subr.mxu0 0.0
          %1567 = vmatpush2.msra.mxu0 0.0
          %1568 = vmatprep.subr.mxu0 0.0
          %1569 = vmatpush2.msra.mxu0 0.0
          %1570 = vmatprep.subr.mxu0 0.0
          %1571 = vmatpush2.msra.mxu0 0.0
          %1572 = vmatprep.subr.mxu0 0.0
          %1573 = vmatpush2.msra.mxu0 0.0
          %1574 = vmatprep.subr.mxu0 0.0
          %1575 = vmatpush2.msra.mxu0 0.0
          %1576 = vmatprep.subr.mxu0 0.0
          %1577 = vmatpush2.msra.mxu0 0.0
          %1578 = vmatprep.subr.mxu0 0.0
          %1579 = vmatpush2.msra.mxu0 0.0
          %1580 = vmatprep.subr.mxu0 0.0
          %1581 = vmatpush2.msra.mxu0 0.0
          %1582 = vmatprep.subr.mxu0 0.0
          %1583 = vmatpush2.msra.mxu0 0.0
          %1584 = vmatprep.subr.mxu0 0.0
          %1585 = vmatpush2.msra.mxu0 0.0
          %1586 = vmatprep.subr.mxu0 0.0
          %1587 = vmatpush2.msra.mxu0 0.0
          %1588 = vmatprep.subr.mxu0 0.0
          %1589 = vmatpush2.msra.mxu0 0.0
          %1590 = vmatprep.mubr.f32.mxu0 0.0
          %1591 = vmatmul.mubr.f32.gmra.mxu0 %v1244
          %v1592 = vpop.f32.mrf.mxu0
          %v1593 = vadd.f32 0.0, %v1592
          %v1594 = vpop.f32.mrf.mxu0
          %1595 = vmatprep.mubr.f32.mxu0 0.0
          %1596 = vmatmul.mubr.f32.gmra.mxu0 %v1247
          %v1597 = vpop.f32.mrf.mxu0
          %v1598 = vadd.f32 0.0, %v1597
          %v1599 = vpop.f32.mrf.mxu0
          %1600 = vmatprep.mubr.f32.mxu0 0.0
          %1601 = vmatmul.mubr.f32.gmra.mxu0 %v1250
          %v1602 = vpop.f32.mrf.mxu0
          %v1603 = vadd.f32 0.0, %v1602
          %v1604 = vpop.f32.mrf.mxu0
          %1605 = vmatprep.mubr.f32.mxu0 0.0
          %1606 = vmatmul.mubr.f32.gmra.mxu0 %v1253
          %v1607 = vpop.f32.mrf.mxu0
          %v1608 = vadd.f32 0.0, %v1607
          %v1609 = vpop.f32.mrf.mxu0
          %1610 = vmatprep.mubr.f32.mxu0 0.0
          %1611 = vmatmul.mubr.f32.gmra.mxu0 %v1256
          %v1612 = vpop.f32.mrf.mxu0
          %v1613 = vadd.f32 0.0, %v1612
          %v1614 = vpop.f32.mrf.mxu0
          %1615 = vmatprep.mubr.f32.mxu0 0.0
          %1616 = vmatmul.mubr.f32.gmra.mxu0 %v1259
          %v1617 = vpop.f32.mrf.mxu0
          %v1618 = vadd.f32 0.0, %v1617
          %v1619 = vpop.f32.mrf.mxu0
          %1620 = vmatprep.mubr.f32.mxu0 0.0
          %1621 = vmatmul.mubr.f32.gmra.mxu0 %v1262
          %v1622 = vpop.f32.mrf.mxu0
          %v1623 = vadd.f32 0.0, %v1622
          %v1624 = vpop.f32.mrf.mxu0
          %1625 = vmatprep.mubr.f32.mxu0 0.0
          %1626 = vmatmul.mubr.f32.gmra.mxu0 %v1265
          %v1627 = vpop.f32.mrf.mxu0
          %v1628 = vadd.f32 0.0, %v1627
          %v1629 = vpop.f32.mrf.mxu0
          %1630 = vmatprep.mubr.f32.mxu0 0.0
          %1631 = vmatmul.mubr.f32.gmra.mxu0 %v1268
          %v1632 = vpop.f32.mrf.mxu0
          %v1633 = vadd.f32 0.0, %v1632
          %v1634 = vpop.f32.mrf.mxu0
          %1635 = vmatprep.mubr.f32.mxu0 0.0
          %1636 = vmatmul.mubr.f32.gmra.mxu0 %v1271
          %v1637 = vpop.f32.mrf.mxu0
          %v1638 = vadd.f32 0.0, %v1637
          %v1639 = vpop.f32.mrf.mxu0
          %1640 = vmatprep.mubr.f32.mxu0 0.0
          %1641 = vmatmul.mubr.f32.gmra.mxu0 %v1274
          %v1642 = vpop.f32.mrf.mxu0
          %v1643 = vadd.f32 0.0, %v1642
          %v1644 = vpop.f32.mrf.mxu0
          %1645 = vmatprep.mubr.f32.mxu0 0.0
          %1646 = vmatmul.mubr.f32.gmra.mxu0 %v1277
          %v1647 = vpop.f32.mrf.mxu0
          %v1648 = vadd.f32 0.0, %v1647
          %v1649 = vpop.f32.mrf.mxu0
          %1650 = vmatprep.mubr.f32.mxu0 0.0
          %1651 = vmatmul.mubr.f32.gmra.mxu0 %v1280
          %v1652 = vpop.f32.mrf.mxu0
          %v1653 = vadd.f32 0.0, %v1652
          %v1654 = vpop.f32.mrf.mxu0
          %1655 = vmatprep.mubr.f32.mxu0 0.0
          %1656 = vmatmul.mubr.f32.gmra.mxu0 %v1283
          %v1657 = vpop.f32.mrf.mxu0
          %v1658 = vadd.f32 0.0, %v1657
          %v1659 = vpop.f32.mrf.mxu0
          %1660 = vmatprep.mubr.f32.mxu0 0.0
          %1661 = vmatmul.mubr.f32.gmra.mxu0 %v1286
          %v1662 = vpop.f32.mrf.mxu0
          %v1663 = vadd.f32 0.0, %v1662
          %v1664 = vpop.f32.mrf.mxu0
          %1665 = vmatprep.mubr.f32.mxu0 0.0
          %1666 = vmatmul.mubr.f32.gmra.mxu0 %v1289
          %v1667 = vpop.f32.mrf.mxu0
          %v1668 = vadd.f32 0.0, %v1667
          %v1669 = vpop.f32.mrf.mxu0
          %1670 = vdwg.mxu0
          %v1671 = vpack.c.bf16 %v1598, %v1593
          %v1672 = vpack.c.bf16 %v1608, %v1603
          %v1673 = vpack.c.bf16 %v1618, %v1613
          %v1674 = vpack.c.bf16 %v1628, %v1623
          %v1675 = vpack.c.bf16 %v1638, %v1633
          %v1676 = vpack.c.bf16 %v1648, %v1643
          %v1677 = vpack.c.bf16 %v1658, %v1653
          %v1678 = vpack.c.bf16 %v1668, %v1663
          %v1687 = vunpack.c.l.b16 %v1671
          %v1688 = vunpack.c.h.b16 %v1671
          %v1689 = vunpack.c.l.b16 %v1672
          %v1690 = vunpack.c.h.b16 %v1672
          %v1691 = vunpack.c.l.b16 %v1673
          %v1692 = vunpack.c.h.b16 %v1673
          %v1693 = vunpack.c.l.b16 %v1674
          %v1694 = vunpack.c.h.b16 %v1674
          %v1695 = vunpack.c.l.b16 %v1675
          %v1696 = vunpack.c.h.b16 %v1675
          %v1697 = vunpack.c.l.b16 %v1676
          %v1698 = vunpack.c.h.b16 %v1676
          %v1699 = vunpack.c.l.b16 %v1677
          %v1700 = vunpack.c.h.b16 %v1677
          %v1701 = vunpack.c.l.b16 %v1678
          %v1702 = vunpack.c.h.b16 %v1678
          %v1703 = vpack.c.b16 %v1687, %v1687
          %v1704 = vpack.c.b16 %v1688, %v1688
          %v1705 = vpack.c.b16 %v1689, %v1689
          %v1706 = vpack.c.b16 %v1690, %v1690
          %v1707 = vpack.c.b16 %v1691, %v1691
          %v1708 = vpack.c.b16 %v1692, %v1692
          %v1709 = vpack.c.b16 %v1693, %v1693
          %v1710 = vpack.c.b16 %v1694, %v1694
          %v1711 = vpack.c.b16 %v1695, %v1695
          %v1712 = vpack.c.b16 %v1696, %v1696
          %v1713 = vpack.c.b16 %v1697, %v1697
          %v1714 = vpack.c.b16 %v1698, %v1698
          %v1715 = vpack.c.b16 %v1699, %v1699
          %v1716 = vpack.c.b16 %v1700, %v1700
          %v1717 = vpack.c.b16 %v1701, %v1701
          %v1718 = vpack.c.b16 %v1702, %v1702
          %1735 = vst.msk [vmem:[#allocation3 + $0x40] sm:$0xf] %vm1500, %v1703
          %1736 = vst.msk [vmem:[#allocation3 + $0x44] sm:$0xf] %vm1500, %v1704
          %1737 = vst.msk [vmem:[#allocation3 + $0x48] sm:$0xf] %vm1500, %v1705
          %1738 = vst.msk [vmem:[#allocation3 + $0x4c] sm:$0xf] %vm1500, %v1706
          %1739 = vst.msk [vmem:[#allocation3 + $0x50] sm:$0xf] %vm1500, %v1707
          %1740 = vst.msk [vmem:[#allocation3 + $0x54] sm:$0xf] %vm1500, %v1708
          %1741 = vst.msk [vmem:[#allocation3 + $0x58] sm:$0xf] %vm1500, %v1709
          %1742 = vst.msk [vmem:[#allocation3 + $0x5c] sm:$0xf] %vm1500, %v1710
          %1743 = vst.msk [vmem:[#allocation3 + $0x60] sm:$0xf] %vm1500, %v1711
          %1744 = vst.msk [vmem:[#allocation3 + $0x64] sm:$0xf] %vm1500, %v1712
          %1745 = vst.msk [vmem:[#allocation3 + $0x68] sm:$0xf] %vm1500, %v1713
          %1746 = vst.msk [vmem:[#allocation3 + $0x6c] sm:$0xf] %vm1500, %v1714
          %1747 = vst.msk [vmem:[#allocation3 + $0x70] sm:$0xf] %vm1500, %v1715
          %1748 = vst.msk [vmem:[#allocation3 + $0x74] sm:$0xf] %vm1500, %v1716
          %1749 = vst.msk [vmem:[#allocation3 + $0x78] sm:$0xf] %vm1500, %v1717
          %1750 = vst.msk [vmem:[#allocation3 + $0x7c] sm:$0xf] %vm1500, %v1718
          %1751 = vst.msk [vmem:[#allocation4] sm:$0xff] %vm1242, 0.0
          %1752 = vst.msk [vmem:[#allocation4 + $0x8] sm:$0xff] %vm1242, 0.0
          %1753 = vst.msk [vmem:[#allocation4 + $0x10] sm:$0xff] %vm1242, 0.0
          %1754 = vst.msk [vmem:[#allocation4 + $0x18] sm:$0xff] %vm1242, 0.0
          %1755 = vst.msk [vmem:[#allocation4 + $0x20] sm:$0xff] %vm1242, 0.0
          %1756 = vst.msk [vmem:[#allocation4 + $0x28] sm:$0xff] %vm1242, 0.0
          %1757 = vst.msk [vmem:[#allocation4 + $0x30] sm:$0xff] %vm1242, 0.0
          %1758 = vst.msk [vmem:[#allocation4 + $0x38] sm:$0xff] %vm1242, 0.0
          %1759 = vst.msk [vmem:[#allocation4 + $0x40] sm:$0xff] %vm1242, 0.0
          %1760 = vst.msk [vmem:[#allocation4 + $0x48] sm:$0xff] %vm1242, 0.0
          %1761 = vst.msk [vmem:[#allocation4 + $0x50] sm:$0xff] %vm1242, 0.0
          %1762 = vst.msk [vmem:[#allocation4 + $0x58] sm:$0xff] %vm1242, 0.0
          %1763 = vst.msk [vmem:[#allocation4 + $0x60] sm:$0xff] %vm1242, 0.0
          %1764 = vst.msk [vmem:[#allocation4 + $0x68] sm:$0xff] %vm1242, 0.0
          %1765 = vst.msk [vmem:[#allocation4 + $0x70] sm:$0xff] %vm1242, 0.0
          %1766 = vst.msk [vmem:[#allocation4 + $0x78] sm:$0xff] %vm1242, 0.0
        $region136: #{tpu_custom_call.1} parent=95 // pred_fallthru
          _
        %v1767 = vld [vmem:[%s727] sm:$0xff]
        %v1768 = vld [vmem:[%s727 + $0x8] sm:$0xff]
        %v1769 = vld [vmem:[%s727 + $0x10] sm:$0xff]
        %v1770 = vld [vmem:[%s727 + $0x18] sm:$0xff]
        %v1771 = vld [vmem:[%s727 + $0x20] sm:$0xff]
        %v1772 = vld [vmem:[%s727 + $0x28] sm:$0xff]
        %v1773 = vld [vmem:[%s727 + $0x30] sm:$0xff]
        %v1774 = vld [vmem:[%s727 + $0x38] sm:$0xff]
        %v1775 = vld [vmem:[%s727 + $0x40] sm:$0xff]
        %v1776 = vld [vmem:[%s727 + $0x48] sm:$0xff]
        %v1777 = vld [vmem:[%s727 + $0x50] sm:$0xff]
        %v1778 = vld [vmem:[%s727 + $0x58] sm:$0xff]
        %v1779 = vld [vmem:[%s727 + $0x60] sm:$0xff]
        %v1780 = vld [vmem:[%s727 + $0x68] sm:$0xff]
        %v1781 = vld [vmem:[%s727 + $0x70] sm:$0xff]
        %v1782 = vld [vmem:[%s727 + $0x78] sm:$0xff]
        %v1783 = vld [vmem:[%s727 + $0x80] sm:$0xff]
        %v1784 = vld [vmem:[%s727 + $0x88] sm:$0xff]
        %v1785 = vld [vmem:[%s727 + $0x90] sm:$0xff]
        %v1786 = vld [vmem:[%s727 + $0x98] sm:$0xff]
        %v1787 = vld [vmem:[%s727 + $0xa0] sm:$0xff]
        %v1788 = vld [vmem:[%s727 + $0xa8] sm:$0xff]
        %v1789 = vld [vmem:[%s727 + $0xb0] sm:$0xff]
        %v1790 = vld [vmem:[%s727 + $0xb8] sm:$0xff]
        %v1791 = vld [vmem:[%s727 + $0xc0] sm:$0xff]
        %v1792 = vld [vmem:[%s727 + $0xc8] sm:$0xff]
        %v1793 = vld [vmem:[%s727 + $0xd0] sm:$0xff]
        %v1794 = vld [vmem:[%s727 + $0xd8] sm:$0xff]
        %v1795 = vld [vmem:[%s727 + $0xe0] sm:$0xff]
        %v1796 = vld [vmem:[%s727 + $0xe8] sm:$0xff]
        %v1797 = vld [vmem:[%s727 + $0xf0] sm:$0xff]
        %v1798 = vld [vmem:[%s727 + $0xf8] sm:$0xff]
        %v1799 = vld [vmem:[#allocation3] sm:$0xf]
        %v1800 = vld [vmem:[#allocation3 + $0x4] sm:$0xf]
        %v1801 = vld [vmem:[#allocation3 + $0x8] sm:$0xf]
        %v1802 = vld [vmem:[#allocation3 + $0xc] sm:$0xf]
        %v1803 = vld [vmem:[#allocation3 + $0x10] sm:$0xf]
        %v1804 = vld [vmem:[#allocation3 + $0x14] sm:$0xf]
        %v1805 = vld [vmem:[#allocation3 + $0x18] sm:$0xf]
        %v1806 = vld [vmem:[#allocation3 + $0x1c] sm:$0xf]
        %v1807 = vld [vmem:[#allocation3 + $0x20] sm:$0xf]
        %v1808 = vld [vmem:[#allocation3 + $0x24] sm:$0xf]
        %v1809 = vld [vmem:[#allocation3 + $0x28] sm:$0xf]
        %v1810 = vld [vmem:[#allocation3 + $0x2c] sm:$0xf]
        %v1811 = vld [vmem:[#allocation3 + $0x30] sm:$0xf]
        %v1812 = vld [vmem:[#allocation3 + $0x34] sm:$0xf]
        %v1813 = vld [vmem:[#allocation3 + $0x38] sm:$0xf]
        %v1814 = vld [vmem:[#allocation3 + $0x3c] sm:$0xf]
        %v1815 = vld [vmem:[#allocation3 + $0x40] sm:$0xf]
        %v1816 = vld [vmem:[#allocation3 + $0x44] sm:$0xf]
        %v1817 = vld [vmem:[#allocation3 + $0x48] sm:$0xf]
        %v1818 = vld [vmem:[#allocation3 + $0x4c] sm:$0xf]
        %v1819 = vld [vmem:[#allocation3 + $0x50] sm:$0xf]
        %v1820 = vld [vmem:[#allocation3 + $0x54] sm:$0xf]
        %v1821 = vld [vmem:[#allocation3 + $0x58] sm:$0xf]
        %v1822 = vld [vmem:[#allocation3 + $0x5c] sm:$0xf]
        %v1823 = vld [vmem:[#allocation3 + $0x60] sm:$0xf]
        %v1824 = vld [vmem:[#allocation3 + $0x64] sm:$0xf]
        %v1825 = vld [vmem:[#allocation3 + $0x68] sm:$0xf]
        %v1826 = vld [vmem:[#allocation3 + $0x6c] sm:$0xf]
        %v1827 = vld [vmem:[#allocation3 + $0x70] sm:$0xf]
        %v1828 = vld [vmem:[#allocation3 + $0x74] sm:$0xf]
        %v1829 = vld [vmem:[#allocation3 + $0x78] sm:$0xf]
        %v1830 = vld [vmem:[#allocation3 + $0x7c] sm:$0xf]
        %s1831 = scalar_lea.vmem [#allocation14], %s40
        %v1832 = vld [vmem:[%s1831] sm:$0x1]
        %v1834 = vlaneseq
        %v1835 = vshrl.u32 %v1834, 7
        %v1836 = vsub.s32 0, %v1835
        %v1837 = vrot.slane %v1832, %v1836
        %v1871 = vunpack.c.l.b16 %v1767
        %v1872 = vunpack.c.h.b16 %v1767
        %v1873 = vunpack.c.l.b16 %v1768
        %v1874 = vunpack.c.h.b16 %v1768
        %v1875 = vunpack.c.l.b16 %v1769
        %v1876 = vunpack.c.h.b16 %v1769
        %v1877 = vunpack.c.l.b16 %v1770
        %v1878 = vunpack.c.h.b16 %v1770
        %v1879 = vunpack.c.l.b16 %v1771
        %v1880 = vunpack.c.h.b16 %v1771
        %v1881 = vunpack.c.l.b16 %v1772
        %v1882 = vunpack.c.h.b16 %v1772
        %v1883 = vunpack.c.l.b16 %v1773
        %v1884 = vunpack.c.h.b16 %v1773
        %v1885 = vunpack.c.l.b16 %v1774
        %v1886 = vunpack.c.h.b16 %v1774
        %v1887 = vunpack.c.l.b16 %v1775
        %v1888 = vunpack.c.h.b16 %v1775
        %v1889 = vunpack.c.l.b16 %v1776
        %v1890 = vunpack.c.h.b16 %v1776
        %v1891 = vunpack.c.l.b16 %v1777
        %v1892 = vunpack.c.h.b16 %v1777
        %v1893 = vunpack.c.l.b16 %v1778
        %v1894 = vunpack.c.h.b16 %v1778
        %v1895 = vunpack.c.l.b16 %v1779
        %v1896 = vunpack.c.h.b16 %v1779
        %v1897 = vunpack.c.l.b16 %v1780
        %v1898 = vunpack.c.h.b16 %v1780
        %v1899 = vunpack.c.l.b16 %v1781
        %v1900 = vunpack.c.h.b16 %v1781
        %v1901 = vunpack.c.l.b16 %v1782
        %v1902 = vunpack.c.h.b16 %v1782
        %v1903 = vunpack.c.l.b16 %v1783
        %v1904 = vunpack.c.h.b16 %v1783
        %v1905 = vunpack.c.l.b16 %v1784
        %v1906 = vunpack.c.h.b16 %v1784
        %v1907 = vunpack.c.l.b16 %v1785
        %v1908 = vunpack.c.h.b16 %v1785
        %v1909 = vunpack.c.l.b16 %v1786
        %v1910 = vunpack.c.h.b16 %v1786
        %v1911 = vunpack.c.l.b16 %v1787
        %v1912 = vunpack.c.h.b16 %v1787
        %v1913 = vunpack.c.l.b16 %v1788
        %v1914 = vunpack.c.h.b16 %v1788
        %v1915 = vunpack.c.l.b16 %v1789
        %v1916 = vunpack.c.h.b16 %v1789
        %v1917 = vunpack.c.l.b16 %v1790
        %v1918 = vunpack.c.h.b16 %v1790
        %v1919 = vunpack.c.l.b16 %v1791
        %v1920 = vunpack.c.h.b16 %v1791
        %v1921 = vunpack.c.l.b16 %v1792
        %v1922 = vunpack.c.h.b16 %v1792
        %v1923 = vunpack.c.l.b16 %v1793
        %v1924 = vunpack.c.h.b16 %v1793
        %v1925 = vunpack.c.l.b16 %v1794
        %v1926 = vunpack.c.h.b16 %v1794
        %v1927 = vunpack.c.l.b16 %v1795
        %v1928 = vunpack.c.h.b16 %v1795
        %v1929 = vunpack.c.l.b16 %v1796
        %v1930 = vunpack.c.h.b16 %v1796
        %v1931 = vunpack.c.l.b16 %v1797
        %v1932 = vunpack.c.h.b16 %v1797
        %v1933 = vunpack.c.l.b16 %v1798
        %v1934 = vunpack.c.h.b16 %v1798
        %v1935 = vpack.c.b16 %v1873, %v1871
        %v1936 = vpack.c.b16 %v1874, %v1872
        %v1937 = vpack.c.b16 %v1877, %v1875
        %v1938 = vpack.c.b16 %v1878, %v1876
        %v1939 = vpack.c.b16 %v1881, %v1879
        %v1940 = vpack.c.b16 %v1882, %v1880
        %v1941 = vpack.c.b16 %v1885, %v1883
        %v1942 = vpack.c.b16 %v1886, %v1884
        %v1943 = vpack.c.b16 %v1889, %v1887
        %v1944 = vpack.c.b16 %v1890, %v1888
        %v1945 = vpack.c.b16 %v1893, %v1891
        %v1946 = vpack.c.b16 %v1894, %v1892
        %v1947 = vpack.c.b16 %v1897, %v1895
        %v1948 = vpack.c.b16 %v1898, %v1896
        %v1949 = vpack.c.b16 %v1901, %v1899
        %v1950 = vpack.c.b16 %v1902, %v1900
        %v1951 = vpack.c.b16 %v1905, %v1903
        %v1952 = vpack.c.b16 %v1906, %v1904
        %v1953 = vpack.c.b16 %v1909, %v1907
        %v1954 = vpack.c.b16 %v1910, %v1908
        %v1955 = vpack.c.b16 %v1913, %v1911
        %v1956 = vpack.c.b16 %v1914, %v1912
        %v1957 = vpack.c.b16 %v1917, %v1915
        %v1958 = vpack.c.b16 %v1918, %v1916
        %v1959 = vpack.c.b16 %v1921, %v1919
        %v1960 = vpack.c.b16 %v1922, %v1920
        %v1961 = vpack.c.b16 %v1925, %v1923
        %v1962 = vpack.c.b16 %v1926, %v1924
        %v1963 = vpack.c.b16 %v1929, %v1927
        %v1964 = vpack.c.b16 %v1930, %v1928
        %v1965 = vpack.c.b16 %v1933, %v1931
        %v1966 = vpack.c.b16 %v1934, %v1932
        %v2031 = vunpack.c.l.b16 %v1799
        %v2032 = vunpack.c.l.b16 %v1800
        %v2033 = vunpack.c.l.b16 %v1801
        %v2034 = vunpack.c.l.b16 %v1802
        %v2035 = vunpack.c.l.b16 %v1803
        %v2036 = vunpack.c.l.b16 %v1804
        %v2037 = vunpack.c.l.b16 %v1805
        %v2038 = vunpack.c.l.b16 %v1806
        %v2039 = vunpack.c.l.b16 %v1807
        %v2040 = vunpack.c.l.b16 %v1808
        %v2041 = vunpack.c.l.b16 %v1809
        %v2042 = vunpack.c.l.b16 %v1810
        %v2043 = vunpack.c.l.b16 %v1811
        %v2044 = vunpack.c.l.b16 %v1812
        %v2045 = vunpack.c.l.b16 %v1813
        %v2046 = vunpack.c.l.b16 %v1814
        %v2047 = vunpack.c.l.b16 %v1815
        %v2048 = vunpack.c.l.b16 %v1816
        %v2049 = vunpack.c.l.b16 %v1817
        %v2050 = vunpack.c.l.b16 %v1818
        %v2051 = vunpack.c.l.b16 %v1819
        %v2052 = vunpack.c.l.b16 %v1820
        %v2053 = vunpack.c.l.b16 %v1821
        %v2054 = vunpack.c.l.b16 %v1822
        %v2055 = vunpack.c.l.b16 %v1823
        %v2056 = vunpack.c.l.b16 %v1824
        %v2057 = vunpack.c.l.b16 %v1825
        %v2058 = vunpack.c.l.b16 %v1826
        %v2059 = vunpack.c.l.b16 %v1827
        %v2060 = vunpack.c.l.b16 %v1828
        %v2061 = vunpack.c.l.b16 %v1829
        %v2062 = vunpack.c.l.b16 %v1830
        %v2063 = vpack.c.b16 %v2032, %v2031
        %v2064 = vpack.c.b16 %v2034, %v2033
        %v2065 = vpack.c.b16 %v2036, %v2035
        %v2066 = vpack.c.b16 %v2038, %v2037
        %v2067 = vpack.c.b16 %v2040, %v2039
        %v2068 = vpack.c.b16 %v2042, %v2041
        %v2069 = vpack.c.b16 %v2044, %v2043
        %v2070 = vpack.c.b16 %v2046, %v2045
        %v2071 = vpack.c.b16 %v2048, %v2047
        %v2072 = vpack.c.b16 %v2050, %v2049
        %v2073 = vpack.c.b16 %v2052, %v2051
        %v2074 = vpack.c.b16 %v2054, %v2053
        %v2075 = vpack.c.b16 %v2056, %v2055
        %v2076 = vpack.c.b16 %v2058, %v2057
        %v2077 = vpack.c.b16 %v2060, %v2059
        %v2078 = vpack.c.b16 %v2062, %v2061
        %2095 = vmatprep.subr.bf16.mxu0 0
        %2096 = vmatpush1.bf16.msra.mxu0 %v2070
        %2097 = vmatprep.subr.bf16.mxu0 0
        %2098 = vmatpush1.bf16.msra.mxu0 %v2069
        %2099 = vmatprep.subr.bf16.mxu0 0
        %2100 = vmatpush1.bf16.msra.mxu0 %v2068
        %2101 = vmatprep.subr.bf16.mxu0 0
        %2102 = vmatpush1.bf16.msra.mxu0 %v2067
        %2103 = vmatprep.subr.bf16.mxu0 0
        %2104 = vmatpush1.bf16.msra.mxu0 %v2066
        %2105 = vmatprep.subr.bf16.mxu0 0
        %2106 = vmatpush1.bf16.msra.mxu0 %v2065
        %2107 = vmatprep.subr.bf16.mxu0 0
        %2108 = vmatpush1.bf16.msra.mxu0 %v2064
        %2109 = vmatprep.subr.bf16.mxu0 0
        %2110 = vmatpush1.bf16.msra.mxu0 %v2063
        %2111 = vmatprep.subr.bf16.mxu0 0
        %2112 = vmatpush2.bf16.msra.mxu0 %v2078
        %2113 = vmatprep.subr.bf16.mxu0 0
        %2114 = vmatpush2.bf16.msra.mxu0 %v2077
        %2115 = vmatprep.subr.bf16.mxu0 0
        %2116 = vmatpush2.bf16.msra.mxu0 %v2076
        %2117 = vmatprep.subr.bf16.mxu0 0
        %2118 = vmatpush2.bf16.msra.mxu0 %v2075
        %2119 = vmatprep.subr.bf16.mxu0 0
        %2120 = vmatpush2.bf16.msra.mxu0 %v2074
        %2121 = vmatprep.subr.bf16.mxu0 0
        %2122 = vmatpush2.bf16.msra.mxu0 %v2073
        %2123 = vmatprep.subr.bf16.mxu0 0
        %2124 = vmatpush2.bf16.msra.mxu0 %v2072
        %2125 = vmatprep.subr.bf16.mxu0 0
        %2126 = vmatpush2.bf16.msra.mxu0 %v2071
        %2127 = vmatprep.mubr.bf16.mxu0 %v1936
        %2128 = vmatmul.mubr.bf16.gmra.mxu0 %v1935
        %v2129 = vpop.f32.mrf.mxu0
        %v2130 = vadd.f32 %v1837, %v2129
        %v2131 = vpop.f32.mrf.mxu0
        %v2132 = vpop.f32.mrf.mxu0
        %v2133 = vadd.f32 %v1837, %v2132
        %v2134 = vpop.f32.mrf.mxu0
        %2135 = vmatprep.mubr.bf16.mxu0 %v1938
        %2136 = vmatmul.mubr.bf16.gmra.mxu0 %v1937
        %v2137 = vpop.f32.mrf.mxu0
        %v2138 = vadd.f32 %v1837, %v2137
        %v2139 = vpop.f32.mrf.mxu0
        %v2140 = vpop.f32.mrf.mxu0
        %v2141 = vadd.f32 %v1837, %v2140
        %v2142 = vpop.f32.mrf.mxu0
        %2143 = vmatprep.mubr.bf16.mxu0 %v1940
        %2144 = vmatmul.mubr.bf16.gmra.mxu0 %v1939
        %v2145 = vpop.f32.mrf.mxu0
        %v2146 = vadd.f32 %v1837, %v2145
        %v2147 = vpop.f32.mrf.mxu0
        %v2148 = vpop.f32.mrf.mxu0
        %v2149 = vadd.f32 %v1837, %v2148
        %v2150 = vpop.f32.mrf.mxu0
        %2151 = vmatprep.mubr.bf16.mxu0 %v1942
        %2152 = vmatmul.mubr.bf16.gmra.mxu0 %v1941
        %v2153 = vpop.f32.mrf.mxu0
        %v2154 = vadd.f32 %v1837, %v2153
        %v2155 = vpop.f32.mrf.mxu0
        %v2156 = vpop.f32.mrf.mxu0
        %v2157 = vadd.f32 %v1837, %v2156
        %v2158 = vpop.f32.mrf.mxu0
        %2159 = vmatprep.mubr.bf16.mxu0 %v1944
        %2160 = vmatmul.mubr.bf16.gmra.mxu0 %v1943
        %v2161 = vpop.f32.mrf.mxu0
        %v2162 = vadd.f32 %v1837, %v2161
        %v2163 = vpop.f32.mrf.mxu0
        %v2164 = vpop.f32.mrf.mxu0
        %v2165 = vadd.f32 %v1837, %v2164
        %v2166 = vpop.f32.mrf.mxu0
        %2167 = vmatprep.mubr.bf16.mxu0 %v1946
        %2168 = vmatmul.mubr.bf16.gmra.mxu0 %v1945
        %v2169 = vpop.f32.mrf.mxu0
        %v2170 = vadd.f32 %v1837, %v2169
        %v2171 = vpop.f32.mrf.mxu0
        %v2172 = vpop.f32.mrf.mxu0
        %v2173 = vadd.f32 %v1837, %v2172
        %v2174 = vpop.f32.mrf.mxu0
        %2175 = vmatprep.mubr.bf16.mxu0 %v1948
        %2176 = vmatmul.mubr.bf16.gmra.mxu0 %v1947
        %v2177 = vpop.f32.mrf.mxu0
        %v2178 = vadd.f32 %v1837, %v2177
        %v2179 = vpop.f32.mrf.mxu0
        %v2180 = vpop.f32.mrf.mxu0
        %v2181 = vadd.f32 %v1837, %v2180
        %v2182 = vpop.f32.mrf.mxu0
        %2183 = vmatprep.mubr.bf16.mxu0 %v1950
        %2184 = vmatmul.mubr.bf16.gmra.mxu0 %v1949
        %v2185 = vpop.f32.mrf.mxu0
        %v2186 = vadd.f32 %v1837, %v2185
        %v2187 = vpop.f32.mrf.mxu0
        %v2188 = vpop.f32.mrf.mxu0
        %v2189 = vadd.f32 %v1837, %v2188
        %v2190 = vpop.f32.mrf.mxu0
        %2191 = vmatprep.mubr.bf16.mxu0 %v1952
        %2192 = vmatmul.mubr.bf16.gmra.mxu0 %v1951
        %v2193 = vpop.f32.mrf.mxu0
        %v2194 = vadd.f32 %v1837, %v2193
        %v2195 = vpop.f32.mrf.mxu0
        %v2196 = vpop.f32.mrf.mxu0
        %v2197 = vadd.f32 %v1837, %v2196
        %v2198 = vpop.f32.mrf.mxu0
        %2199 = vmatprep.mubr.bf16.mxu0 %v1954
        %2200 = vmatmul.mubr.bf16.gmra.mxu0 %v1953
        %v2201 = vpop.f32.mrf.mxu0
        %v2202 = vadd.f32 %v1837, %v2201
        %v2203 = vpop.f32.mrf.mxu0
        %v2204 = vpop.f32.mrf.mxu0
        %v2205 = vadd.f32 %v1837, %v2204
        %v2206 = vpop.f32.mrf.mxu0
        %2207 = vmatprep.mubr.bf16.mxu0 %v1956
        %2208 = vmatmul.mubr.bf16.gmra.mxu0 %v1955
        %v2209 = vpop.f32.mrf.mxu0
        %v2210 = vadd.f32 %v1837, %v2209
        %v2211 = vpop.f32.mrf.mxu0
        %v2212 = vpop.f32.mrf.mxu0
        %v2213 = vadd.f32 %v1837, %v2212
        %v2214 = vpop.f32.mrf.mxu0
        %2215 = vmatprep.mubr.bf16.mxu0 %v1958
        %2216 = vmatmul.mubr.bf16.gmra.mxu0 %v1957
        %v2217 = vpop.f32.mrf.mxu0
        %v2218 = vadd.f32 %v1837, %v2217
        %v2219 = vpop.f32.mrf.mxu0
        %v2220 = vpop.f32.mrf.mxu0
        %v2221 = vadd.f32 %v1837, %v2220
        %v2222 = vpop.f32.mrf.mxu0
        %2223 = vmatprep.mubr.bf16.mxu0 %v1960
        %2224 = vmatmul.mubr.bf16.gmra.mxu0 %v1959
        %v2225 = vpop.f32.mrf.mxu0
        %v2226 = vadd.f32 %v1837, %v2225
        %v2227 = vpop.f32.mrf.mxu0
        %v2228 = vpop.f32.mrf.mxu0
        %v2229 = vadd.f32 %v1837, %v2228
        %v2230 = vpop.f32.mrf.mxu0
        %2231 = vmatprep.mubr.bf16.mxu0 %v1962
        %2232 = vmatmul.mubr.bf16.gmra.mxu0 %v1961
        %v2233 = vpop.f32.mrf.mxu0
        %v2234 = vadd.f32 %v1837, %v2233
        %v2235 = vpop.f32.mrf.mxu0
        %v2236 = vpop.f32.mrf.mxu0
        %v2237 = vadd.f32 %v1837, %v2236
        %v2238 = vpop.f32.mrf.mxu0
        %2239 = vmatprep.mubr.bf16.mxu0 %v1964
        %2240 = vmatmul.mubr.bf16.gmra.mxu0 %v1963
        %v2241 = vpop.f32.mrf.mxu0
        %v2242 = vadd.f32 %v1837, %v2241
        %v2243 = vpop.f32.mrf.mxu0
        %v2244 = vpop.f32.mrf.mxu0
        %v2245 = vadd.f32 %v1837, %v2244
        %v2246 = vpop.f32.mrf.mxu0
        %2247 = vmatprep.mubr.bf16.mxu0 %v1966
        %2248 = vmatmul.mubr.bf16.gmra.mxu0 %v1965
        %v2249 = vpop.f32.mrf.mxu0
        %v2250 = vadd.f32 %v1837, %v2249
        %v2251 = vpop.f32.mrf.mxu0
        %v2252 = vpop.f32.mrf.mxu0
        %v2253 = vadd.f32 %v1837, %v2252
        %v2254 = vpop.f32.mrf.mxu0
        %2255 = vdwg.mxu0
        %v2256 = vmax.f32 %v2130, 0.0
        %v2257 = vmax.f32 %v2133, 0.0
        %v2258 = vmax.f32 %v2138, 0.0
        %v2259 = vmax.f32 %v2141, 0.0
        %v2260 = vmax.f32 %v2146, 0.0
        %v2261 = vmax.f32 %v2149, 0.0
        %v2262 = vmax.f32 %v2154, 0.0
        %v2263 = vmax.f32 %v2157, 0.0
        %v2264 = vmax.f32 %v2162, 0.0
        %v2265 = vmax.f32 %v2165, 0.0
        %v2266 = vmax.f32 %v2170, 0.0
        %v2267 = vmax.f32 %v2173, 0.0
        %v2268 = vmax.f32 %v2178, 0.0
        %v2269 = vmax.f32 %v2181, 0.0
        %v2270 = vmax.f32 %v2186, 0.0
        %v2271 = vmax.f32 %v2189, 0.0
        %v2272 = vmax.f32 %v2194, 0.0
        %v2273 = vmax.f32 %v2197, 0.0
        %v2274 = vmax.f32 %v2202, 0.0
        %v2275 = vmax.f32 %v2205, 0.0
        %v2276 = vmax.f32 %v2210, 0.0
        %v2277 = vmax.f32 %v2213, 0.0
        %v2278 = vmax.f32 %v2218, 0.0
        %v2279 = vmax.f32 %v2221, 0.0
        %v2280 = vmax.f32 %v2226, 0.0
        %v2281 = vmax.f32 %v2229, 0.0
        %v2282 = vmax.f32 %v2234, 0.0
        %v2283 = vmax.f32 %v2237, 0.0
        %v2284 = vmax.f32 %v2242, 0.0
        %v2285 = vmax.f32 %v2245, 0.0
        %v2286 = vmax.f32 %v2250, 0.0
        %v2287 = vmax.f32 %v2253, 0.0
        %s2288 = scalar_lea.vmem [#allocation16], %s40
        %v2289 = vld [vmem:[%s2288] sm:$0x1]
        %v2291 = vlaneseq
        %v2292 = vshrl.u32 %v2291, 7
        %v2293 = vsub.s32 0, %v2292
        %v2294 = vrot.slane %v2289, %v2293
        %v2296 = vmul.f32 %v2256, %v2294
        %v2297 = vmul.f32 %v2257, %v2294
        %v2298 = vmul.f32 %v2258, %v2294
        %v2299 = vmul.f32 %v2259, %v2294
        %v2300 = vmul.f32 %v2260, %v2294
        %v2301 = vmul.f32 %v2261, %v2294
        %v2302 = vmul.f32 %v2262, %v2294
        %v2303 = vmul.f32 %v2263, %v2294
        %v2304 = vmul.f32 %v2264, %v2294
        %v2305 = vmul.f32 %v2265, %v2294
        %v2306 = vmul.f32 %v2266, %v2294
        %v2307 = vmul.f32 %v2267, %v2294
        %v2308 = vmul.f32 %v2268, %v2294
        %v2309 = vmul.f32 %v2269, %v2294
        %v2310 = vmul.f32 %v2270, %v2294
        %v2311 = vmul.f32 %v2271, %v2294
        %v2312 = vmul.f32 %v2272, %v2294
        %v2313 = vmul.f32 %v2273, %v2294
        %v2314 = vmul.f32 %v2274, %v2294
        %v2315 = vmul.f32 %v2275, %v2294
        %v2316 = vmul.f32 %v2276, %v2294
        %v2317 = vmul.f32 %v2277, %v2294
        %v2318 = vmul.f32 %v2278, %v2294
        %v2319 = vmul.f32 %v2279, %v2294
        %v2320 = vmul.f32 %v2280, %v2294
        %v2321 = vmul.f32 %v2281, %v2294
        %v2322 = vmul.f32 %v2282, %v2294
        %v2323 = vmul.f32 %v2283, %v2294
        %v2324 = vmul.f32 %v2284, %v2294
        %v2325 = vmul.f32 %v2285, %v2294
        %v2326 = vmul.f32 %v2286, %v2294
        %v2327 = vmul.f32 %v2287, %v2294
        %s2328 = scalar_lea.vmem %s12, %s40
        %v2329 = vld [vmem:[%s2328] sm:$0x1]
        %v2331 = vlaneseq
        %v2332 = vshrl.u32 %v2331, 7
        %v2333 = vsub.s32 0, %v2332
        %v2334 = vrot.slane %v2329, %v2333
        %v2336 = vadd.f32 %v2296, %v2334
        %v2337 = vadd.f32 %v2297, %v2334
        %v2338 = vadd.f32 %v2298, %v2334
        %v2339 = vadd.f32 %v2299, %v2334
        %v2340 = vadd.f32 %v2300, %v2334
        %v2341 = vadd.f32 %v2301, %v2334
        %v2342 = vadd.f32 %v2302, %v2334
        %v2343 = vadd.f32 %v2303, %v2334
        %v2344 = vadd.f32 %v2304, %v2334
        %v2345 = vadd.f32 %v2305, %v2334
        %v2346 = vadd.f32 %v2306, %v2334
        %v2347 = vadd.f32 %v2307, %v2334
        %v2348 = vadd.f32 %v2308, %v2334
        %v2349 = vadd.f32 %v2309, %v2334
        %v2350 = vadd.f32 %v2310, %v2334
        %v2351 = vadd.f32 %v2311, %v2334
        %v2352 = vadd.f32 %v2312, %v2334
        %v2353 = vadd.f32 %v2313, %v2334
        %v2354 = vadd.f32 %v2314, %v2334
        %v2355 = vadd.f32 %v2315, %v2334
        %v2356 = vadd.f32 %v2316, %v2334
        %v2357 = vadd.f32 %v2317, %v2334
        %v2358 = vadd.f32 %v2318, %v2334
        %v2359 = vadd.f32 %v2319, %v2334
        %v2360 = vadd.f32 %v2320, %v2334
        %v2361 = vadd.f32 %v2321, %v2334
        %v2362 = vadd.f32 %v2322, %v2334
        %v2363 = vadd.f32 %v2323, %v2334
        %v2364 = vadd.f32 %v2324, %v2334
        %v2365 = vadd.f32 %v2325, %v2334
        %v2366 = vadd.f32 %v2326, %v2334
        %v2367 = vadd.f32 %v2327, %v2334
        %v2368 = vld [vmem:[#allocation4] sm:$0xff]
        %v2369 = vld [vmem:[#allocation4 + $0x8] sm:$0xff]
        %v2370 = vld [vmem:[#allocation4 + $0x10] sm:$0xff]
        %v2371 = vld [vmem:[#allocation4 + $0x18] sm:$0xff]
        %v2372 = vld [vmem:[#allocation4 + $0x20] sm:$0xff]
        %v2373 = vld [vmem:[#allocation4 + $0x28] sm:$0xff]
        %v2374 = vld [vmem:[#allocation4 + $0x30] sm:$0xff]
        %v2375 = vld [vmem:[#allocation4 + $0x38] sm:$0xff]
        %v2376 = vld [vmem:[#allocation4 + $0x40] sm:$0xff]
        %v2377 = vld [vmem:[#allocation4 + $0x48] sm:$0xff]
        %v2378 = vld [vmem:[#allocation4 + $0x50] sm:$0xff]
        %v2379 = vld [vmem:[#allocation4 + $0x58] sm:$0xff]
        %v2380 = vld [vmem:[#allocation4 + $0x60] sm:$0xff]
        %v2381 = vld [vmem:[#allocation4 + $0x68] sm:$0xff]
        %v2382 = vld [vmem:[#allocation4 + $0x70] sm:$0xff]
        %v2383 = vld [vmem:[#allocation4 + $0x78] sm:$0xff]
        %v2384 = vld [vmem:[#allocation5] sm:$0xff]
        %v2385 = vld [vmem:[#allocation5 + $0x8] sm:$0xff]
        %v2386 = vld [vmem:[#allocation5 + $0x10] sm:$0xff]
        %v2387 = vld [vmem:[#allocation5 + $0x18] sm:$0xff]
        %v2388 = vld [vmem:[#allocation5 + $0x20] sm:$0xff]
        %v2389 = vld [vmem:[#allocation5 + $0x28] sm:$0xff]
        %v2390 = vld [vmem:[#allocation5 + $0x30] sm:$0xff]
        %v2391 = vld [vmem:[#allocation5 + $0x38] sm:$0xff]
        %v2392 = vld [vmem:[#allocation5 + $0x40] sm:$0xff]
        %v2393 = vld [vmem:[#allocation5 + $0x48] sm:$0xff]
        %v2394 = vld [vmem:[#allocation5 + $0x50] sm:$0xff]
        %v2395 = vld [vmem:[#allocation5 + $0x58] sm:$0xff]
        %v2396 = vld [vmem:[#allocation5 + $0x60] sm:$0xff]
        %v2397 = vld [vmem:[#allocation5 + $0x68] sm:$0xff]
        %v2398 = vld [vmem:[#allocation5 + $0x70] sm:$0xff]
        %v2399 = vld [vmem:[#allocation5 + $0x78] sm:$0xff]
        %v2400 = vpack.c.bf16 %v2337, %v2336
        %v2401 = vpack.c.bf16 %v2339, %v2338
        %v2402 = vpack.c.bf16 %v2341, %v2340
        %v2403 = vpack.c.bf16 %v2343, %v2342
        %v2404 = vpack.c.bf16 %v2345, %v2344
        %v2405 = vpack.c.bf16 %v2347, %v2346
        %v2406 = vpack.c.bf16 %v2349, %v2348
        %v2407 = vpack.c.bf16 %v2351, %v2350
        %v2408 = vpack.c.bf16 %v2353, %v2352
        %v2409 = vpack.c.bf16 %v2355, %v2354
        %v2410 = vpack.c.bf16 %v2357, %v2356
        %v2411 = vpack.c.bf16 %v2359, %v2358
        %v2412 = vpack.c.bf16 %v2361, %v2360
        %v2413 = vpack.c.bf16 %v2363, %v2362
        %v2414 = vpack.c.bf16 %v2365, %v2364
        %v2415 = vpack.c.bf16 %v2367, %v2366
        %v2432 = vunpack.c.l.b16 %v2384
        %v2433 = vunpack.c.h.b16 %v2384
        %v2434 = vunpack.c.l.b16 %v2385
        %v2435 = vunpack.c.h.b16 %v2385
        %v2436 = vunpack.c.l.b16 %v2386
        %v2437 = vunpack.c.h.b16 %v2386
        %v2438 = vunpack.c.l.b16 %v2387
        %v2439 = vunpack.c.h.b16 %v2387
        %v2440 = vunpack.c.l.b16 %v2388
        %v2441 = vunpack.c.h.b16 %v2388
        %v2442 = vunpack.c.l.b16 %v2389
        %v2443 = vunpack.c.h.b16 %v2389
        %v2444 = vunpack.c.l.b16 %v2390
        %v2445 = vunpack.c.h.b16 %v2390
        %v2446 = vunpack.c.l.b16 %v2391
        %v2447 = vunpack.c.h.b16 %v2391
        %v2448 = vunpack.c.l.b16 %v2392
        %v2449 = vunpack.c.h.b16 %v2392
        %v2450 = vunpack.c.l.b16 %v2393
        %v2451 = vunpack.c.h.b16 %v2393
        %v2452 = vunpack.c.l.b16 %v2394
        %v2453 = vunpack.c.h.b16 %v2394
        %v2454 = vunpack.c.l.b16 %v2395
        %v2455 = vunpack.c.h.b16 %v2395
        %v2456 = vunpack.c.l.b16 %v2396
        %v2457 = vunpack.c.h.b16 %v2396
        %v2458 = vunpack.c.l.b16 %v2397
        %v2459 = vunpack.c.h.b16 %v2397
        %v2460 = vunpack.c.l.b16 %v2398
        %v2461 = vunpack.c.h.b16 %v2398
        %v2462 = vunpack.c.l.b16 %v2399
        %v2463 = vunpack.c.h.b16 %v2399
        %v2464 = vpack.c.b16 %v2434, %v2432
        %v2465 = vpack.c.b16 %v2435, %v2433
        %v2466 = vpack.c.b16 %v2438, %v2436
        %v2467 = vpack.c.b16 %v2439, %v2437
        %v2468 = vpack.c.b16 %v2442, %v2440
        %v2469 = vpack.c.b16 %v2443, %v2441
        %v2470 = vpack.c.b16 %v2446, %v2444
        %v2471 = vpack.c.b16 %v2447, %v2445
        %v2472 = vpack.c.b16 %v2450, %v2448
        %v2473 = vpack.c.b16 %v2451, %v2449
        %v2474 = vpack.c.b16 %v2454, %v2452
        %v2475 = vpack.c.b16 %v2455, %v2453
        %v2476 = vpack.c.b16 %v2458, %v2456
        %v2477 = vpack.c.b16 %v2459, %v2457
        %v2478 = vpack.c.b16 %v2462, %v2460
        %v2479 = vpack.c.b16 %v2463, %v2461
        %2496 = vmatprep.subr.bf16.mxu0 0
        %2497 = vmatpush1.bf16.msra.mxu0 %v2407
        %2498 = vmatprep.subr.bf16.mxu0 0
        %2499 = vmatpush1.bf16.msra.mxu0 %v2406
        %2500 = vmatprep.subr.bf16.mxu0 0
        %2501 = vmatpush1.bf16.msra.mxu0 %v2405
        %2502 = vmatprep.subr.bf16.mxu0 0
        %2503 = vmatpush1.bf16.msra.mxu0 %v2404
        %2504 = vmatprep.subr.bf16.mxu0 0
        %2505 = vmatpush1.bf16.msra.mxu0 %v2403
        %2506 = vmatprep.subr.bf16.mxu0 0
        %2507 = vmatpush1.bf16.msra.mxu0 %v2402
        %2508 = vmatprep.subr.bf16.mxu0 0
        %2509 = vmatpush1.bf16.msra.mxu0 %v2401
        %2510 = vmatprep.subr.bf16.mxu0 0
        %2511 = vmatpush1.bf16.msra.mxu0 %v2400
        %2512 = vmatprep.subr.bf16.mxu0 0
        %2513 = vmatpush2.bf16.msra.mxu0 %v2415
        %2514 = vmatprep.subr.bf16.mxu0 0
        %2515 = vmatpush2.bf16.msra.mxu0 %v2414
        %2516 = vmatprep.subr.bf16.mxu0 0
        %2517 = vmatpush2.bf16.msra.mxu0 %v2413
        %2518 = vmatprep.subr.bf16.mxu0 0
        %2519 = vmatpush2.bf16.msra.mxu0 %v2412
        %2520 = vmatprep.subr.bf16.mxu0 0
        %2521 = vmatpush2.bf16.msra.mxu0 %v2411
        %2522 = vmatprep.subr.bf16.mxu0 0
        %2523 = vmatpush2.bf16.msra.mxu0 %v2410
        %2524 = vmatprep.subr.bf16.mxu0 0
        %2525 = vmatpush2.bf16.msra.mxu0 %v2409
        %2526 = vmatprep.subr.bf16.mxu0 0
        %2527 = vmatpush2.bf16.msra.mxu0 %v2408
        %2528 = vmatprep.mubr.bf16.mxu0 %v2465
        %2529 = vmatmul.mubr.bf16.gmra.mxu0 %v2464
        %v2530 = vpop.f32.mrf.mxu0
        %v2531 = vadd.f32 0.0, %v2530
        %v2532 = vpop.f32.mrf.mxu0
        %v2533 = vpop.f32.mrf.mxu0
        %v2534 = vadd.f32 0.0, %v2533
        %v2535 = vpop.f32.mrf.mxu0
        %2536 = vmatprep.mubr.bf16.mxu0 %v2467
        %2537 = vmatmul.mubr.bf16.gmra.mxu0 %v2466
        %v2538 = vpop.f32.mrf.mxu0
        %v2539 = vadd.f32 0.0, %v2538
        %v2540 = vpop.f32.mrf.mxu0
        %v2541 = vpop.f32.mrf.mxu0
        %v2542 = vadd.f32 0.0, %v2541
        %v2543 = vpop.f32.mrf.mxu0
        %2544 = vmatprep.mubr.bf16.mxu0 %v2469
        %2545 = vmatmul.mubr.bf16.gmra.mxu0 %v2468
        %v2546 = vpop.f32.mrf.mxu0
        %v2547 = vadd.f32 0.0, %v2546
        %v2548 = vpop.f32.mrf.mxu0
        %v2549 = vpop.f32.mrf.mxu0
        %v2550 = vadd.f32 0.0, %v2549
        %v2551 = vpop.f32.mrf.mxu0
        %2552 = vmatprep.mubr.bf16.mxu0 %v2471
        %2553 = vmatmul.mubr.bf16.gmra.mxu0 %v2470
        %v2554 = vpop.f32.mrf.mxu0
        %v2555 = vadd.f32 0.0, %v2554
        %v2556 = vpop.f32.mrf.mxu0
        %v2557 = vpop.f32.mrf.mxu0
        %v2558 = vadd.f32 0.0, %v2557
        %v2559 = vpop.f32.mrf.mxu0
        %2560 = vmatprep.mubr.bf16.mxu0 %v2473
        %2561 = vmatmul.mubr.bf16.gmra.mxu0 %v2472
        %v2562 = vpop.f32.mrf.mxu0
        %v2563 = vadd.f32 0.0, %v2562
        %v2564 = vpop.f32.mrf.mxu0
        %v2565 = vpop.f32.mrf.mxu0
        %v2566 = vadd.f32 0.0, %v2565
        %v2567 = vpop.f32.mrf.mxu0
        %2568 = vmatprep.mubr.bf16.mxu0 %v2475
        %2569 = vmatmul.mubr.bf16.gmra.mxu0 %v2474
        %v2570 = vpop.f32.mrf.mxu0
        %v2571 = vadd.f32 0.0, %v2570
        %v2572 = vpop.f32.mrf.mxu0
        %v2573 = vpop.f32.mrf.mxu0
        %v2574 = vadd.f32 0.0, %v2573
        %v2575 = vpop.f32.mrf.mxu0
        %2576 = vmatprep.mubr.bf16.mxu0 %v2477
        %2577 = vmatmul.mubr.bf16.gmra.mxu0 %v2476
        %v2578 = vpop.f32.mrf.mxu0
        %v2579 = vadd.f32 0.0, %v2578
        %v2580 = vpop.f32.mrf.mxu0
        %v2581 = vpop.f32.mrf.mxu0
        %v2582 = vadd.f32 0.0, %v2581
        %v2583 = vpop.f32.mrf.mxu0
        %2584 = vmatprep.mubr.bf16.mxu0 %v2479
        %2585 = vmatmul.mubr.bf16.gmra.mxu0 %v2478
        %v2586 = vpop.f32.mrf.mxu0
        %v2587 = vadd.f32 0.0, %v2586
        %v2588 = vpop.f32.mrf.mxu0
        %v2589 = vpop.f32.mrf.mxu0
        %v2590 = vadd.f32 0.0, %v2589
        %v2591 = vpop.f32.mrf.mxu0
        %2592 = vdwg.mxu0
        %v2593 = vadd.f32 %v2368, %v2531
        %v2594 = vadd.f32 %v2369, %v2534
        %v2595 = vadd.f32 %v2370, %v2539
        %v2596 = vadd.f32 %v2371, %v2542
        %v2597 = vadd.f32 %v2372, %v2547
        %v2598 = vadd.f32 %v2373, %v2550
        %v2599 = vadd.f32 %v2374, %v2555
        %v2600 = vadd.f32 %v2375, %v2558
        %v2601 = vadd.f32 %v2376, %v2563
        %v2602 = vadd.f32 %v2377, %v2566
        %v2603 = vadd.f32 %v2378, %v2571
        %v2604 = vadd.f32 %v2379, %v2574
        %v2605 = vadd.f32 %v2380, %v2579
        %v2606 = vadd.f32 %v2381, %v2582
        %v2607 = vadd.f32 %v2382, %v2587
        %v2608 = vadd.f32 %v2383, %v2590
        %vm2609 = vcmask 523264
        %2610 = vst.msk [vmem:[#allocation4] sm:$0xff] %vm2609, %v2593
        %2611 = vst.msk [vmem:[#allocation4 + $0x8] sm:$0xff] %vm2609, %v2594
        %2612 = vst.msk [vmem:[#allocation4 + $0x10] sm:$0xff] %vm2609, %v2595
        %2613 = vst.msk [vmem:[#allocation4 + $0x18] sm:$0xff] %vm2609, %v2596
        %2614 = vst.msk [vmem:[#allocation4 + $0x20] sm:$0xff] %vm2609, %v2597
        %2615 = vst.msk [vmem:[#allocation4 + $0x28] sm:$0xff] %vm2609, %v2598
        %2616 = vst.msk [vmem:[#allocation4 + $0x30] sm:$0xff] %vm2609, %v2599
        %2617 = vst.msk [vmem:[#allocation4 + $0x38] sm:$0xff] %vm2609, %v2600
        %2618 = vst.msk [vmem:[#allocation4 + $0x40] sm:$0xff] %vm2609, %v2601
        %2619 = vst.msk [vmem:[#allocation4 + $0x48] sm:$0xff] %vm2609, %v2602
        %2620 = vst.msk [vmem:[#allocation4 + $0x50] sm:$0xff] %vm2609, %v2603
        %2621 = vst.msk [vmem:[#allocation4 + $0x58] sm:$0xff] %vm2609, %v2604
        %2622 = vst.msk [vmem:[#allocation4 + $0x60] sm:$0xff] %vm2609, %v2605
        %2623 = vst.msk [vmem:[#allocation4 + $0x68] sm:$0xff] %vm2609, %v2606
        %2624 = vst.msk [vmem:[#allocation4 + $0x70] sm:$0xff] %vm2609, %v2607
        %2625 = vst.msk [vmem:[#allocation4 + $0x78] sm:$0xff] %vm2609, %v2608
        // Predicated region
        $region137: #{tpu_custom_call.1} parent=95 // pred_check
          %p2626 = pneg %p732
        $region138: #{tpu_custom_call.1} parent=95 // pred_check_branch
          %2628 = sbr.rel (%p2626) target = $region140
        $region139: #{tpu_custom_call.1} parent=95 // pred_region
          %v2629 = vld [vmem:[#allocation4] sm:$0xff]
          %v2630 = vld [vmem:[#allocation4 + $0x8] sm:$0xff]
          %v2631 = vld [vmem:[#allocation4 + $0x10] sm:$0xff]
          %v2632 = vld [vmem:[#allocation4 + $0x18] sm:$0xff]
          %v2633 = vld [vmem:[#allocation4 + $0x20] sm:$0xff]
          %v2634 = vld [vmem:[#allocation4 + $0x28] sm:$0xff]
          %v2635 = vld [vmem:[#allocation4 + $0x30] sm:$0xff]
          %v2636 = vld [vmem:[#allocation4 + $0x38] sm:$0xff]
          %v2637 = vld [vmem:[#allocation4 + $0x40] sm:$0xff]
          %v2638 = vld [vmem:[#allocation4 + $0x48] sm:$0xff]
          %v2639 = vld [vmem:[#allocation4 + $0x50] sm:$0xff]
          %v2640 = vld [vmem:[#allocation4 + $0x58] sm:$0xff]
          %v2641 = vld [vmem:[#allocation4 + $0x60] sm:$0xff]
          %v2642 = vld [vmem:[#allocation4 + $0x68] sm:$0xff]
          %v2643 = vld [vmem:[#allocation4 + $0x70] sm:$0xff]
          %v2644 = vld [vmem:[#allocation4 + $0x78] sm:$0xff]
          %v2645 = vld [vmem:[%s3] sm:$0xff]
          %v2646 = vld [vmem:[%s3 + $0x8] sm:$0xff]
          %v2647 = vld [vmem:[%s3 + $0x10] sm:$0xff]
          %v2648 = vld [vmem:[%s3 + $0x18] sm:$0xff]
          %v2649 = vld [vmem:[%s3 + $0x20] sm:$0xff]
          %v2650 = vld [vmem:[%s3 + $0x28] sm:$0xff]
          %v2651 = vld [vmem:[%s3 + $0x30] sm:$0xff]
          %v2652 = vld [vmem:[%s3 + $0x38] sm:$0xff]
          %v2653 = vld [vmem:[%s3 + $0x40] sm:$0xff]
          %v2654 = vld [vmem:[%s3 + $0x48] sm:$0xff]
          %v2655 = vld [vmem:[%s3 + $0x50] sm:$0xff]
          %v2656 = vld [vmem:[%s3 + $0x58] sm:$0xff]
          %v2657 = vld [vmem:[%s3 + $0x60] sm:$0xff]
          %v2658 = vld [vmem:[%s3 + $0x68] sm:$0xff]
          %v2659 = vld [vmem:[%s3 + $0x70] sm:$0xff]
          %v2660 = vld [vmem:[%s3 + $0x78] sm:$0xff]
          %2662 = vset.pattern.permute.xlu0 0
          %2663 = vperm.xlu0 %2662, %v2645
          %v2664 = vpop.permute.xlu0 %2663
          %2667 = vset.pattern.permute.xlu0 0
          %2668 = vperm.xlu0 %2667, %v2646
          %v2669 = vpop.permute.xlu0 %2668
          %2672 = vset.pattern.permute.xlu0 0
          %2673 = vperm.xlu0 %2672, %v2647
          %v2674 = vpop.permute.xlu0 %2673
          %2677 = vset.pattern.permute.xlu0 0
          %2678 = vperm.xlu0 %2677, %v2648
          %v2679 = vpop.permute.xlu0 %2678
          %2682 = vset.pattern.permute.xlu0 0
          %2683 = vperm.xlu0 %2682, %v2649
          %v2684 = vpop.permute.xlu0 %2683
          %2687 = vset.pattern.permute.xlu0 0
          %2688 = vperm.xlu0 %2687, %v2650
          %v2689 = vpop.permute.xlu0 %2688
          %2692 = vset.pattern.permute.xlu0 0
          %2693 = vperm.xlu0 %2692, %v2651
          %v2694 = vpop.permute.xlu0 %2693
          %2697 = vset.pattern.permute.xlu0 0
          %2698 = vperm.xlu0 %2697, %v2652
          %v2699 = vpop.permute.xlu0 %2698
          %2702 = vset.pattern.permute.xlu0 0
          %2703 = vperm.xlu0 %2702, %v2653
          %v2704 = vpop.permute.xlu0 %2703
          %2707 = vset.pattern.permute.xlu0 0
          %2708 = vperm.xlu0 %2707, %v2654
          %v2709 = vpop.permute.xlu0 %2708
          %2712 = vset.pattern.permute.xlu0 0
          %2713 = vperm.xlu0 %2712, %v2655
          %v2714 = vpop.permute.xlu0 %2713
          %2717 = vset.pattern.permute.xlu0 0
          %2718 = vperm.xlu0 %2717, %v2656
          %v2719 = vpop.permute.xlu0 %2718
          %2722 = vset.pattern.permute.xlu0 0
          %2723 = vperm.xlu0 %2722, %v2657
          %v2724 = vpop.permute.xlu0 %2723
          %2727 = vset.pattern.permute.xlu0 0
          %2728 = vperm.xlu0 %2727, %v2658
          %v2729 = vpop.permute.xlu0 %2728
          %2732 = vset.pattern.permute.xlu0 0
          %2733 = vperm.xlu0 %2732, %v2659
          %v2734 = vpop.permute.xlu0 %2733
          %2737 = vset.pattern.permute.xlu0 0
          %2738 = vperm.xlu0 %2737, %v2660
          %v2739 = vpop.permute.xlu0 %2738
          %v2741 = vmul.f32 %v2629, %v2664
          %v2742 = vmul.f32 %v2630, %v2669
          %v2743 = vmul.f32 %v2631, %v2674
          %v2744 = vmul.f32 %v2632, %v2679
          %v2745 = vmul.f32 %v2633, %v2684
          %v2746 = vmul.f32 %v2634, %v2689
          %v2747 = vmul.f32 %v2635, %v2694
          %v2748 = vmul.f32 %v2636, %v2699
          %v2749 = vmul.f32 %v2637, %v2704
          %v2750 = vmul.f32 %v2638, %v2709
          %v2751 = vmul.f32 %v2639, %v2714
          %v2752 = vmul.f32 %v2640, %v2719
          %v2753 = vmul.f32 %v2641, %v2724
          %v2754 = vmul.f32 %v2642, %v2729
          %v2755 = vmul.f32 %v2643, %v2734
          %v2756 = vmul.f32 %v2644, %v2739
          %v2757 = vld [vmem:[#allocation2] sm:$0xff]
          %v2758 = vld [vmem:[#allocation2 + $0x8] sm:$0xff]
          %v2759 = vld [vmem:[#allocation2 + $0x10] sm:$0xff]
          %v2760 = vld [vmem:[#allocation2 + $0x18] sm:$0xff]
          %v2761 = vld [vmem:[#allocation2 + $0x20] sm:$0xff]
          %v2762 = vld [vmem:[#allocation2 + $0x28] sm:$0xff]
          %v2763 = vld [vmem:[#allocation2 + $0x30] sm:$0xff]
          %v2764 = vld [vmem:[#allocation2 + $0x38] sm:$0xff]
          %v2765 = vld [vmem:[#allocation2 + $0x40] sm:$0xff]
          %v2766 = vld [vmem:[#allocation2 + $0x48] sm:$0xff]
          %v2767 = vld [vmem:[#allocation2 + $0x50] sm:$0xff]
          %v2768 = vld [vmem:[#allocation2 + $0x58] sm:$0xff]
          %v2769 = vld [vmem:[#allocation2 + $0x60] sm:$0xff]
          %v2770 = vld [vmem:[#allocation2 + $0x68] sm:$0xff]
          %v2771 = vld [vmem:[#allocation2 + $0x70] sm:$0xff]
          %v2772 = vld [vmem:[#allocation2 + $0x78] sm:$0xff]
          %v2773 = vadd.f32 %v2741, %v2757
          %v2774 = vadd.f32 %v2742, %v2758
          %v2775 = vadd.f32 %v2743, %v2759
          %v2776 = vadd.f32 %v2744, %v2760
          %v2777 = vadd.f32 %v2745, %v2761
          %v2778 = vadd.f32 %v2746, %v2762
          %v2779 = vadd.f32 %v2747, %v2763
          %v2780 = vadd.f32 %v2748, %v2764
          %v2781 = vadd.f32 %v2749, %v2765
          %v2782 = vadd.f32 %v2750, %v2766
          %v2783 = vadd.f32 %v2751, %v2767
          %v2784 = vadd.f32 %v2752, %v2768
          %v2785 = vadd.f32 %v2753, %v2769
          %v2786 = vadd.f32 %v2754, %v2770
          %v2787 = vadd.f32 %v2755, %v2771
          %v2788 = vadd.f32 %v2756, %v2772
          %2789 = vst.msk [vmem:[#allocation2] sm:$0xff] %vm2609, %v2773
          %2790 = vst.msk [vmem:[#allocation2 + $0x8] sm:$0xff] %vm2609, %v2774
          %2791 = vst.msk [vmem:[#allocation2 + $0x10] sm:$0xff] %vm2609, %v2775
          %2792 = vst.msk [vmem:[#allocation2 + $0x18] sm:$0xff] %vm2609, %v2776
          %2793 = vst.msk [vmem:[#allocation2 + $0x20] sm:$0xff] %vm2609, %v2777
          %2794 = vst.msk [vmem:[#allocation2 + $0x28] sm:$0xff] %vm2609, %v2778
          %2795 = vst.msk [vmem:[#allocation2 + $0x30] sm:$0xff] %vm2609, %v2779
          %2796 = vst.msk [vmem:[#allocation2 + $0x38] sm:$0xff] %vm2609, %v2780
          %2797 = vst.msk [vmem:[#allocation2 + $0x40] sm:$0xff] %vm2609, %v2781
          %2798 = vst.msk [vmem:[#allocation2 + $0x48] sm:$0xff] %vm2609, %v2782
          %2799 = vst.msk [vmem:[#allocation2 + $0x50] sm:$0xff] %vm2609, %v2783
          %2800 = vst.msk [vmem:[#allocation2 + $0x58] sm:$0xff] %vm2609, %v2784
          %2801 = vst.msk [vmem:[#allocation2 + $0x60] sm:$0xff] %vm2609, %v2785
          %2802 = vst.msk [vmem:[#allocation2 + $0x68] sm:$0xff] %vm2609, %v2786
          %2803 = vst.msk [vmem:[#allocation2 + $0x70] sm:$0xff] %vm2609, %v2787
          %2804 = vst.msk [vmem:[#allocation2 + $0x78] sm:$0xff] %vm2609, %v2788
        $region140: #{tpu_custom_call.1} parent=95 // pred_fallthru
          _
        %p2805 = scmp.eq.s32.totalorder %s40, 3
        %p2806 = pnand %p2805, %p732
        %p2807 = pneg %p2806
        // Predicated region
        $region141: #{tpu_custom_call.1} parent=95 // pred_check
          _
        $region142: #{tpu_custom_call.1} parent=95 // pred_check_branch
          %2809 = sbr.rel (%p2806) target = $region144
        $region143: #{tpu_custom_call.1} parent=95 // pred_region
          %v2810 = vld [vmem:[#allocation2] sm:$0xff]
          %v2811 = vld [vmem:[#allocation2 + $0x8] sm:$0xff]
          %v2812 = vld [vmem:[#allocation2 + $0x10] sm:$0xff]
          %v2813 = vld [vmem:[#allocation2 + $0x18] sm:$0xff]
          %v2814 = vld [vmem:[#allocation2 + $0x20] sm:$0xff]
          %v2815 = vld [vmem:[#allocation2 + $0x28] sm:$0xff]
          %v2816 = vld [vmem:[#allocation2 + $0x30] sm:$0xff]
          %v2817 = vld [vmem:[#allocation2 + $0x38] sm:$0xff]
          %v2818 = vld [vmem:[#allocation2 + $0x40] sm:$0xff]
          %v2819 = vld [vmem:[#allocation2 + $0x48] sm:$0xff]
          %v2820 = vld [vmem:[#allocation2 + $0x50] sm:$0xff]
          %v2821 = vld [vmem:[#allocation2 + $0x58] sm:$0xff]
          %v2822 = vld [vmem:[#allocation2 + $0x60] sm:$0xff]
          %v2823 = vld [vmem:[#allocation2 + $0x68] sm:$0xff]
          %v2824 = vld [vmem:[#allocation2 + $0x70] sm:$0xff]
          %v2825 = vld [vmem:[#allocation2 + $0x78] sm:$0xff]
          %v2826 = vld [vmem:[%s13] sm:$0xff]
          %v2827 = vld [vmem:[%s13 + $0x8] sm:$0xff]
          %v2828 = vld [vmem:[%s13 + $0x10] sm:$0xff]
          %v2829 = vld [vmem:[%s13 + $0x18] sm:$0xff]
          %v2830 = vld [vmem:[%s13 + $0x20] sm:$0xff]
          %v2831 = vld [vmem:[%s13 + $0x28] sm:$0xff]
          %v2832 = vld [vmem:[%s13 + $0x30] sm:$0xff]
          %v2833 = vld [vmem:[%s13 + $0x38] sm:$0xff]
          %v2834 = vld [vmem:[%s14] sm:$0x1]
          %v2836 = vlaneseq
          %v2837 = vshrl.u32 %v2836, 7
          %v2838 = vsub.s32 0, %v2837
          %v2839 = vrot.slane %v2834, %v2838
          %v2842 = vsel %vm2609, %v2810, 0
          %v2845 = vsel %vm2609, %v2811, 0
          %v2848 = vsel %vm2609, %v2812, 0
          %v2851 = vsel %vm2609, %v2813, 0
          %v2854 = vsel %vm2609, %v2814, 0
          %v2857 = vsel %vm2609, %v2815, 0
          %v2860 = vsel %vm2609, %v2816, 0
          %v2863 = vsel %vm2609, %v2817, 0
          %v2866 = vsel %vm2609, %v2818, 0
          %v2869 = vsel %vm2609, %v2819, 0
          %v2872 = vsel %vm2609, %v2820, 0
          %v2875 = vsel %vm2609, %v2821, 0
          %v2878 = vsel %vm2609, %v2822, 0
          %v2881 = vsel %vm2609, %v2823, 0
          %v2884 = vsel %vm2609, %v2824, 0
          %v2887 = vsel %vm2609, %v2825, 0
          %2889 = vmatprep.subr.mxu0 0.0
          %2890 = vmatpush1.msra.mxu0 0.0
          %2891 = vmatprep.subr.mxu0 0.0
          %2892 = vmatpush1.msra.mxu0 0.0
          %2893 = vmatprep.subr.mxu0 0.0
          %2894 = vmatpush1.msra.mxu0 0.0
          %2895 = vmatprep.subr.mxu0 0.0
          %2896 = vmatpush1.msra.mxu0 0.0
          %2897 = vmatprep.subr.mxu0 0.0
          %2898 = vmatpush1.msra.mxu0 0.0
          %2899 = vmatprep.subr.mxu0 0.0
          %2900 = vmatpush1.msra.mxu0 0.0
          %2901 = vmatprep.subr.mxu0 0.0
          %2902 = vmatpush1.msra.mxu0 0.0
          %2903 = vmatprep.subr.mxu0 0.0
          %2904 = vmatpush1.msra.mxu0 0.0
          %2905 = vmatprep.subr.mxu0 0.0
          %2906 = vmatpush1.msra.mxu0 %v2833
          %2907 = vmatprep.subr.mxu0 0.0
          %2908 = vmatpush1.msra.mxu0 %v2832
          %2909 = vmatprep.subr.mxu0 0.0
          %2910 = vmatpush1.msra.mxu0 %v2831
          %2911 = vmatprep.subr.mxu0 0.0
          %2912 = vmatpush1.msra.mxu0 %v2830
          %2913 = vmatprep.subr.mxu0 0.0
          %2914 = vmatpush1.msra.mxu0 %v2829
          %2915 = vmatprep.subr.mxu0 0.0
          %2916 = vmatpush1.msra.mxu0 %v2828
          %2917 = vmatprep.subr.mxu0 0.0
          %2918 = vmatpush1.msra.mxu0 %v2827
          %2919 = vmatprep.subr.mxu0 0.0
          %2920 = vmatpush1.msra.mxu0 %v2826
          %2921 = vmatprep.subr.mxu0 0.0
          %2922 = vmatpush2.msra.mxu0 0.0
          %2923 = vmatprep.subr.mxu0 0.0
          %2924 = vmatpush2.msra.mxu0 0.0
          %2925 = vmatprep.subr.mxu0 0.0
          %2926 = vmatpush2.msra.mxu0 0.0
          %2927 = vmatprep.subr.mxu0 0.0
          %2928 = vmatpush2.msra.mxu0 0.0
          %2929 = vmatprep.subr.mxu0 0.0
          %2930 = vmatpush2.msra.mxu0 0.0
          %2931 = vmatprep.subr.mxu0 0.0
          %2932 = vmatpush2.msra.mxu0 0.0
          %2933 = vmatprep.subr.mxu0 0.0
          %2934 = vmatpush2.msra.mxu0 0.0
          %2935 = vmatprep.subr.mxu0 0.0
          %2936 = vmatpush2.msra.mxu0 0.0
          %2937 = vmatprep.subr.mxu0 0.0
          %2938 = vmatpush2.msra.mxu0 0.0
          %2939 = vmatprep.subr.mxu0 0.0
          %2940 = vmatpush2.msra.mxu0 0.0
          %2941 = vmatprep.subr.mxu0 0.0
          %2942 = vmatpush2.msra.mxu0 0.0
          %2943 = vmatprep.subr.mxu0 0.0
          %2944 = vmatpush2.msra.mxu0 0.0
          %2945 = vmatprep.subr.mxu0 0.0
          %2946 = vmatpush2.msra.mxu0 0.0
          %2947 = vmatprep.subr.mxu0 0.0
          %2948 = vmatpush2.msra.mxu0 0.0
          %2949 = vmatprep.subr.mxu0 0.0
          %2950 = vmatpush2.msra.mxu0 0.0
          %2951 = vmatprep.subr.mxu0 0.0
          %2952 = vmatpush2.msra.mxu0 0.0
          %2953 = vmatprep.mubr.f32.mxu0 0.0
          %2954 = vmatmul.mubr.f32.gmra.mxu0 %v2842
          %v2955 = vpop.f32.mrf.mxu0
          %v2956 = vadd.f32 %v2839, %v2955
          %v2957 = vpop.f32.mrf.mxu0
          %2958 = vmatprep.mubr.f32.mxu0 0.0
          %2959 = vmatmul.mubr.f32.gmra.mxu0 %v2845
          %v2960 = vpop.f32.mrf.mxu0
          %v2961 = vadd.f32 %v2839, %v2960
          %v2962 = vpop.f32.mrf.mxu0
          %2963 = vmatprep.mubr.f32.mxu0 0.0
          %2964 = vmatmul.mubr.f32.gmra.mxu0 %v2848
          %v2965 = vpop.f32.mrf.mxu0
          %v2966 = vadd.f32 %v2839, %v2965
          %v2967 = vpop.f32.mrf.mxu0
          %2968 = vmatprep.mubr.f32.mxu0 0.0
          %2969 = vmatmul.mubr.f32.gmra.mxu0 %v2851
          %v2970 = vpop.f32.mrf.mxu0
          %v2971 = vadd.f32 %v2839, %v2970
          %v2972 = vpop.f32.mrf.mxu0
          %2973 = vmatprep.mubr.f32.mxu0 0.0
          %2974 = vmatmul.mubr.f32.gmra.mxu0 %v2854
          %v2975 = vpop.f32.mrf.mxu0
          %v2976 = vadd.f32 %v2839, %v2975
          %v2977 = vpop.f32.mrf.mxu0
          %2978 = vmatprep.mubr.f32.mxu0 0.0
          %2979 = vmatmul.mubr.f32.gmra.mxu0 %v2857
          %v2980 = vpop.f32.mrf.mxu0
          %v2981 = vadd.f32 %v2839, %v2980
          %v2982 = vpop.f32.mrf.mxu0
          %2983 = vmatprep.mubr.f32.mxu0 0.0
          %2984 = vmatmul.mubr.f32.gmra.mxu0 %v2860
          %v2985 = vpop.f32.mrf.mxu0
          %v2986 = vadd.f32 %v2839, %v2985
          %v2987 = vpop.f32.mrf.mxu0
          %2988 = vmatprep.mubr.f32.mxu0 0.0
          %2989 = vmatmul.mubr.f32.gmra.mxu0 %v2863
          %v2990 = vpop.f32.mrf.mxu0
          %v2991 = vadd.f32 %v2839, %v2990
          %v2992 = vpop.f32.mrf.mxu0
          %2993 = vmatprep.mubr.f32.mxu0 0.0
          %2994 = vmatmul.mubr.f32.gmra.mxu0 %v2866
          %v2995 = vpop.f32.mrf.mxu0
          %v2996 = vadd.f32 %v2839, %v2995
          %v2997 = vpop.f32.mrf.mxu0
          %2998 = vmatprep.mubr.f32.mxu0 0.0
          %2999 = vmatmul.mubr.f32.gmra.mxu0 %v2869
          %v3000 = vpop.f32.mrf.mxu0
          %v3001 = vadd.f32 %v2839, %v3000
          %v3002 = vpop.f32.mrf.mxu0
          %3003 = vmatprep.mubr.f32.mxu0 0.0
          %3004 = vmatmul.mubr.f32.gmra.mxu0 %v2872
          %v3005 = vpop.f32.mrf.mxu0
          %v3006 = vadd.f32 %v2839, %v3005
          %v3007 = vpop.f32.mrf.mxu0
          %3008 = vmatprep.mubr.f32.mxu0 0.0
          %3009 = vmatmul.mubr.f32.gmra.mxu0 %v2875
          %v3010 = vpop.f32.mrf.mxu0
          %v3011 = vadd.f32 %v2839, %v3010
          %v3012 = vpop.f32.mrf.mxu0
          %3013 = vmatprep.mubr.f32.mxu0 0.0
          %3014 = vmatmul.mubr.f32.gmra.mxu0 %v2878
          %v3015 = vpop.f32.mrf.mxu0
          %v3016 = vadd.f32 %v2839, %v3015
          %v3017 = vpop.f32.mrf.mxu0
          %3018 = vmatprep.mubr.f32.mxu0 0.0
          %3019 = vmatmul.mubr.f32.gmra.mxu0 %v2881
          %v3020 = vpop.f32.mrf.mxu0
          %v3021 = vadd.f32 %v2839, %v3020
          %v3022 = vpop.f32.mrf.mxu0
          %3023 = vmatprep.mubr.f32.mxu0 0.0
          %3024 = vmatmul.mubr.f32.gmra.mxu0 %v2884
          %v3025 = vpop.f32.mrf.mxu0
          %v3026 = vadd.f32 %v2839, %v3025
          %v3027 = vpop.f32.mrf.mxu0
          %3028 = vmatprep.mubr.f32.mxu0 0.0
          %3029 = vmatmul.mubr.f32.gmra.mxu0 %v2887
          %v3030 = vpop.f32.mrf.mxu0
          %v3031 = vadd.f32 %v2839, %v3030
          %v3032 = vpop.f32.mrf.mxu0
          %3033 = vdwg.mxu0
          %v3034 = vmax.f32 %v2956, 0.0
          %v3035 = vmax.f32 %v2961, 0.0
          %v3036 = vmax.f32 %v2966, 0.0
          %v3037 = vmax.f32 %v2971, 0.0
          %v3038 = vmax.f32 %v2976, 0.0
          %v3039 = vmax.f32 %v2981, 0.0
          %v3040 = vmax.f32 %v2986, 0.0
          %v3041 = vmax.f32 %v2991, 0.0
          %v3042 = vmax.f32 %v2996, 0.0
          %v3043 = vmax.f32 %v3001, 0.0
          %v3044 = vmax.f32 %v3006, 0.0
          %v3045 = vmax.f32 %v3011, 0.0
          %v3046 = vmax.f32 %v3016, 0.0
          %v3047 = vmax.f32 %v3021, 0.0
          %v3048 = vmax.f32 %v3026, 0.0
          %v3049 = vmax.f32 %v3031, 0.0
          %v3050 = vld [vmem:[%s15] sm:$0xff]
          %v3051 = vld [vmem:[%s15 + $0x8] sm:$0xff]
          %v3052 = vld [vmem:[%s15 + $0x10] sm:$0xff]
          %v3053 = vld [vmem:[%s15 + $0x18] sm:$0xff]
          %v3054 = vld [vmem:[%s15 + $0x20] sm:$0xff]
          %v3055 = vld [vmem:[%s15 + $0x28] sm:$0xff]
          %v3056 = vld [vmem:[%s15 + $0x30] sm:$0xff]
          %v3057 = vld [vmem:[%s15 + $0x38] sm:$0xff]
          %v3058 = vld [vmem:[%s16] sm:$0x1]
          %v3060 = vlaneseq
          %v3061 = vshrl.u32 %v3060, 7
          %v3062 = vsub.s32 0, %v3061
          %v3063 = vrot.slane %v3058, %v3062
          %v3066 = vsel %vm2609, %v3034, 0
          %v3069 = vsel %vm2609, %v3035, 0
          %v3072 = vsel %vm2609, %v3036, 0
          %v3075 = vsel %vm2609, %v3037, 0
          %v3078 = vsel %vm2609, %v3038, 0
          %v3081 = vsel %vm2609, %v3039, 0
          %v3084 = vsel %vm2609, %v3040, 0
          %v3087 = vsel %vm2609, %v3041, 0
          %v3090 = vsel %vm2609, %v3042, 0
          %v3093 = vsel %vm2609, %v3043, 0
          %v3096 = vsel %vm2609, %v3044, 0
          %v3099 = vsel %vm2609, %v3045, 0
          %v3102 = vsel %vm2609, %v3046, 0
          %v3105 = vsel %vm2609, %v3047, 0
          %v3108 = vsel %vm2609, %v3048, 0
          %v3111 = vsel %vm2609, %v3049, 0
          %3113 = vmatprep.subr.mxu0 0.0
          %3114 = vmatpush1.msra.mxu0 0.0
          %3115 = vmatprep.subr.mxu0 0.0
          %3116 = vmatpush1.msra.mxu0 0.0
          %3117 = vmatprep.subr.mxu0 0.0
          %3118 = vmatpush1.msra.mxu0 0.0
          %3119 = vmatprep.subr.mxu0 0.0
          %3120 = vmatpush1.msra.mxu0 0.0
          %3121 = vmatprep.subr.mxu0 0.0
          %3122 = vmatpush1.msra.mxu0 0.0
          %3123 = vmatprep.subr.mxu0 0.0
          %3124 = vmatpush1.msra.mxu0 0.0
          %3125 = vmatprep.subr.mxu0 0.0
          %3126 = vmatpush1.msra.mxu0 0.0
          %3127 = vmatprep.subr.mxu0 0.0
          %3128 = vmatpush1.msra.mxu0 0.0
          %3129 = vmatprep.subr.mxu0 0.0
          %3130 = vmatpush1.msra.mxu0 %v3057
          %3131 = vmatprep.subr.mxu0 0.0
          %3132 = vmatpush1.msra.mxu0 %v3056
          %3133 = vmatprep.subr.mxu0 0.0
          %3134 = vmatpush1.msra.mxu0 %v3055
          %3135 = vmatprep.subr.mxu0 0.0
          %3136 = vmatpush1.msra.mxu0 %v3054
          %3137 = vmatprep.subr.mxu0 0.0
          %3138 = vmatpush1.msra.mxu0 %v3053
          %3139 = vmatprep.subr.mxu0 0.0
          %3140 = vmatpush1.msra.mxu0 %v3052
          %3141 = vmatprep.subr.mxu0 0.0
          %3142 = vmatpush1.msra.mxu0 %v3051
          %3143 = vmatprep.subr.mxu0 0.0
          %3144 = vmatpush1.msra.mxu0 %v3050
          %3145 = vmatprep.subr.mxu0 0.0
          %3146 = vmatpush2.msra.mxu0 0.0
          %3147 = vmatprep.subr.mxu0 0.0
          %3148 = vmatpush2.msra.mxu0 0.0
          %3149 = vmatprep.subr.mxu0 0.0
          %3150 = vmatpush2.msra.mxu0 0.0
          %3151 = vmatprep.subr.mxu0 0.0
          %3152 = vmatpush2.msra.mxu0 0.0
          %3153 = vmatprep.subr.mxu0 0.0
          %3154 = vmatpush2.msra.mxu0 0.0
          %3155 = vmatprep.subr.mxu0 0.0
          %3156 = vmatpush2.msra.mxu0 0.0
          %3157 = vmatprep.subr.mxu0 0.0
          %3158 = vmatpush2.msra.mxu0 0.0
          %3159 = vmatprep.subr.mxu0 0.0
          %3160 = vmatpush2.msra.mxu0 0.0
          %3161 = vmatprep.subr.mxu0 0.0
          %3162 = vmatpush2.msra.mxu0 0.0
          %3163 = vmatprep.subr.mxu0 0.0
          %3164 = vmatpush2.msra.mxu0 0.0
          %3165 = vmatprep.subr.mxu0 0.0
          %3166 = vmatpush2.msra.mxu0 0.0
          %3167 = vmatprep.subr.mxu0 0.0
          %3168 = vmatpush2.msra.mxu0 0.0
          %3169 = vmatprep.subr.mxu0 0.0
          %3170 = vmatpush2.msra.mxu0 0.0
          %3171 = vmatprep.subr.mxu0 0.0
          %3172 = vmatpush2.msra.mxu0 0.0
          %3173 = vmatprep.subr.mxu0 0.0
          %3174 = vmatpush2.msra.mxu0 0.0
          %3175 = vmatprep.subr.mxu0 0.0
          %3176 = vmatpush2.msra.mxu0 0.0
          %3177 = vmatprep.mubr.f32.mxu0 0.0
          %3178 = vmatmul.mubr.f32.gmra.mxu0 %v3066
          %v3179 = vpop.f32.mrf.mxu0
          %v3180 = vadd.f32 %v3063, %v3179
          %v3181 = vpop.f32.mrf.mxu0
          %3182 = vmatprep.mubr.f32.mxu0 0.0
          %3183 = vmatmul.mubr.f32.gmra.mxu0 %v3069
          %v3184 = vpop.f32.mrf.mxu0
          %v3185 = vadd.f32 %v3063, %v3184
          %v3186 = vpop.f32.mrf.mxu0
          %3187 = vmatprep.mubr.f32.mxu0 0.0
          %3188 = vmatmul.mubr.f32.gmra.mxu0 %v3072
          %v3189 = vpop.f32.mrf.mxu0
          %v3190 = vadd.f32 %v3063, %v3189
          %v3191 = vpop.f32.mrf.mxu0
          %3192 = vmatprep.mubr.f32.mxu0 0.0
          %3193 = vmatmul.mubr.f32.gmra.mxu0 %v3075
          %v3194 = vpop.f32.mrf.mxu0
          %v3195 = vadd.f32 %v3063, %v3194
          %v3196 = vpop.f32.mrf.mxu0
          %3197 = vmatprep.mubr.f32.mxu0 0.0
          %3198 = vmatmul.mubr.f32.gmra.mxu0 %v3078
          %v3199 = vpop.f32.mrf.mxu0
          %v3200 = vadd.f32 %v3063, %v3199
          %v3201 = vpop.f32.mrf.mxu0
          %3202 = vmatprep.mubr.f32.mxu0 0.0
          %3203 = vmatmul.mubr.f32.gmra.mxu0 %v3081
          %v3204 = vpop.f32.mrf.mxu0
          %v3205 = vadd.f32 %v3063, %v3204
          %v3206 = vpop.f32.mrf.mxu0
          %3207 = vmatprep.mubr.f32.mxu0 0.0
          %3208 = vmatmul.mubr.f32.gmra.mxu0 %v3084
          %v3209 = vpop.f32.mrf.mxu0
          %v3210 = vadd.f32 %v3063, %v3209
          %v3211 = vpop.f32.mrf.mxu0
          %3212 = vmatprep.mubr.f32.mxu0 0.0
          %3213 = vmatmul.mubr.f32.gmra.mxu0 %v3087
          %v3214 = vpop.f32.mrf.mxu0
          %v3215 = vadd.f32 %v3063, %v3214
          %v3216 = vpop.f32.mrf.mxu0
          %3217 = vmatprep.mubr.f32.mxu0 0.0
          %3218 = vmatmul.mubr.f32.gmra.mxu0 %v3090
          %v3219 = vpop.f32.mrf.mxu0
          %v3220 = vadd.f32 %v3063, %v3219
          %v3221 = vpop.f32.mrf.mxu0
          %3222 = vmatprep.mubr.f32.mxu0 0.0
          %3223 = vmatmul.mubr.f32.gmra.mxu0 %v3093
          %v3224 = vpop.f32.mrf.mxu0
          %v3225 = vadd.f32 %v3063, %v3224
          %v3226 = vpop.f32.mrf.mxu0
          %3227 = vmatprep.mubr.f32.mxu0 0.0
          %3228 = vmatmul.mubr.f32.gmra.mxu0 %v3096
          %v3229 = vpop.f32.mrf.mxu0
          %v3230 = vadd.f32 %v3063, %v3229
          %v3231 = vpop.f32.mrf.mxu0
          %3232 = vmatprep.mubr.f32.mxu0 0.0
          %3233 = vmatmul.mubr.f32.gmra.mxu0 %v3099
          %v3234 = vpop.f32.mrf.mxu0
          %v3235 = vadd.f32 %v3063, %v3234
          %v3236 = vpop.f32.mrf.mxu0
          %3237 = vmatprep.mubr.f32.mxu0 0.0
          %3238 = vmatmul.mubr.f32.gmra.mxu0 %v3102
          %v3239 = vpop.f32.mrf.mxu0
          %v3240 = vadd.f32 %v3063, %v3239
          %v3241 = vpop.f32.mrf.mxu0
          %3242 = vmatprep.mubr.f32.mxu0 0.0
          %3243 = vmatmul.mubr.f32.gmra.mxu0 %v3105
          %v3244 = vpop.f32.mrf.mxu0
          %v3245 = vadd.f32 %v3063, %v3244
          %v3246 = vpop.f32.mrf.mxu0
          %3247 = vmatprep.mubr.f32.mxu0 0.0
          %3248 = vmatmul.mubr.f32.gmra.mxu0 %v3108
          %v3249 = vpop.f32.mrf.mxu0
          %v3250 = vadd.f32 %v3063, %v3249
          %v3251 = vpop.f32.mrf.mxu0
          %3252 = vmatprep.mubr.f32.mxu0 0.0
          %3253 = vmatmul.mubr.f32.gmra.mxu0 %v3111
          %v3254 = vpop.f32.mrf.mxu0
          %v3255 = vadd.f32 %v3063, %v3254
          %v3256 = vpop.f32.mrf.mxu0
          %3257 = vdwg.mxu0
          %v3258 = vmax.f32 %v3180, 0.0
          %v3259 = vmax.f32 %v3185, 0.0
          %v3260 = vmax.f32 %v3190, 0.0
          %v3261 = vmax.f32 %v3195, 0.0
          %v3262 = vmax.f32 %v3200, 0.0
          %v3263 = vmax.f32 %v3205, 0.0
          %v3264 = vmax.f32 %v3210, 0.0
          %v3265 = vmax.f32 %v3215, 0.0
          %v3266 = vmax.f32 %v3220, 0.0
          %v3267 = vmax.f32 %v3225, 0.0
          %v3268 = vmax.f32 %v3230, 0.0
          %v3269 = vmax.f32 %v3235, 0.0
          %v3270 = vmax.f32 %v3240, 0.0
          %v3271 = vmax.f32 %v3245, 0.0
          %v3272 = vmax.f32 %v3250, 0.0
          %v3273 = vmax.f32 %v3255, 0.0
          %v3274 = vld [vmem:[#allocation17] sm:$0xff]
          %v3275 = vld [vmem:[#allocation17 + $0x8] sm:$0xff]
          %v3276 = vld [vmem:[#allocation17 + $0x10] sm:$0xff]
          %v3277 = vld [vmem:[#allocation17 + $0x18] sm:$0xff]
          %v3278 = vld [vmem:[%s18] sm:$0x1]
          %v3280 = vlaneseq
          %v3281 = vshrl.u32 %v3280, 7
          %v3282 = vsub.s32 0, %v3281
          %v3283 = vrot.slane %v3278, %v3282
          %vm3285 = vcmask 261120
          %v3287 = vsel %vm3285, %v3258, 0
          %v3290 = vsel %vm3285, %v3259, 0
          %v3293 = vsel %vm3285, %v3260, 0
          %v3296 = vsel %vm3285, %v3261, 0
          %v3299 = vsel %vm3285, %v3262, 0
          %v3302 = vsel %vm3285, %v3263, 0
          %v3305 = vsel %vm3285, %v3264, 0
          %v3308 = vsel %vm3285, %v3265, 0
          %v3311 = vsel %vm3285, %v3266, 0
          %v3314 = vsel %vm3285, %v3267, 0
          %v3317 = vsel %vm3285, %v3268, 0
          %v3320 = vsel %vm3285, %v3269, 0
          %v3323 = vsel %vm3285, %v3270, 0
          %v3326 = vsel %vm3285, %v3271, 0
          %v3329 = vsel %vm3285, %v3272, 0
          %v3332 = vsel %vm3285, %v3273, 0
          %3334 = vmatprep.subr.mxu0 0.0
          %3335 = vmatpush1.msra.mxu0 0.0
          %3336 = vmatprep.subr.mxu0 0.0
          %3337 = vmatpush1.msra.mxu0 0.0
          %3338 = vmatprep.subr.mxu0 0.0
          %3339 = vmatpush1.msra.mxu0 0.0
          %3340 = vmatprep.subr.mxu0 0.0
          %3341 = vmatpush1.msra.mxu0 0.0
          %3342 = vmatprep.subr.mxu0 0.0
          %3343 = vmatpush1.msra.mxu0 0.0
          %3344 = vmatprep.subr.mxu0 0.0
          %3345 = vmatpush1.msra.mxu0 0.0
          %3346 = vmatprep.subr.mxu0 0.0
          %3347 = vmatpush1.msra.mxu0 0.0
          %3348 = vmatprep.subr.mxu0 0.0
          %3349 = vmatpush1.msra.mxu0 0.0
          %3350 = vmatprep.subr.mxu0 0.0
          %3351 = vmatpush1.msra.mxu0 0.0
          %3352 = vmatprep.subr.mxu0 0.0
          %3353 = vmatpush1.msra.mxu0 0.0
          %3354 = vmatprep.subr.mxu0 0.0
          %3355 = vmatpush1.msra.mxu0 0.0
          %3356 = vmatprep.subr.mxu0 0.0
          %3357 = vmatpush1.msra.mxu0 0.0
          %3358 = vmatprep.subr.mxu0 0.0
          %3359 = vmatpush1.msra.mxu0 %v3277
          %3360 = vmatprep.subr.mxu0 0.0
          %3361 = vmatpush1.msra.mxu0 %v3276
          %3362 = vmatprep.subr.mxu0 0.0
          %3363 = vmatpush1.msra.mxu0 %v3275
          %3364 = vmatprep.subr.mxu0 0.0
          %3365 = vmatpush1.msra.mxu0 %v3274
          %3366 = vmatprep.subr.mxu0 0.0
          %3367 = vmatpush2.msra.mxu0 0.0
          %3368 = vmatprep.subr.mxu0 0.0
          %3369 = vmatpush2.msra.mxu0 0.0
          %3370 = vmatprep.subr.mxu0 0.0
          %3371 = vmatpush2.msra.mxu0 0.0
          %3372 = vmatprep.subr.mxu0 0.0
          %3373 = vmatpush2.msra.mxu0 0.0
          %3374 = vmatprep.subr.mxu0 0.0
          %3375 = vmatpush2.msra.mxu0 0.0
          %3376 = vmatprep.subr.mxu0 0.0
          %3377 = vmatpush2.msra.mxu0 0.0
          %3378 = vmatprep.subr.mxu0 0.0
          %3379 = vmatpush2.msra.mxu0 0.0
          %3380 = vmatprep.subr.mxu0 0.0
          %3381 = vmatpush2.msra.mxu0 0.0
          %3382 = vmatprep.subr.mxu0 0.0
          %3383 = vmatpush2.msra.mxu0 0.0
          %3384 = vmatprep.subr.mxu0 0.0
          %3385 = vmatpush2.msra.mxu0 0.0
          %3386 = vmatprep.subr.mxu0 0.0
          %3387 = vmatpush2.msra.mxu0 0.0
          %3388 = vmatprep.subr.mxu0 0.0
          %3389 = vmatpush2.msra.mxu0 0.0
          %3390 = vmatprep.subr.mxu0 0.0
          %3391 = vmatpush2.msra.mxu0 0.0
          %3392 = vmatprep.subr.mxu0 0.0
          %3393 = vmatpush2.msra.mxu0 0.0
          %3394 = vmatprep.subr.mxu0 0.0
          %3395 = vmatpush2.msra.mxu0 0.0
          %3396 = vmatprep.subr.mxu0 0.0
          %3397 = vmatpush2.msra.mxu0 0.0
          %3398 = vmatprep.mubr.f32.mxu0 0.0
          %3399 = vmatmul.mubr.f32.gmra.mxu0 %v3287
          %v3400 = vpop.f32.mrf.mxu0
          %v3401 = vadd.f32 %v3283, %v3400
          %v3402 = vpop.f32.mrf.mxu0
          %3403 = vmatprep.mubr.f32.mxu0 0.0
          %3404 = vmatmul.mubr.f32.gmra.mxu0 %v3290
          %v3405 = vpop.f32.mrf.mxu0
          %v3406 = vadd.f32 %v3283, %v3405
          %v3407 = vpop.f32.mrf.mxu0
          %3408 = vmatprep.mubr.f32.mxu0 0.0
          %3409 = vmatmul.mubr.f32.gmra.mxu0 %v3293
          %v3410 = vpop.f32.mrf.mxu0
          %v3411 = vadd.f32 %v3283, %v3410
          %v3412 = vpop.f32.mrf.mxu0
          %3413 = vmatprep.mubr.f32.mxu0 0.0
          %3414 = vmatmul.mubr.f32.gmra.mxu0 %v3296
          %v3415 = vpop.f32.mrf.mxu0
          %v3416 = vadd.f32 %v3283, %v3415
          %v3417 = vpop.f32.mrf.mxu0
          %3418 = vmatprep.mubr.f32.mxu0 0.0
          %3419 = vmatmul.mubr.f32.gmra.mxu0 %v3299
          %v3420 = vpop.f32.mrf.mxu0
          %v3421 = vadd.f32 %v3283, %v3420
          %v3422 = vpop.f32.mrf.mxu0
          %3423 = vmatprep.mubr.f32.mxu0 0.0
          %3424 = vmatmul.mubr.f32.gmra.mxu0 %v3302
          %v3425 = vpop.f32.mrf.mxu0
          %v3426 = vadd.f32 %v3283, %v3425
          %v3427 = vpop.f32.mrf.mxu0
          %3428 = vmatprep.mubr.f32.mxu0 0.0
          %3429 = vmatmul.mubr.f32.gmra.mxu0 %v3305
          %v3430 = vpop.f32.mrf.mxu0
          %v3431 = vadd.f32 %v3283, %v3430
          %v3432 = vpop.f32.mrf.mxu0
          %3433 = vmatprep.mubr.f32.mxu0 0.0
          %3434 = vmatmul.mubr.f32.gmra.mxu0 %v3308
          %v3435 = vpop.f32.mrf.mxu0
          %v3436 = vadd.f32 %v3283, %v3435
          %v3437 = vpop.f32.mrf.mxu0
          %3438 = vmatprep.mubr.f32.mxu0 0.0
          %3439 = vmatmul.mubr.f32.gmra.mxu0 %v3311
          %v3440 = vpop.f32.mrf.mxu0
          %v3441 = vadd.f32 %v3283, %v3440
          %v3442 = vpop.f32.mrf.mxu0
          %3443 = vmatprep.mubr.f32.mxu0 0.0
          %3444 = vmatmul.mubr.f32.gmra.mxu0 %v3314
          %v3445 = vpop.f32.mrf.mxu0
          %v3446 = vadd.f32 %v3283, %v3445
          %v3447 = vpop.f32.mrf.mxu0
          %3448 = vmatprep.mubr.f32.mxu0 0.0
          %3449 = vmatmul.mubr.f32.gmra.mxu0 %v3317
          %v3450 = vpop.f32.mrf.mxu0
          %v3451 = vadd.f32 %v3283, %v3450
          %v3452 = vpop.f32.mrf.mxu0
          %3453 = vmatprep.mubr.f32.mxu0 0.0
          %3454 = vmatmul.mubr.f32.gmra.mxu0 %v3320
          %v3455 = vpop.f32.mrf.mxu0
          %v3456 = vadd.f32 %v3283, %v3455
          %v3457 = vpop.f32.mrf.mxu0
          %3458 = vmatprep.mubr.f32.mxu0 0.0
          %3459 = vmatmul.mubr.f32.gmra.mxu0 %v3323
          %v3460 = vpop.f32.mrf.mxu0
          %v3461 = vadd.f32 %v3283, %v3460
          %v3462 = vpop.f32.mrf.mxu0
          %3463 = vmatprep.mubr.f32.mxu0 0.0
          %3464 = vmatmul.mubr.f32.gmra.mxu0 %v3326
          %v3465 = vpop.f32.mrf.mxu0
          %v3466 = vadd.f32 %v3283, %v3465
          %v3467 = vpop.f32.mrf.mxu0
          %3468 = vmatprep.mubr.f32.mxu0 0.0
          %3469 = vmatmul.mubr.f32.gmra.mxu0 %v3329
          %v3470 = vpop.f32.mrf.mxu0
          %v3471 = vadd.f32 %v3283, %v3470
          %v3472 = vpop.f32.mrf.mxu0
          %3473 = vmatprep.mubr.f32.mxu0 0.0
          %3474 = vmatmul.mubr.f32.gmra.mxu0 %v3332
          %v3475 = vpop.f32.mrf.mxu0
          %v3476 = vadd.f32 %v3283, %v3475
          %v3477 = vpop.f32.mrf.mxu0
          %3478 = vdwg.mxu0
          %3479 = vst [vmem:[#allocation19] sm:$0xff] %v3401
          %3480 = vst [vmem:[#allocation19 + $0x8] sm:$0xff] %v3406
          %3481 = vst [vmem:[#allocation19 + $0x10] sm:$0xff] %v3411
          %3482 = vst [vmem:[#allocation19 + $0x18] sm:$0xff] %v3416
          %3483 = vst [vmem:[#allocation19 + $0x20] sm:$0xff] %v3421
          %3484 = vst [vmem:[#allocation19 + $0x28] sm:$0xff] %v3426
          %3485 = vst [vmem:[#allocation19 + $0x30] sm:$0xff] %v3431
          %3486 = vst [vmem:[#allocation19 + $0x38] sm:$0xff] %v3436
          %3487 = vst [vmem:[#allocation19 + $0x40] sm:$0xff] %v3441
          %3488 = vst [vmem:[#allocation19 + $0x48] sm:$0xff] %v3446
          %3489 = vst [vmem:[#allocation19 + $0x50] sm:$0xff] %v3451
          %3490 = vst [vmem:[#allocation19 + $0x58] sm:$0xff] %v3456
          %3491 = vst [vmem:[#allocation19 + $0x60] sm:$0xff] %v3461
          %3492 = vst [vmem:[#allocation19 + $0x68] sm:$0xff] %v3466
          %3493 = vst [vmem:[#allocation19 + $0x70] sm:$0xff] %v3471
          %3494 = vst [vmem:[#allocation19 + $0x78] sm:$0xff] %v3476
        $region144: #{tpu_custom_call.1} parent=95 // pred_fallthru
          _
        // Predicated region
        $region145: #{tpu_custom_call.1} parent=95 // pred_check
          %p3495 = pneg %p470
        $region146: #{tpu_custom_call.1} parent=95 // pred_check_branch
          %3497 = sbr.rel (%p3495) target = $region148
        $region147: #{tpu_custom_call.1} parent=95 // pred_region
          %s3499 = ssub.s32 2048, 2048
          %3500 = vsyncadd [#allocation7], %s3499
          %s3501 = sshll.u32 [#allocation19], 4
          %s3502 = int_to_ptr.vmem [resolvable:$true] %s3501
          %3507 = dma.vmem_to_hbm [thread:$0]  %s3502, 2048, %s19, [#allocation7], 128, 128, 8
        $region148: #{tpu_custom_call.1} parent=95 // pred_fallthru
          _
        // Predicated region
        $region149: #{tpu_custom_call.1} parent=95 // pred_check
          %p3508 = pneg %p470
        $region150: #{tpu_custom_call.1} parent=95 // pred_check_branch
          %3510 = sbr.rel (%p3508) target = $region152
        $region151: #{tpu_custom_call.1} parent=95 // pred_region
          %3511 = dma.done [#allocation7], 2048
        $region152: #{tpu_custom_call.1} parent=95 // pred_fallthru
          _
      $region96: #{tpu_custom_call.1} parent=5 // pred_fallthru
        _
      %p3512 = scmp.le.s32.totalorder 2, %s31
      // Predicated region
      $region153: #{tpu_custom_call.1} parent=5 // pred_check
        %p3513 = pneg %p3512
      $region154: #{tpu_custom_call.1} parent=5 // pred_check_branch
        %3515 = sbr.rel (%p3513) target = $region156
      $region155: #{tpu_custom_call.1} parent=5 // pred_region
        %s3516 = ssub.s32 %s31, 2
      $region156: #{tpu_custom_call.1} parent=5 // pred_fallthru
        _
    $region6: #{tpu_custom_call.1} parent=1 // loop_footer
      %s35 = sadd.s32 1, %s31
    $region7: #{tpu_custom_call.1} parent=1 // loop_footer_branch
      %30 = sbr.rel target = $region3
    $region8: #{tpu_custom_call.1} parent=1 // loop_exit
      _
    %3517 = vsyncpa [#allocation6], 1
    %s3518 = scalar_lea.sflag [#allocation6], 1
    %3519 = vsyncpa %s3518, 1
    %3520 = vsyncpa [#allocation9], 1
    %3521 = vsyncpa [#allocation12], 1
    %3522 = vsyncpa [#allocation15], 1
    %3523 = vsyncpa [#allocation18], 1
    %3524 = vsyncpa [#allocation7], 1
    %s3525 = scalar_lea.sflag [#allocation7], 1
    %3526 = vsyncpa %s3525, 1

</llo_original>
